<compile_context>
chip_gen: v7x
topology: tpu7x:2x2x1
jax: 0.10.0
libtpu: 0.0.40
codegen_flags: <defaults>
</compile_context>

<pallas_src>
import functools

import jax
import jax.numpy as jnp
from jax.experimental import pallas as pl
from jax.experimental.pallas import tpu as pltpu

_VMEM_LIMIT_BYTES = 48 * 1024 * 1024  # fits v7x's 64 MiB/TC with headroom; fine on v5e/v6e


# ------------------------- tiling helpers -------------------------

def _round_up(x, m):
    return (x + m - 1) // m * m


def _pick_row_tile(m, mult=16, cap=512):
    """Largest multiple-of-`mult` divisor of m that is <= cap and leaves >= 2 grid steps
    (so both v7x TensorCores get work).  `mult`=16 keeps bf16 sublane tiling clean."""
    if m % mult != 0 or m < 2 * mult:
        return m
    best = m
    upper = min(cap, m // 2)
    t = mult
    while t <= upper:
        if m % t == 0:
            best = t
        t += mult
    return best


def _cparams(*semantics):
    return pltpu.CompilerParams(dimension_semantics=semantics,
                                vmem_limit_bytes=_VMEM_LIMIT_BYTES)


def _layernorm(z, gamma, beta, eps):
    mean = jnp.mean(z, axis=-1, keepdims=True)
    zc = z - mean
    var = jnp.mean(zc * zc, axis=-1, keepdims=True)
    return zc * jax.lax.rsqrt(var + eps) * gamma + beta


# ------------------------- simple linear kernel (patch embedding) -------------------------

def _linear_kernel(x_ref, w_ref, b_ref, o_ref):
    acc = jnp.dot(x_ref[...].astype(jnp.bfloat16), w_ref[...].astype(jnp.bfloat16),
                  preferred_element_type=jnp.float32)
    o_ref[...] = (acc + b_ref[...].astype(jnp.float32)).astype(o_ref.dtype)


def linear(x, w, b, out_dtype=None):
    """out = x @ w + b, tiled over rows.  K and N are small here; no K/N tiling needed."""
    M, K = x.shape
    K2, N = w.shape
    assert K == K2
    out_dtype = out_dtype or x.dtype
    tm = _pick_row_tile(M)
    grid = (M // tm,)
    return pl.pallas_call(
        _linear_kernel,
        out_shape=jax.ShapeDtypeStruct((M, N), out_dtype),
        grid=grid,
        in_specs=[
            pl.BlockSpec((tm, K), lambda i: (i, 0)),
            pl.BlockSpec((K, N), lambda i: (0, 0)),
            pl.BlockSpec((1, N), lambda i: (0, 0)),
        ],
        out_specs=pl.BlockSpec((tm, N), lambda i: (i, 0)),
        compiler_params=_cparams("parallel"),
    )(x, w, b.reshape(1, N))


# ------------------------- fused transformer-encoder layer -------------------------

def _layer_kernel(h_ref, wq_ref, wk_ref, wv_ref, bq_ref, bk_ref, bv_ref,
                  wo_ref, bo_ref, g1_ref, beta1_ref,
                  w1_ref, b1_ref, w2_ref, b2_ref, g2_ref, beta2_ref,
                  seg_ref, segt_ref, o_ref, *, scale, eps):
    nb, ts, emb = h_ref.shape          # (image batch, token tile, embed dim)
    rows = nb * ts

    x = h_ref[...]                      # (nb, ts, E) bf16
    xb = x.reshape(rows, emb)           # bf16, MXU-ready

    def mm(a_bf16, w_ref_, b_ref_):
        return (jnp.dot(a_bf16, w_ref_[...], preferred_element_type=jnp.float32)
                + b_ref_[...].astype(jnp.float32))

    # ---- fused qkv projection (stays in VMEM) ----
    q = (mm(xb, wq_ref, bq_ref) * scale).reshape(nb, ts, emb)   # f32
    k = mm(xb, wk_ref, bk_ref).reshape(nb, ts, emb)
    v = mm(xb, wv_ref, bv_ref).reshape(nb, ts, emb)

    # ---- literal batch_first=False self-attention: sequence axis == image batch nb,
    #      attention batch == tokens x heads.  All (b1,b2) score matmuls batched into
    #      one segment-sum dot (bf16 MXU operands, f32 accumulation). ----
    qk = jnp.concatenate([q[b1] * k[b2] for b1 in range(nb) for b2 in range(nb)], axis=0)
    scores = jnp.dot(qk.astype(jnp.bfloat16), seg_ref[...],
                     preferred_element_type=jnp.float32)          # (nb*nb*ts, nheads)

    probs = []
    for b1 in range(nb):
        s_b = [scores[(b1 * nb + b2) * ts:(b1 * nb + b2 + 1) * ts, :] for b2 in range(nb)]
        m = s_b[0]
        for b2 in range(1, nb):
            m = jnp.maximum(m, s_b[b2])
        e_b = [jnp.exp(s - m) for s in s_b]
        denom = e_b[0]
        for b2 in range(1, nb):
            denom = denom + e_b[b2]
        inv = pl.reciprocal(denom, approx=True)                   # EUP slot
        probs.extend([e * inv for e in e_b])

    # broadcast per-head probabilities across their head_dim lanes with one dot
    p_all = jnp.concatenate(probs, axis=0)                        # (nb*nb*ts, nheads)
    p_full = jnp.dot(p_all.astype(jnp.bfloat16), segt_ref[...],
                     preferred_element_type=jnp.float32)          # (nb*nb*ts, E)

    attn_rows = []
    for b1 in range(nb):
        acc = None
        for b2 in range(nb):
            w_blk = p_full[(b1 * nb + b2) * ts:(b1 * nb + b2 + 1) * ts, :]
            contrib = w_blk * v[b2]
            acc = contrib if acc is None else acc + contrib
        attn_rows.append(acc)
    attn = jnp.concatenate(attn_rows, axis=0)                     # (rows, E) f32

    # ---- out-proj + residual + LayerNorm1 (PyTorch post-norm) ----
    y = mm(attn.astype(jnp.bfloat16), wo_ref, bo_ref) + xb.astype(jnp.float32)
    z = _layernorm(y, g1_ref[...], beta1_ref[...], eps)           # (rows, E) f32

    # ---- FFN (linear1 + ReLU + linear2) + residual + LayerNorm2, all in VMEM ----
    f1 = jnp.maximum(mm(z.astype(jnp.bfloat16), w1_ref, b1_ref), 0.0)
    y2 = mm(f1.astype(jnp.bfloat16), w2_ref, b2_ref) + z
    out = _layernorm(y2, g2_ref[...], beta2_ref[...], eps)

    o_ref[...] = out.reshape(nb, ts, emb).astype(o_ref.dtype)


def transformer_layer(h, lp, seg, segt, *, scale, eps=1e-5):
    """One fused TransformerEncoderLayer forward.  h: (B, S1p, E) bf16 -> (B, S1p, E) bf16."""
    B, S1p, E = h.shape
    (wq, wk, wv, bq, bk, bv, wo, bo, g1, be1, w1, b1, w2, b2, g2, be2) = lp
    ts = _pick_row_tile(S1p, cap=128)
    grid = (S1p // ts,)

    def _rep2(arr):
        return pl.BlockSpec(arr.shape, lambda t: (0, 0))

    return pl.pallas_call(
        functools.partial(_layer_kernel, scale=scale, eps=eps),
        out_shape=jax.ShapeDtypeStruct((B, S1p, E), h.dtype),
        grid=grid,
        in_specs=[
            pl.BlockSpec((B, ts, E), lambda t: (0, t, 0)),
            _rep2(wq), _rep2(wk), _rep2(wv),
            _rep2(bq), _rep2(bk), _rep2(bv),
            _rep2(wo), _rep2(bo), _rep2(g1), _rep2(be1),
            _rep2(w1), _rep2(b1), _rep2(w2), _rep2(b2),
            _rep2(g2), _rep2(be2),
            _rep2(seg), _rep2(segt),
        ],
        out_specs=pl.BlockSpec((B, ts, E), lambda t: (0, t, 0)),
        compiler_params=_cparams("parallel"),
    )(h, wq, wk, wv, bq, bk, bv, wo, bo, g1, be1, w1, b1, w2, b2, g2, be2, seg, segt)


# ------------------------- classification head (LayerNorm + Linear fused) -------------------------

def _ln_linear_kernel(x_ref, g_ref, beta_ref, w_ref, b_ref, o_ref, *, eps):
    x = x_ref[...].astype(jnp.float32)
    xn = _layernorm(x, g_ref[...], beta_ref[...], eps)
    acc = jnp.dot(xn.astype(jnp.bfloat16), w_ref[...].astype(jnp.bfloat16),
                  preferred_element_type=jnp.float32)
    o_ref[...] = (acc + b_ref[...].astype(jnp.float32)).astype(o_ref.dtype)


def layernorm_linear(x, gamma, beta, w, b, eps=1e-5):
    M, E = x.shape
    _, N = w.shape
    tm = _pick_row_tile(M)
    grid = (M // tm,)
    return pl.pallas_call(
        functools.partial(_ln_linear_kernel, eps=eps),
        out_shape=jax.ShapeDtypeStruct((M, N), jnp.float32),
        grid=grid,
        in_specs=[
            pl.BlockSpec((tm, E), lambda i: (i, 0)),
            pl.BlockSpec((1, E), lambda i: (0, 0)),
            pl.BlockSpec((1, E), lambda i: (0, 0)),
            pl.BlockSpec((E, N), lambda i: (0, 0)),
            pl.BlockSpec((1, N), lambda i: (0, 0)),
        ],
        out_specs=pl.BlockSpec((tm, N), lambda i: (i, 0)),
        compiler_params=_cparams("parallel"),
    )(x, gamma.reshape(1, E), beta.reshape(1, E), w, b.reshape(1, N))


# ------------------------- Parameters -------------------------

def init_params(key, in_channels, patch_size, emb_size, nheads, num_layers,
                num_outputs, num_patches, dim_ff):
    E = emb_size
    pdim = in_channels * patch_size * patch_size
    keys = jax.random.split(key, 4 + num_layers)

    def nrm(k, shape, scale=0.02):
        return jax.random.normal(k, shape, jnp.float32) * scale

    params = {
        "patch_w": nrm(keys[0], (pdim, E)),
        "patch_b": jnp.zeros((E,), jnp.float32),
        "cls_token": jax.random.normal(keys[1], (1, 1, E), jnp.float32),
        "pos_emb": jax.random.normal(keys[2], (1, num_patches + 1, E), jnp.float32),
        "head_ln_g": jnp.ones((E,), jnp.float32),
        "head_ln_b": jnp.zeros((E,), jnp.float32),
        "head_w": nrm(keys[3], (E, num_outputs)),
        "head_b": jnp.zeros((num_outputs,), jnp.float32),
        "layers": [],
    }
    for l in range(num_layers):
        lk = jax.random.split(keys[4 + l], 4)
        params["layers"].append({
            "wqkv": nrm(lk[0], (E, 3 * E)),        # in_proj_weight.T
            "bqkv": jnp.zeros((3 * E,), jnp.float32),
            "wo": nrm(lk[1], (E, E)),              # out_proj.weight.T
            "bo": jnp.zeros((E,), jnp.float32),
            "ln1_g": jnp.ones((E,), jnp.float32),
            "ln1_b": jnp.zeros((E,), jnp.float32),
            "w1": nrm(lk[2], (E, dim_ff)),
            "b1": jnp.zeros((dim_ff,), jnp.float32),
            "w2": nrm(lk[3], (dim_ff, E)),
            "b2": jnp.zeros((E,), jnp.float32),
            "ln2_g": jnp.ones((E,), jnp.float32),
            "ln2_b": jnp.zeros((E,), jnp.float32),
        })
    return params


def _prep_layer(lp, E):
    """Weights pre-cast to bf16 (MXU inputs, halved DMA/VMEM); biases/LN params stay f32."""
    to_b = lambda a: a.astype(jnp.bfloat16)
    row = lambda a: a.reshape(1, -1).astype(jnp.float32)
    wqkv, bqkv = lp["wqkv"], lp["bqkv"]
    return (to_b(wqkv[:, :E]), to_b(wqkv[:, E:2 * E]), to_b(wqkv[:, 2 * E:]),
            row(bqkv[:E]), row(bqkv[E:2 * E]), row(bqkv[2 * E:]),
            to_b(lp["wo"]), row(lp["bo"]), row(lp["ln1_g"]), row(lp["ln1_b"]),
            to_b(lp["w1"]), row(lp["b1"]), to_b(lp["w2"]), row(lp["b2"]),
            row(lp["ln2_g"]), row(lp["ln2_b"]))


# ------------------------- Forward pass -------------------------

def vit_forward(x, params, *, patch_size, emb_size, nheads):
    B, C, Himg, Wimg = x.shape
    P, E = patch_size, emb_size
    Hp, Wp = Himg // P, Wimg // P
    Np = Hp * Wp
    Dh = E // nheads
    S1 = Np + 1
    S1p = _round_up(S1, 16)      # pad token axis (padded tokens never mix into real ones)

    # Patch embedding == Conv2d(kernel=P, stride=P): patches flattened over (c, i, j).
    patches = (x.reshape(B, C, Hp, P, Wp, P)
                 .transpose(0, 2, 4, 1, 3, 5)
                 .reshape(B * Np, C * P * P)).astype(jnp.bfloat16)
    emb = linear(patches, params["patch_w"].astype(jnp.bfloat16), params["patch_b"],
                 out_dtype=jnp.bfloat16)
    emb = emb.reshape(B, Np, E).astype(jnp.float32)

    cls = jnp.broadcast_to(params["cls_token"], (B, 1, E))
    h = jnp.concatenate([cls, emb], axis=1) + params["pos_emb"]          # (B, S1, E) f32
    h = jnp.pad(h, ((0, 0), (0, S1p - S1), (0, 0))).astype(jnp.bfloat16)  # (B, S1p, E) bf16

    # Head-segment indicator matrices (built once, passed as tiny bf16 constants).
    seg = (jnp.arange(E)[:, None] // Dh == jnp.arange(nheads)[None, :]).astype(jnp.bfloat16)
    segt = jnp.transpose(seg)                                             # (nheads, E)

    scale = 1.0 / float(Dh) ** 0.5
    for lp in params["layers"]:
        h = transformer_layer(h, _prep_layer(lp, E), seg, segt, scale=scale)

    cls_final = h[:, 0, :]                                                # (B, E) bf16

    # Pad rows to a sublane-friendly 16 and the head output to a full 128-lane tile.
    NOUT = params["head_w"].shape[1]
    Bp = _round_up(B, 16)
    Nout_p = _round_up(NOUT, 128)
    cls_p = jnp.pad(cls_final, ((0, Bp - B), (0, 0)))
    w_p = jnp.pad(params["head_w"], ((0, 0), (0, Nout_p - NOUT))).astype(jnp.bfloat16)
    b_p = jnp.pad(params["head_b"], (0, Nout_p - NOUT))
    out = layernorm_linear(cls_p, params["head_ln_g"], params["head_ln_b"], w_p, b_p)
    return out[:B, :NOUT]


# ------------------------- Main -------------------------

if __name__ == "__main__":
    # Small shapes consistent with the module (H = W, divisible by patch_size).
    B, C, Himg, Wimg = 2, 4, 16, 16
    patch_size, emb_size, nheads, num_layers, num_outputs = 4, 32, 4, 2, 8
    dim_ff = 2048  # nn.TransformerEncoderLayer default dim_feedforward
    num_patches = (Himg // patch_size) * (Wimg // patch_size)

    key = jax.random.PRNGKey(0)
    kx, kp = jax.random.split(key)
    x = jax.random.normal(kx, (B, C, Himg, Wimg), jnp.float32)
    params = init_params(kp, C, patch_size, emb_size, nheads, num_layers,
                         num_outputs, num_patches, dim_ff)

    fwd = jax.jit(functools.partial(vit_forward, patch_size=patch_size,
                                    emb_size=emb_size, nheads=nheads))
    out = fwd(x, params)
    jax.block_until_ready(out)
    assert out.shape == (B, num_outputs)
    assert out.dtype == jnp.float32
    print("KERNEL_OK")
</pallas_src>

<mosaic_0001>
module attributes {stable_mosaic.version = 11 : i64} {
  func.func @_linear_kernel(%arg0: i32, %arg1: memref<16x64xbf16, #tpu.memory_space<vmem>>, %arg2: memref<64x32xbf16, #tpu.memory_space<vmem>>, %arg3: memref<1x32xf32, #tpu.memory_space<vmem>>, %arg4: memref<16x32xbf16, #tpu.memory_space<vmem>>) attributes {dimension_semantics = [#tpu.dimension_semantics<parallel>], iteration_bounds = array<i64: 2>, scalar_prefetch = 0 : i64, scratch_operands = 0 : i64, tpu.core_type = #tpu.core_type<tc>, window_params = [{transform_indices = @transform_0, window_bounds = array<i64: 16, 64>}, {pipeline_mode = #tpu.pipeline_mode<synchronous>, transform_indices = @transform_1, window_bounds = array<i64: 64, 32>}, {pipeline_mode = #tpu.pipeline_mode<synchronous>, transform_indices = @transform_2, window_bounds = array<i64: 1, 32>}, {transform_indices = @transform_3, window_bounds = array<i64: 16, 32>}]} {
    %c0 = arith.constant 0 : index
    %c0_0 = arith.constant 0 : index
    %0 = vector.load %arg1[%c0, %c0_0] : memref<16x64xbf16, #tpu.memory_space<vmem>>, vector<16x64xbf16>
    %c0_1 = arith.constant 0 : index
    %c0_2 = arith.constant 0 : index
    %1 = vector.load %arg2[%c0_1, %c0_2] : memref<64x32xbf16, #tpu.memory_space<vmem>>, vector<64x32xbf16>
    %cst = arith.constant dense<0.000000e+00> : vector<16x32xf32>
    %2 = tpu.matmul %0, %1, %cst {dimension_numbers = #tpu.dot_dimension_numbers<[1], [0], [0], [1], [0, 0, 1, 1], [], []>} : vector<16x64xbf16>, vector<64x32xbf16>, vector<16x32xf32> -> vector<16x32xf32>
    %c0_3 = arith.constant 0 : index
    %c0_4 = arith.constant 0 : index
    %3 = vector.load %arg3[%c0_3, %c0_4] : memref<1x32xf32, #tpu.memory_space<vmem>>, vector<1x32xf32>
    %4 = vector.broadcast %3 : vector<1x32xf32> to vector<16x32xf32>
    %5 = arith.addf %2, %4 : vector<16x32xf32>
    %6 = arith.truncf %5 : vector<16x32xf32> to vector<16x32xbf16>
    %c0_5 = arith.constant 0 : index
    %c0_6 = arith.constant 0 : index
    %7 = vector.load %arg4[%c0_5, %c0_6] : memref<16x32xbf16, #tpu.memory_space<vmem>>, vector<16x32xbf16>
    tpu.vector_store %arg4[%c0_5, %c0_6], %6 {strides = array<i32>} : memref<16x32xbf16, #tpu.memory_space<vmem>>, vector<16x32xbf16>,
    return
  }
  func.func @transform_0(%arg0: i32) -> (i32, i32) {
    %c0_i32 = arith.constant 0 : i32
    %c0_i32_0 = arith.constant 0 : i32
    return %arg0, %c0_i32 : i32, i32
  }
  func.func @transform_1(%arg0: i32) -> (i32, i32) {
    %c0_i32 = arith.constant 0 : i32
    %c0_i32_0 = arith.constant 0 : i32
    %c0_i32_1 = arith.constant 0 : i32
    return %c0_i32, %c0_i32_0 : i32, i32
  }
  func.func @transform_2(%arg0: i32) -> (i32, i32) {
    %c0_i32 = arith.constant 0 : i32
    %c0_i32_0 = arith.constant 0 : i32
    %c0_i32_1 = arith.constant 0 : i32
    return %c0_i32, %c0_i32_0 : i32, i32
  }
  func.func @transform_3(%arg0: i32) -> (i32, i32) {
    %c0_i32 = arith.constant 0 : i32
    %c0_i32_0 = arith.constant 0 : i32
    return %arg0, %c0_i32 : i32, i32
  }
}

module attributes {stable_mosaic.version = 11 : i64} {
  func.func @_layer_kernel(%arg0: i32, %arg1: memref<2x16x32xbf16, #tpu.memory_space<vmem>>, %arg2: memref<32x32xbf16, #tpu.memory_space<vmem>>, %arg3: memref<32x32xbf16, #tpu.memory_space<vmem>>, %arg4: memref<32x32xbf16, #tpu.memory_space<vmem>>, %arg5: memref<1x32xf32, #tpu.memory_space<vmem>>, %arg6: memref<1x32xf32, #tpu.memory_space<vmem>>, %arg7: memref<1x32xf32, #tpu.memory_space<vmem>>, %arg8: memref<32x32xbf16, #tpu.memory_space<vmem>>, %arg9: memref<1x32xf32, #tpu.memory_space<vmem>>, %arg10: memref<1x32xf32, #tpu.memory_space<vmem>>, %arg11: memref<1x32xf32, #tpu.memory_space<vmem>>, %arg12: memref<32x2048xbf16, #tpu.memory_space<vmem>>, %arg13: memref<1x2048xf32, #tpu.memory_space<vmem>>, %arg14: memref<2048x32xbf16, #tpu.memory_space<vmem>>, %arg15: memref<1x32xf32, #tpu.memory_space<vmem>>, %arg16: memref<1x32xf32, #tpu.memory_space<vmem>>, %arg17: memref<1x32xf32, #tpu.memory_space<vmem>>, %arg18: memref<32x4xbf16, #tpu.memory_space<vmem>>, %arg19: memref<4x32xbf16, #tpu.memory_space<vmem>>, %arg20: memref<2x16x32xbf16, #tpu.memory_space<vmem>>) attributes {dimension_semantics = [#tpu.dimension_semantics<parallel>], iteration_bounds = array<i64: 2>, scalar_prefetch = 0 : i64, scratch_operands = 0 : i64, tpu.core_type = #tpu.core_type<tc>, window_params = [{transform_indices = @transform_0, window_bounds = array<i64: 2, 16, 32>}, {pipeline_mode = #tpu.pipeline_mode<synchronous>, transform_indices = @transform_1, window_bounds = array<i64: 32, 32>}, {pipeline_mode = #tpu.pipeline_mode<synchronous>, transform_indices = @transform_2, window_bounds = array<i64: 32, 32>}, {pipeline_mode = #tpu.pipeline_mode<synchronous>, transform_indices = @transform_3, window_bounds = array<i64: 32, 32>}, {pipeline_mode = #tpu.pipeline_mode<synchronous>, transform_indices = @transform_4, window_bounds = array<i64: 1, 32>}, {pipeline_mode = #tpu.pipeline_mode<synchronous>, transform_indices = @transform_5, window_bounds = array<i64: 1, 32>}, {pipeline_mode = #tpu.pipeline_mode<synchronous>, transform_indices = @transform_6, window_bounds = array<i64: 1, 32>}, {pipeline_mode = #tpu.pipeline_mode<synchronous>, transform_indices = @transform_7, window_bounds = array<i64: 32, 32>}, {pipeline_mode = #tpu.pipeline_mode<synchronous>, transform_indices = @transform_8, window_bounds = array<i64: 1, 32>}, {pipeline_mode = #tpu.pipeline_mode<synchronous>, transform_indices = @transform_9, window_bounds = array<i64: 1, 32>}, {pipeline_mode = #tpu.pipeline_mode<synchronous>, transform_indices = @transform_10, window_bounds = array<i64: 1, 32>}, {pipeline_mode = #tpu.pipeline_mode<synchronous>, transform_indices = @transform_11, window_bounds = array<i64: 32, 2048>}, {pipeline_mode = #tpu.pipeline_mode<synchronous>, transform_indices = @transform_12, window_bounds = array<i64: 1, 2048>}, {pipeline_mode = #tpu.pipeline_mode<synchronous>, transform_indices = @transform_13, window_bounds = array<i64: 2048, 32>}, {pipeline_mode = #tpu.pipeline_mode<synchronous>, transform_indices = @transform_14, window_bounds = array<i64: 1, 32>}, {pipeline_mode = #tpu.pipeline_mode<synchronous>, transform_indices = @transform_15, window_bounds = array<i64: 1, 32>}, {pipeline_mode = #tpu.pipeline_mode<synchronous>, transform_indices = @transform_16, window_bounds = array<i64: 1, 32>}, {pipeline_mode = #tpu.pipeline_mode<synchronous>, transform_indices = @transform_17, window_bounds = array<i64: 32, 4>}, {pipeline_mode = #tpu.pipeline_mode<synchronous>, transform_indices = @transform_18, window_bounds = array<i64: 4, 32>}, {transform_indices = @transform_19, window_bounds = array<i64: 2, 16, 32>}]} {
    %c0 = arith.constant 0 : index
    %c0_0 = arith.constant 0 : index
    %c0_1 = arith.constant 0 : index
    %0 = vector.load %arg1[%c0, %c0_0, %c0_1] : memref<2x16x32xbf16, #tpu.memory_space<vmem>>, vector<2x16x32xbf16>
    %1 = vector.shape_cast %0 : vector<2x16x32xbf16> to vector<32x32xbf16>
    %c0_2 = arith.constant 0 : index
    %c0_3 = arith.constant 0 : index
    %2 = vector.load %arg2[%c0_2, %c0_3] : memref<32x32xbf16, #tpu.memory_space<vmem>>, vector<32x32xbf16>
    %cst = arith.constant dense<0.000000e+00> : vector<32x32xf32>
    %3 = tpu.matmul %1, %2, %cst {dimension_numbers = #tpu.dot_dimension_numbers<[1], [0], [0], [1], [0, 0, 1, 1], [], []>} : vector<32x32xbf16>, vector<32x32xbf16>, vector<32x32xf32> -> vector<32x32xf32>
    %c0_4 = arith.constant 0 : index
    %c0_5 = arith.constant 0 : index
    %4 = vector.load %arg5[%c0_4, %c0_5] : memref<1x32xf32, #tpu.memory_space<vmem>>, vector<1x32xf32>
    %5 = vector.broadcast %4 : vector<1x32xf32> to vector<32x32xf32>
    %6 = arith.addf %3, %5 : vector<32x32xf32>
    %cst_6 = arith.constant 0.353553385 : f32
    %7 = vector.broadcast %cst_6 : f32 to vector<32x32xf32>
    %8 = arith.mulf %6, %7 : vector<32x32xf32>
    %9 = vector.shape_cast %8 : vector<32x32xf32> to vector<2x16x32xf32>
    %c0_7 = arith.constant 0 : index
    %c0_8 = arith.constant 0 : index
    %10 = vector.load %arg3[%c0_7, %c0_8] : memref<32x32xbf16, #tpu.memory_space<vmem>>, vector<32x32xbf16>
    %cst_9 = arith.constant dense<0.000000e+00> : vector<32x32xf32>
    %11 = tpu.matmul %1, %10, %cst_9 {dimension_numbers = #tpu.dot_dimension_numbers<[1], [0], [0], [1], [0, 0, 1, 1], [], []>} : vector<32x32xbf16>, vector<32x32xbf16>, vector<32x32xf32> -> vector<32x32xf32>
    %c0_10 = arith.constant 0 : index
    %c0_11 = arith.constant 0 : index
    %12 = vector.load %arg6[%c0_10, %c0_11] : memref<1x32xf32, #tpu.memory_space<vmem>>, vector<1x32xf32>
    %13 = vector.broadcast %12 : vector<1x32xf32> to vector<32x32xf32>
    %14 = arith.addf %11, %13 : vector<32x32xf32>
    %15 = vector.shape_cast %14 : vector<32x32xf32> to vector<2x16x32xf32>
    %c0_12 = arith.constant 0 : index
    %c0_13 = arith.constant 0 : index
    %16 = vector.load %arg4[%c0_12, %c0_13] : memref<32x32xbf16, #tpu.memory_space<vmem>>, vector<32x32xbf16>
    %cst_14 = arith.constant dense<0.000000e+00> : vector<32x32xf32>
    %17 = tpu.matmul %1, %16, %cst_14 {dimension_numbers = #tpu.dot_dimension_numbers<[1], [0], [0], [1], [0, 0, 1, 1], [], []>} : vector<32x32xbf16>, vector<32x32xbf16>, vector<32x32xf32> -> vector<32x32xf32>
    %c0_15 = arith.constant 0 : index
    %c0_16 = arith.constant 0 : index
    %18 = vector.load %arg7[%c0_15, %c0_16] : memref<1x32xf32, #tpu.memory_space<vmem>>, vector<1x32xf32>
    %19 = vector.broadcast %18 : vector<1x32xf32> to vector<32x32xf32>
    %20 = arith.addf %17, %19 : vector<32x32xf32>
    %21 = vector.shape_cast %20 : vector<32x32xf32> to vector<2x16x32xf32>
    %22 = vector.extract_strided_slice %9 {offsets = [0, 0, 0], sizes = [1, 16, 32], strides = [1, 1, 1]} : vector<2x16x32xf32> to vector<1x16x32xf32>
    %23 = vector.shape_cast %22 : vector<1x16x32xf32> to vector<16x32xf32>
    %24 = vector.extract_strided_slice %15 {offsets = [0, 0, 0], sizes = [1, 16, 32], strides = [1, 1, 1]} : vector<2x16x32xf32> to vector<1x16x32xf32>
    %25 = vector.shape_cast %24 : vector<1x16x32xf32> to vector<16x32xf32>
    %26 = arith.mulf %23, %25 : vector<16x32xf32>
    %27 = vector.extract_strided_slice %9 {offsets = [0, 0, 0], sizes = [1, 16, 32], strides = [1, 1, 1]} : vector<2x16x32xf32> to vector<1x16x32xf32>
    %28 = vector.shape_cast %27 : vector<1x16x32xf32> to vector<16x32xf32>
    %29 = vector.extract_strided_slice %15 {offsets = [1, 0, 0], sizes = [1, 16, 32], strides = [1, 1, 1]} : vector<2x16x32xf32> to vector<1x16x32xf32>
    %30 = vector.shape_cast %29 : vector<1x16x32xf32> to vector<16x32xf32>
    %31 = arith.mulf %28, %30 : vector<16x32xf32>
    %32 = vector.extract_strided_slice %9 {offsets = [1, 0, 0], sizes = [1, 16, 32], strides = [1, 1, 1]} : vector<2x16x32xf32> to vector<1x16x32xf32>
    %33 = vector.shape_cast %32 : vector<1x16x32xf32> to vector<16x32xf32>
    %34 = vector.extract_strided_slice %15 {offsets = [0, 0, 0], sizes = [1, 16, 32], strides = [1, 1, 1]} : vector<2x16x32xf32> to vector<1x16x32xf32>
    %35 = vector.shape_cast %34 : vector<1x16x32xf32> to vector<16x32xf32>
    %36 = arith.mulf %33, %35 : vector<16x32xf32>
    %37 = vector.extract_strided_slice %9 {offsets = [1, 0, 0], sizes = [1, 16, 32], strides = [1, 1, 1]} : vector<2x16x32xf32> to vector<1x16x32xf32>
    %38 = vector.shape_cast %37 : vector<1x16x32xf32> to vector<16x32xf32>
    %39 = vector.extract_strided_slice %15 {offsets = [1, 0, 0], sizes = [1, 16, 32], strides = [1, 1, 1]} : vector<2x16x32xf32> to vector<1x16x32xf32>
    %40 = vector.shape_cast %39 : vector<1x16x32xf32> to vector<16x32xf32>
    %41 = arith.mulf %38, %40 : vector<16x32xf32>
    %42 = tpu.concatenate %26, %31, %36, %41 in 0 : vector<16x32xf32>, vector<16x32xf32>, vector<16x32xf32>, vector<16x32xf32> -> vector<64x32xf32>
    %43 = arith.truncf %42 : vector<64x32xf32> to vector<64x32xbf16>
    %c0_17 = arith.constant 0 : index
    %c0_18 = arith.constant 0 : index
    %44 = vector.load %arg18[%c0_17, %c0_18] : memref<32x4xbf16, #tpu.memory_space<vmem>>, vector<32x4xbf16>
    %cst_19 = arith.constant dense<0.000000e+00> : vector<64x4xf32>
    %45 = tpu.matmul %43, %44, %cst_19 {dimension_numbers = #tpu.dot_dimension_numbers<[1], [0], [0], [1], [0, 0, 1, 1], [], []>} : vector<64x32xbf16>, vector<32x4xbf16>, vector<64x4xf32> -> vector<64x4xf32>
    %46 = vector.extract_strided_slice %45 {offsets = [0, 0], sizes = [16, 4], strides = [1, 1]} : vector<64x4xf32> to vector<16x4xf32>
    %47 = vector.extract_strided_slice %45 {offsets = [16, 0], sizes = [16, 4], strides = [1, 1]} : vector<64x4xf32> to vector<16x4xf32>
    %48 = arith.maximumf %46, %47 : vector<16x4xf32>
    %49 = arith.subf %46, %48 : vector<16x4xf32>
    %50 = math.exp %49 : vector<16x4xf32>
    %51 = arith.subf %47, %48 : vector<16x4xf32>
    %52 = math.exp %51 : vector<16x4xf32>
    %53 = arith.addf %50, %52 : vector<16x4xf32>
    %54 = tpu.reciprocal %53 {approx = true} : vector<16x4xf32> -> vector<16x4xf32>
    %55 = arith.mulf %50, %54 : vector<16x4xf32>
    %56 = arith.mulf %52, %54 : vector<16x4xf32>
    %57 = vector.extract_strided_slice %45 {offsets = [32, 0], sizes = [16, 4], strides = [1, 1]} : vector<64x4xf32> to vector<16x4xf32>
    %58 = vector.extract_strided_slice %45 {offsets = [48, 0], sizes = [16, 4], strides = [1, 1]} : vector<64x4xf32> to vector<16x4xf32>
    %59 = arith.maximumf %57, %58 : vector<16x4xf32>
    %60 = arith.subf %57, %59 : vector<16x4xf32>
    %61 = math.exp %60 : vector<16x4xf32>
    %62 = arith.subf %58, %59 : vector<16x4xf32>
    %63 = math.exp %62 : vector<16x4xf32>
    %64 = arith.addf %61, %63 : vector<16x4xf32>
    %65 = tpu.reciprocal %64 {approx = true} : vector<16x4xf32> -> vector<16x4xf32>
    %66 = arith.mulf %61, %65 : vector<16x4xf32>
    %67 = arith.mulf %63, %65 : vector<16x4xf32>
    %68 = tpu.concatenate %55, %56, %66, %67 in 0 : vector<16x4xf32>, vector<16x4xf32>, vector<16x4xf32>, vector<16x4xf32> -> vector<64x4xf32>
    %69 = arith.truncf %68 : vector<64x4xf32> to vector<64x4xbf16>
    %c0_20 = arith.constant 0 : index
    %c0_21 = arith.constant 0 : index
    %70 = vector.load %arg19[%c0_20, %c0_21] : memref<4x32xbf16, #tpu.memory_space<vmem>>, vector<4x32xbf16>
    %cst_22 = arith.constant dense<0.000000e+00> : vector<64x32xf32>
    %71 = tpu.matmul %69, %70, %cst_22 {dimension_numbers = #tpu.dot_dimension_numbers<[1], [0], [0], [1], [0, 0, 1, 1], [], []>} : vector<64x4xbf16>, vector<4x32xbf16>, vector<64x32xf32> -> vector<64x32xf32>
    %72 = vector.extract_strided_slice %71 {offsets = [0, 0], sizes = [16, 32], strides = [1, 1]} : vector<64x32xf32> to vector<16x32xf32>
    %73 = vector.extract_strided_slice %21 {offsets = [0, 0, 0], sizes = [1, 16, 32], strides = [1, 1, 1]} : vector<2x16x32xf32> to vector<1x16x32xf32>
    %74 = vector.shape_cast %73 : vector<1x16x32xf32> to vector<16x32xf32>
    %75 = arith.mulf %72, %74 : vector<16x32xf32>
    %76 = vector.extract_strided_slice %71 {offsets = [16, 0], sizes = [16, 32], strides = [1, 1]} : vector<64x32xf32> to vector<16x32xf32>
    %77 = vector.extract_strided_slice %21 {offsets = [1, 0, 0], sizes = [1, 16, 32], strides = [1, 1, 1]} : vector<2x16x32xf32> to vector<1x16x32xf32>
    %78 = vector.shape_cast %77 : vector<1x16x32xf32> to vector<16x32xf32>
    %79 = arith.mulf %76, %78 : vector<16x32xf32>
    %80 = arith.addf %75, %79 : vector<16x32xf32>
    %81 = vector.extract_strided_slice %71 {offsets = [32, 0], sizes = [16, 32], strides = [1, 1]} : vector<64x32xf32> to vector<16x32xf32>
    %82 = vector.extract_strided_slice %21 {offsets = [0, 0, 0], sizes = [1, 16, 32], strides = [1, 1, 1]} : vector<2x16x32xf32> to vector<1x16x32xf32>
    %83 = vector.shape_cast %82 : vector<1x16x32xf32> to vector<16x32xf32>
    %84 = arith.mulf %81, %83 : vector<16x32xf32>
    %85 = vector.extract_strided_slice %71 {offsets = [48, 0], sizes = [16, 32], strides = [1, 1]} : vector<64x32xf32> to vector<16x32xf32>
    %86 = vector.extract_strided_slice %21 {offsets = [1, 0, 0], sizes = [1, 16, 32], strides = [1, 1, 1]} : vector<2x16x32xf32> to vector<1x16x32xf32>
    %87 = vector.shape_cast %86 : vector<1x16x32xf32> to vector<16x32xf32>
    %88 = arith.mulf %85, %87 : vector<16x32xf32>
    %89 = arith.addf %84, %88 : vector<16x32xf32>
    %90 = tpu.concatenate %80, %89 in 0 : vector<16x32xf32>, vector<16x32xf32> -> vector<32x32xf32>
    %91 = arith.truncf %90 : vector<32x32xf32> to vector<32x32xbf16>
    %c0_23 = arith.constant 0 : index
    %c0_24 = arith.constant 0 : index
    %92 = vector.load %arg8[%c0_23, %c0_24] : memref<32x32xbf16, #tpu.memory_space<vmem>>, vector<32x32xbf16>
    %cst_25 = arith.constant dense<0.000000e+00> : vector<32x32xf32>
    %93 = tpu.matmul %91, %92, %cst_25 {dimension_numbers = #tpu.dot_dimension_numbers<[1], [0], [0], [1], [0, 0, 1, 1], [], []>} : vector<32x32xbf16>, vector<32x32xbf16>, vector<32x32xf32> -> vector<32x32xf32>
    %c0_26 = arith.constant 0 : index
    %c0_27 = arith.constant 0 : index
    %94 = vector.load %arg9[%c0_26, %c0_27] : memref<1x32xf32, #tpu.memory_space<vmem>>, vector<1x32xf32>
    %95 = vector.broadcast %94 : vector<1x32xf32> to vector<32x32xf32>
    %96 = arith.addf %93, %95 : vector<32x32xf32>
    %97 = arith.extf %1 : vector<32x32xbf16> to vector<32x32xf32>
    %98 = arith.addf %96, %97 : vector<32x32xf32>
    %c0_28 = arith.constant 0 : index
    %c0_29 = arith.constant 0 : index
    %99 = vector.load %arg10[%c0_28, %c0_29] : memref<1x32xf32, #tpu.memory_space<vmem>>, vector<1x32xf32>
    %c0_30 = arith.constant 0 : index
    %c0_31 = arith.constant 0 : index
    %100 = vector.load %arg11[%c0_30, %c0_31] : memref<1x32xf32, #tpu.memory_space<vmem>>, vector<1x32xf32>
    %cst_32 = arith.constant dense<0.000000e+00> : vector<32xf32>
    %101 = vector.multi_reduction <add>, %98, %cst_32 [1] : vector<32x32xf32> to vector<32xf32>
    %102 = vector.shape_cast %101 : vector<32xf32> to vector<32x1xf32>
    %cst_33 = arith.constant 3.200000e+01 : f32
    %103 = vector.broadcast %cst_33 : f32 to vector<32x1xf32>
    %104 = arith.divf %102, %103 : vector<32x1xf32>
    %105 = vector.broadcast %104 : vector<32x1xf32> to vector<32x32xf32>
    %106 = arith.subf %98, %105 : vector<32x32xf32>
    %107 = arith.mulf %106, %106 : vector<32x32xf32>
    %cst_34 = arith.constant dense<0.000000e+00> : vector<32xf32>
    %108 = vector.multi_reduction <add>, %107, %cst_34 [1] : vector<32x32xf32> to vector<32xf32>
    %109 = vector.shape_cast %108 : vector<32xf32> to vector<32x1xf32>
    %cst_35 = arith.constant 3.200000e+01 : f32
    %110 = vector.broadcast %cst_35 : f32 to vector<32x1xf32>
    %111 = arith.divf %109, %110 : vector<32x1xf32>
    %cst_36 = arith.constant 9.99999974E-6 : f32
    %112 = vector.broadcast %cst_36 : f32 to vector<32x1xf32>
    %113 = arith.addf %111, %112 : vector<32x1xf32>
    %114 = math.rsqrt %113 : vector<32x1xf32>
    %115 = vector.broadcast %114 : vector<32x1xf32> to vector<32x32xf32>
    %116 = arith.mulf %106, %115 : vector<32x32xf32>
    %117 = vector.broadcast %99 : vector<1x32xf32> to vector<32x32xf32>
    %118 = arith.mulf %116, %117 : vector<32x32xf32>
    %119 = vector.broadcast %100 : vector<1x32xf32> to vector<32x32xf32>
    %120 = arith.addf %118, %119 : vector<32x32xf32>
    %121 = arith.truncf %120 : vector<32x32xf32> to vector<32x32xbf16>
    %c0_37 = arith.constant 0 : index
    %c0_38 = arith.constant 0 : index
    %122 = vector.load %arg12[%c0_37, %c0_38] : memref<32x2048xbf16, #tpu.memory_space<vmem>>, vector<32x2048xbf16>
    %cst_39 = arith.constant dense<0.000000e+00> : vector<32x2048xf32>
    %123 = tpu.matmul %121, %122, %cst_39 {dimension_numbers = #tpu.dot_dimension_numbers<[1], [0], [0], [1], [0, 0, 1, 1], [], []>} : vector<32x32xbf16>, vector<32x2048xbf16>, vector<32x2048xf32> -> vector<32x2048xf32>
    %c0_40 = arith.constant 0 : index
    %c0_41 = arith.constant 0 : index
    %124 = vector.load %arg13[%c0_40, %c0_41] : memref<1x2048xf32, #tpu.memory_space<vmem>>, vector<1x2048xf32>
    %125 = vector.broadcast %124 : vector<1x2048xf32> to vector<32x2048xf32>
    %126 = arith.addf %123, %125 : vector<32x2048xf32>
    %cst_42 = arith.constant 0.000000e+00 : f32
    %127 = vector.broadcast %cst_42 : f32 to vector<32x2048xf32>
    %128 = arith.maximumf %126, %127 : vector<32x2048xf32>
    %129 = arith.truncf %128 : vector<32x2048xf32> to vector<32x2048xbf16>
    %c0_43 = arith.constant 0 : index
    %c0_44 = arith.constant 0 : index
    %130 = vector.load %arg14[%c0_43, %c0_44] : memref<2048x32xbf16, #tpu.memory_space<vmem>>, vector<2048x32xbf16>
    %cst_45 = arith.constant dense<0.000000e+00> : vector<32x32xf32>
    %131 = tpu.matmul %129, %130, %cst_45 {dimension_numbers = #tpu.dot_dimension_numbers<[1], [0], [0], [1], [0, 0, 1, 1], [], []>} : vector<32x2048xbf16>, vector<2048x32xbf16>, vector<32x32xf32> -> vector<32x32xf32>
    %c0_46 = arith.constant 0 : index
    %c0_47 = arith.constant 0 : index
    %132 = vector.load %arg15[%c0_46, %c0_47] : memref<1x32xf32, #tpu.memory_space<vmem>>, vector<1x32xf32>
    %133 = vector.broadcast %132 : vector<1x32xf32> to vector<32x32xf32>
    %134 = arith.addf %131, %133 : vector<32x32xf32>
    %135 = arith.addf %134, %120 : vector<32x32xf32>
    %c0_48 = arith.constant 0 : index
    %c0_49 = arith.constant 0 : index
    %136 = vector.load %arg16[%c0_48, %c0_49] : memref<1x32xf32, #tpu.memory_space<vmem>>, vector<1x32xf32>
    %c0_50 = arith.constant 0 : index
    %c0_51 = arith.constant 0 : index
    %137 = vector.load %arg17[%c0_50, %c0_51] : memref<1x32xf32, #tpu.memory_space<vmem>>, vector<1x32xf32>
    %cst_52 = arith.constant dense<0.000000e+00> : vector<32xf32>
    %138 = vector.multi_reduction <add>, %135, %cst_52 [1] : vector<32x32xf32> to vector<32xf32>
    %139 = vector.shape_cast %138 : vector<32xf32> to vector<32x1xf32>
    %cst_53 = arith.constant 3.200000e+01 : f32
    %140 = vector.broadcast %cst_53 : f32 to vector<32x1xf32>
    %141 = arith.divf %139, %140 : vector<32x1xf32>
    %142 = vector.broadcast %141 : vector<32x1xf32> to vector<32x32xf32>
    %143 = arith.subf %135, %142 : vector<32x32xf32>
    %144 = arith.mulf %143, %143 : vector<32x32xf32>
    %cst_54 = arith.constant dense<0.000000e+00> : vector<32xf32>
    %145 = vector.multi_reduction <add>, %144, %cst_54 [1] : vector<32x32xf32> to vector<32xf32>
    %146 = vector.shape_cast %145 : vector<32xf32> to vector<32x1xf32>
    %cst_55 = arith.constant 3.200000e+01 : f32
    %147 = vector.broadcast %cst_55 : f32 to vector<32x1xf32>
    %148 = arith.divf %146, %147 : vector<32x1xf32>
    %cst_56 = arith.constant 9.99999974E-6 : f32
    %149 = vector.broadcast %cst_56 : f32 to vector<32x1xf32>
    %150 = arith.addf %148, %149 : vector<32x1xf32>
    %151 = math.rsqrt %150 : vector<32x1xf32>
    %152 = vector.broadcast %151 : vector<32x1xf32> to vector<32x32xf32>
    %153 = arith.mulf %143, %152 : vector<32x32xf32>
    %154 = vector.broadcast %136 : vector<1x32xf32> to vector<32x32xf32>
    %155 = arith.mulf %153, %154 : vector<32x32xf32>
    %156 = vector.broadcast %137 : vector<1x32xf32> to vector<32x32xf32>
    %157 = arith.addf %155, %156 : vector<32x32xf32>
    %158 = vector.shape_cast %157 : vector<32x32xf32> to vector<2x16x32xf32>
    %159 = arith.truncf %158 : vector<2x16x32xf32> to vector<2x16x32xbf16>
    %c0_57 = arith.constant 0 : index
    %c0_58 = arith.constant 0 : index
    %c0_59 = arith.constant 0 : index
    %160 = vector.load %arg20[%c0_57, %c0_58, %c0_59] : memref<2x16x32xbf16, #tpu.memory_space<vmem>>, vector<2x16x32xbf16>
    tpu.vector_store %arg20[%c0_57, %c0_58, %c0_59], %159 {strides = array<i32>} : memref<2x16x32xbf16, #tpu.memory_space<vmem>>, vector<2x16x32xbf16>,
    return
  }
  func.func @transform_0(%arg0: i32) -> (i32, i32, i32) {
    %c0_i32 = arith.constant 0 : i32
    %c0_i32_0 = arith.constant 0 : i32
    %c0_i32_1 = arith.constant 0 : i32
    return %c0_i32, %arg0, %c0_i32_0 : i32, i32, i32
  }
  func.func @transform_1(%arg0: i32) -> (i32, i32) {
    %c0_i32 = arith.constant 0 : i32
    %c0_i32_0 = arith.constant 0 : i32
    %c0_i32_1 = arith.constant 0 : i32
    return %c0_i32, %c0_i32_0 : i32, i32
  }
  func.func @transform_2(%arg0: i32) -> (i32, i32) {
    %c0_i32 = arith.constant 0 : i32
    %c0_i32_0 = arith.constant 0 : i32
    %c0_i32_1 = arith.constant 0 : i32
    return %c0_i32, %c0_i32_0 : i32, i32
  }
  func.func @transform_3(%arg0: i32) -> (i32, i32) {
    %c0_i32 = arith.constant 0 : i32
    %c0_i32_0 = arith.constant 0 : i32
    %c0_i32_1 = arith.constant 0 : i32
    return %c0_i32, %c0_i32_0 : i32, i32
  }
  func.func @transform_4(%arg0: i32) -> (i32, i32) {
    %c0_i32 = arith.constant 0 : i32
    %c0_i32_0 = arith.constant 0 : i32
    %c0_i32_1 = arith.constant 0 : i32
    return %c0_i32, %c0_i32_0 : i32, i32
  }
  func.func @transform_5(%arg0: i32) -> (i32, i32) {
    %c0_i32 = arith.constant 0 : i32
    %c0_i32_0 = arith.constant 0 : i32
    %c0_i32_1 = arith.constant 0 : i32
    return %c0_i32, %c0_i32_0 : i32, i32
  }
  func.func @transform_6(%arg0: i32) -> (i32, i32) {
    %c0_i32 = arith.constant 0 : i32
    %c0_i32_0 = arith.constant 0 : i32
    %c0_i32_1 = arith.constant 0 : i32
    return %c0_i32, %c0_i32_0 : i32, i32
  }
  func.func @transform_7(%arg0: i32) -> (i32, i32) {
    %c0_i32 = arith.constant 0 : i32
    %c0_i32_0 = arith.constant 0 : i32
    %c0_i32_1 = arith.constant 0 : i32
    return %c0_i32, %c0_i32_0 : i32, i32
  }
  func.func @transform_8(%arg0: i32) -> (i32, i32) {
    %c0_i32 = arith.constant 0 : i32
    %c0_i32_0 = arith.constant 0 : i32
    %c0_i32_1 = arith.constant 0 : i32
    return %c0_i32, %c0_i32_0 : i32, i32
  }
  func.func @transform_9(%arg0: i32) -> (i32, i32) {
    %c0_i32 = arith.constant 0 : i32
    %c0_i32_0 = arith.constant 0 : i32
    %c0_i32_1 = arith.constant 0 : i32
    return %c0_i32, %c0_i32_0 : i32, i32
  }
  func.func @transform_10(%arg0: i32) -> (i32, i32) {
    %c0_i32 = arith.constant 0 : i32
    %c0_i32_0 = arith.constant 0 : i32
    %c0_i32_1 = arith.constant 0 : i32
    return %c0_i32, %c0_i32_0 : i32, i32
  }
  func.func @transform_11(%arg0: i32) -> (i32, i32) {
    %c0_i32 = arith.constant 0 : i32
    %c0_i32_0 = arith.constant 0 : i32
    %c0_i32_1 = arith.constant 0 : i32
    return %c0_i32, %c0_i32_0 : i32, i32
  }
  func.func @transform_12(%arg0: i32) -> (i32, i32) {
    %c0_i32 = arith.constant 0 : i32
    %c0_i32_0 = arith.constant 0 : i32
    %c0_i32_1 = arith.constant 0 : i32
    return %c0_i32, %c0_i32_0 : i32, i32
  }
  func.func @transform_13(%arg0: i32) -> (i32, i32) {
    %c0_i32 = arith.constant 0 : i32
    %c0_i32_0 = arith.constant 0 : i32
    %c0_i32_1 = arith.constant 0 : i32
    return %c0_i32, %c0_i32_0 : i32, i32
  }
  func.func @transform_14(%arg0: i32) -> (i32, i32) {
    %c0_i32 = arith.constant 0 : i32
    %c0_i32_0 = arith.constant 0 : i32
    %c0_i32_1 = arith.constant 0 : i32
    return %c0_i32, %c0_i32_0 : i32, i32
  }
  func.func @transform_15(%arg0: i32) -> (i32, i32) {
    %c0_i32 = arith.constant 0 : i32
    %c0_i32_0 = arith.constant 0 : i32
    %c0_i32_1 = arith.constant 0 : i32
    return %c0_i32, %c0_i32_0 : i32, i32
  }
  func.func @transform_16(%arg0: i32) -> (i32, i32) {
    %c0_i32 = arith.constant 0 : i32
    %c0_i32_0 = arith.constant 0 : i32
    %c0_i32_1 = arith.constant 0 : i32
    return %c0_i32, %c0_i32_0 : i32, i32
  }
  func.func @transform_17(%arg0: i32) -> (i32, i32) {
    %c0_i32 = arith.constant 0 : i32
    %c0_i32_0 = arith.constant 0 : i32
    %c0_i32_1 = arith.constant 0 : i32
    return %c0_i32, %c0_i32_0 : i32, i32
  }
  func.func @transform_18(%arg0: i32) -> (i32, i32) {
    %c0_i32 = arith.constant 0 : i32
    %c0_i32_0 = arith.constant 0 : i32
    %c0_i32_1 = arith.constant 0 : i32
    return %c0_i32, %c0_i32_0 : i32, i32
  }
  func.func @transform_19(%arg0: i32) -> (i32, i32, i32) {
    %c0_i32 = arith.constant 0 : i32
    %c0_i32_0 = arith.constant 0 : i32
    %c0_i32_1 = arith.constant 0 : i32
    return %c0_i32, %arg0, %c0_i32_0 : i32, i32, i32
  }
}

module attributes {stable_mosaic.version = 11 : i64} {
  func.func @_ln_linear_kernel(%arg0: i32, %arg1: memref<16x32xbf16, #tpu.memory_space<vmem>>, %arg2: memref<1x32xf32, #tpu.memory_space<vmem>>, %arg3: memref<1x32xf32, #tpu.memory_space<vmem>>, %arg4: memref<32x128xbf16, #tpu.memory_space<vmem>>, %arg5: memref<1x128xf32, #tpu.memory_space<vmem>>, %arg6: memref<16x128xf32, #tpu.memory_space<vmem>>) attributes {dimension_semantics = [#tpu.dimension_semantics<parallel>], iteration_bounds = array<i64: 1>, scalar_prefetch = 0 : i64, scratch_operands = 0 : i64, tpu.core_type = #tpu.core_type<tc>, window_params = [{transform_indices = @transform_0, window_bounds = array<i64: 16, 32>}, {pipeline_mode = #tpu.pipeline_mode<synchronous>, transform_indices = @transform_1, window_bounds = array<i64: 1, 32>}, {pipeline_mode = #tpu.pipeline_mode<synchronous>, transform_indices = @transform_2, window_bounds = array<i64: 1, 32>}, {pipeline_mode = #tpu.pipeline_mode<synchronous>, transform_indices = @transform_3, window_bounds = array<i64: 32, 128>}, {pipeline_mode = #tpu.pipeline_mode<synchronous>, transform_indices = @transform_4, window_bounds = array<i64: 1, 128>}, {transform_indices = @transform_5, window_bounds = array<i64: 16, 128>}]} {
    %c0 = arith.constant 0 : index
    %c0_0 = arith.constant 0 : index
    %0 = vector.load %arg1[%c0, %c0_0] : memref<16x32xbf16, #tpu.memory_space<vmem>>, vector<16x32xbf16>
    %1 = arith.extf %0 : vector<16x32xbf16> to vector<16x32xf32>
    %c0_1 = arith.constant 0 : index
    %c0_2 = arith.constant 0 : index
    %2 = vector.load %arg2[%c0_1, %c0_2] : memref<1x32xf32, #tpu.memory_space<vmem>>, vector<1x32xf32>
    %c0_3 = arith.constant 0 : index
    %c0_4 = arith.constant 0 : index
    %3 = vector.load %arg3[%c0_3, %c0_4] : memref<1x32xf32, #tpu.memory_space<vmem>>, vector<1x32xf32>
    %cst = arith.constant dense<0.000000e+00> : vector<16xf32>
    %4 = vector.multi_reduction <add>, %1, %cst [1] : vector<16x32xf32> to vector<16xf32>
    %5 = vector.shape_cast %4 : vector<16xf32> to vector<16x1xf32>
    %cst_5 = arith.constant 3.200000e+01 : f32
    %6 = vector.broadcast %cst_5 : f32 to vector<16x1xf32>
    %7 = arith.divf %5, %6 : vector<16x1xf32>
    %8 = vector.broadcast %7 : vector<16x1xf32> to vector<16x32xf32>
    %9 = arith.subf %1, %8 : vector<16x32xf32>
    %10 = arith.mulf %9, %9 : vector<16x32xf32>
    %cst_6 = arith.constant dense<0.000000e+00> : vector<16xf32>
    %11 = vector.multi_reduction <add>, %10, %cst_6 [1] : vector<16x32xf32> to vector<16xf32>
    %12 = vector.shape_cast %11 : vector<16xf32> to vector<16x1xf32>
    %cst_7 = arith.constant 3.200000e+01 : f32
    %13 = vector.broadcast %cst_7 : f32 to vector<16x1xf32>
    %14 = arith.divf %12, %13 : vector<16x1xf32>
    %cst_8 = arith.constant 9.99999974E-6 : f32
    %15 = vector.broadcast %cst_8 : f32 to vector<16x1xf32>
    %16 = arith.addf %14, %15 : vector<16x1xf32>
    %17 = math.rsqrt %16 : vector<16x1xf32>
    %18 = vector.broadcast %17 : vector<16x1xf32> to vector<16x32xf32>
    %19 = arith.mulf %9, %18 : vector<16x32xf32>
    %20 = vector.broadcast %2 : vector<1x32xf32> to vector<16x32xf32>
    %21 = arith.mulf %19, %20 : vector<16x32xf32>
    %22 = vector.broadcast %3 : vector<1x32xf32> to vector<16x32xf32>
    %23 = arith.addf %21, %22 : vector<16x32xf32>
    %24 = arith.truncf %23 : vector<16x32xf32> to vector<16x32xbf16>
    %c0_9 = arith.constant 0 : index
    %c0_10 = arith.constant 0 : index
    %25 = vector.load %arg4[%c0_9, %c0_10] : memref<32x128xbf16, #tpu.memory_space<vmem>>, vector<32x128xbf16>
    %cst_11 = arith.constant dense<0.000000e+00> : vector<16x128xf32>
    %26 = tpu.matmul %24, %25, %cst_11 {dimension_numbers = #tpu.dot_dimension_numbers<[1], [0], [0], [1], [0, 0, 1, 1], [], []>} : vector<16x32xbf16>, vector<32x128xbf16>, vector<16x128xf32> -> vector<16x128xf32>
    %c0_12 = arith.constant 0 : index
    %c0_13 = arith.constant 0 : index
    %27 = vector.load %arg5[%c0_12, %c0_13] : memref<1x128xf32, #tpu.memory_space<vmem>>, vector<1x128xf32>
    %28 = vector.broadcast %27 : vector<1x128xf32> to vector<16x128xf32>
    %29 = arith.addf %26, %28 : vector<16x128xf32>
    %c0_14 = arith.constant 0 : index
    %c0_15 = arith.constant 0 : index
    %30 = vector.load %arg6[%c0_14, %c0_15] : memref<16x128xf32, #tpu.memory_space<vmem>>, vector<16x128xf32>
    tpu.vector_store %arg6[%c0_14, %c0_15], %29 {strides = array<i32>} : memref<16x128xf32, #tpu.memory_space<vmem>>, vector<16x128xf32>,
    return
  }
  func.func @transform_0(%arg0: i32) -> (i32, i32) {
    %c0_i32 = arith.constant 0 : i32
    %c0_i32_0 = arith.constant 0 : i32
    return %arg0, %c0_i32 : i32, i32
  }
  func.func @transform_1(%arg0: i32) -> (i32, i32) {
    %c0_i32 = arith.constant 0 : i32
    %c0_i32_0 = arith.constant 0 : i32
    %c0_i32_1 = arith.constant 0 : i32
    return %c0_i32, %c0_i32_0 : i32, i32
  }
  func.func @transform_2(%arg0: i32) -> (i32, i32) {
    %c0_i32 = arith.constant 0 : i32
    %c0_i32_0 = arith.constant 0 : i32
    %c0_i32_1 = arith.constant 0 : i32
    return %c0_i32, %c0_i32_0 : i32, i32
  }
  func.func @transform_3(%arg0: i32) -> (i32, i32) {
    %c0_i32 = arith.constant 0 : i32
    %c0_i32_0 = arith.constant 0 : i32
    %c0_i32_1 = arith.constant 0 : i32
    return %c0_i32, %c0_i32_0 : i32, i32
  }
  func.func @transform_4(%arg0: i32) -> (i32, i32) {
    %c0_i32 = arith.constant 0 : i32
    %c0_i32_0 = arith.constant 0 : i32
    %c0_i32_1 = arith.constant 0 : i32
    return %c0_i32, %c0_i32_0 : i32, i32
  }
  func.func @transform_5(%arg0: i32) -> (i32, i32) {
    %c0_i32 = arith.constant 0 : i32
    %c0_i32_0 = arith.constant 0 : i32
    return %arg0, %c0_i32 : i32, i32
  }
}

</mosaic_0001>

<llo_original>
// kernel: vit_forward.4
$region0: #{vit_forward.4}
  #allocation0 [shape = 'u32[]', space=smem, size = 0x4, offset = 0x4, fixed_abs, tag = 'smem constant byte address 0x4 - core index']
  #allocation1 [shape = 'u32[144,128]{1,0:T(1,128)}', space=vmem, size = 0x12000, scoped, tag = 'internal scratch']
  %s0 = inlined_call_operand.vmem [shape: bf16[32,64], index: 0, kind: input, shape index: {}]
  %s1 = inlined_call_operand.vmem [shape: bf16[64,32], index: 1, kind: input, shape index: {}]
  %s2 = inlined_call_operand.vmem [shape: f32[1,32], index: 2, kind: input, shape index: {}]
  %s3 = inlined_call_operand.vmem [shape: bf16[32,32], index: 3, kind: output, shape index: {}]
  %s4 = sld [smem:[#allocation0]]
  $region45: #{vit_forward.4} parent=0
    _
  %s6 = ssub.s32 1, %s4
  %s7 = scalar_select 0, %s6, %s4
  loop: start=0, step=1, limit=4
  $region2: #{vit_forward.4} parent=0 // loop_pre_header
    _
  $region3: #{vit_forward.4} parent=0 // loop_header
    %s9 = sphi 0, %s13
    %p10 = scmp.ge.s32.totalorder %s9, 4
    %s19 = sphi 0, %s21
    %s22 = sphi 0, %s19
    %s23 = sphi 0, %s22
    %s39 = sphi 0, %s23
    %s43 = sphi 0, %s43
    %s45 = sphi 0, %s43
    %s46 = sphi 0, %s45
    %s60 = sphi 0, %s46
    %s64 = sphi 0, %s64
    %s66 = sphi 0, %s64
    %s67 = sphi 0, %s66
    %s81 = sphi 0, %s67
    %s87 = sphi 0, %s89
    %s90 = sphi 0, %s87
    %s91 = sphi 0, %s90
    %s107 = sphi 0, %s91
  $region4: #{vit_forward.4} parent=0 // loop_header_branch
    %12 = sbr.rel (%p10) target = $region8
  $region5: #{vit_forward.4} parent=0 // loop_body
    %s14 = ssub.s32 %s9, 1
    %s15 = ssub.s32 %s9, 2
    %s16 = sadd.s32 %s9, 1
    %s17 = ssub.s32 %s9, %s16
    %p18 = scmp.eq.s32.totalorder %s17, 0
    %s20 = sadd.s32 %s19, 1
    %s21 = scalar_select %p18, %s19, %s20
    %p24 = pneg %p18
    %p25 = scmp.eq.s32.totalorder %s9, 1
    %p26 = por %p24, %p25
    %p27 = scmp.ne.s32.totalorder %s19, %s22
    %p28 = scmp.eq.s32.totalorder %s9, 0
    %p29 = por %p27, %p28
    %p30 = scmp.ne.s32.totalorder %s19, %s22
    %p31 = scmp.eq.s32.totalorder %s14, 1
    %p32 = por %p30, %p31
    %p33 = scmp.ne.s32.totalorder %s22, %s23
    %p34 = scmp.eq.s32.totalorder %s14, 0
    %p35 = por %p33, %p34
    %p36 = scmp.ne.s32.totalorder %s22, %s23
    %p37 = scmp.eq.s32.totalorder %s15, 1
    %p38 = por %p36, %p37
    %p40 = scmp.ne.s32.totalorder %s23, %s39
    %p41 = scmp.eq.s32.totalorder %s15, 0
    %p42 = por %p40, %p41
    %s44 = sadd.s32 %s43, 1
    %p47 = scmp.eq.s32.totalorder %s9, 1
    %p48 = scmp.ne.s32.totalorder %s43, %s45
    %p49 = scmp.eq.s32.totalorder %s9, 0
    %p50 = por %p48, %p49
    %p51 = scmp.ne.s32.totalorder %s43, %s45
    %p52 = scmp.eq.s32.totalorder %s14, 1
    %p53 = por %p51, %p52
    %p54 = scmp.ne.s32.totalorder %s45, %s46
    %p55 = scmp.eq.s32.totalorder %s14, 0
    %p56 = por %p54, %p55
    %p57 = scmp.ne.s32.totalorder %s45, %s46
    %p58 = scmp.eq.s32.totalorder %s15, 1
    %p59 = por %p57, %p58
    %p61 = scmp.ne.s32.totalorder %s46, %s60
    %p62 = scmp.eq.s32.totalorder %s15, 0
    %p63 = por %p61, %p62
    %s65 = sadd.s32 %s64, 1
    %p68 = scmp.eq.s32.totalorder %s9, 1
    %p69 = scmp.ne.s32.totalorder %s64, %s66
    %p70 = scmp.eq.s32.totalorder %s9, 0
    %p71 = por %p69, %p70
    %p72 = scmp.ne.s32.totalorder %s64, %s66
    %p73 = scmp.eq.s32.totalorder %s14, 1
    %p74 = por %p72, %p73
    %p75 = scmp.ne.s32.totalorder %s66, %s67
    %p76 = scmp.eq.s32.totalorder %s14, 0
    %p77 = por %p75, %p76
    %p78 = scmp.ne.s32.totalorder %s66, %s67
    %p79 = scmp.eq.s32.totalorder %s15, 1
    %p80 = por %p78, %p79
    %p82 = scmp.ne.s32.totalorder %s67, %s81
    %p83 = scmp.eq.s32.totalorder %s15, 0
    %p84 = por %p82, %p83
    %s85 = ssub.s32 %s9, %s16
    %p86 = scmp.eq.s32.totalorder %s85, 0
    %s88 = sadd.s32 %s87, 1
    %s89 = scalar_select %p86, %s87, %s88
    %p92 = pneg %p86
    %p93 = scmp.eq.s32.totalorder %s9, 1
    %p94 = por %p92, %p93
    %p95 = scmp.ne.s32.totalorder %s87, %s90
    %p96 = scmp.eq.s32.totalorder %s9, 0
    %p97 = por %p95, %p96
    %p98 = scmp.ne.s32.totalorder %s87, %s90
    %p99 = scmp.eq.s32.totalorder %s14, 1
    %p100 = por %p98, %p99
    %p101 = scmp.ne.s32.totalorder %s90, %s91
    %p102 = scmp.eq.s32.totalorder %s14, 0
    %p103 = por %p101, %p102
    %p104 = scmp.ne.s32.totalorder %s90, %s91
    %p105 = scmp.eq.s32.totalorder %s15, 1
    %p106 = por %p104, %p105
    %p108 = scmp.ne.s32.totalorder %s91, %s107
    %p109 = scmp.eq.s32.totalorder %s15, 0
    %p110 = por %p108, %p109
    %p111 = scmp.le.s32.totalorder 1, %s9
    %p112 = scmp.lt.s32.totalorder %s9, 3
    %p113 = pnand %p111, %p112
    %p114 = pneg %p113
    // Predicated region
    $region9: #{vit_forward.4} parent=5 // pred_check
      _
    $region10: #{vit_forward.4} parent=5 // pred_check_branch
      %116 = sbr.rel (%p113) target = $region12
    $region11: #{vit_forward.4} parent=5 // pred_region
      %s117 = ssub.s32 %s9, 1
      // Predicated region
      $region13: #{vit_forward.4} parent=11 // pred_check
        %p118 = pneg %p56
      $region14: #{vit_forward.4} parent=11 // pred_check_branch
        %120 = sbr.rel (%p118) target = $region16
      $region15: #{vit_forward.4} parent=11 // pred_region
        _
      $region16: #{vit_forward.4} parent=11 // pred_fallthru
        _
      // Predicated region
      $region17: #{vit_forward.4} parent=11 // pred_check
        %p121 = pneg %p77
      $region18: #{vit_forward.4} parent=11 // pred_check_branch
        %123 = sbr.rel (%p121) target = $region20
      $region19: #{vit_forward.4} parent=11 // pred_region
        _
      $region20: #{vit_forward.4} parent=11 // pred_fallthru
        _
    $region12: #{vit_forward.4} parent=5 // pred_fallthru
      _
    %p124 = scmp.lt.s32.totalorder %s9, 2
    // Predicated region
    $region21: #{vit_forward.4} parent=5 // pred_check
      %p125 = pneg %p124
    $region22: #{vit_forward.4} parent=5 // pred_check_branch
      %127 = sbr.rel (%p125) target = $region24
    $region23: #{vit_forward.4} parent=5 // pred_region
      // Predicated region
      $region25: #{vit_forward.4} parent=23 // pred_check
        %p128 = pneg %p29
      $region26: #{vit_forward.4} parent=23 // pred_check_branch
        %130 = sbr.rel (%p128) target = $region28
      $region27: #{vit_forward.4} parent=23 // pred_region
        %s131 = smul.u32 2, %s9
        %p132 = scmp.lt.s32.totalorder %s131, 3
        %s133 = scalar_select %p132, %s131, 3
        %s134 = smul.addr %s133, 4
        %s135 = scalar_lea.vmem %s0, %s134
        %s136 = smul.u32 2, %s9
      $region28: #{vit_forward.4} parent=23 // pred_fallthru
        _
    $region24: #{vit_forward.4} parent=5 // pred_fallthru
      _
    %p137 = scmp.le.s32.totalorder 1, %s9
    %p138 = scmp.lt.s32.totalorder %s9, 3
    %p139 = pnand %p137, %p138
    %p140 = pneg %p139
    // Predicated region
    $region29: #{vit_forward.4} parent=5 // pred_check
      _
    $region30: #{vit_forward.4} parent=5 // pred_check_branch
      %142 = sbr.rel (%p139) target = $region32
    $region31: #{vit_forward.4} parent=5 // pred_region
      %s143 = ssub.s32 %s9, 1
      %s144 = smul.u32 2, %s14
      %p145 = scmp.lt.s32.totalorder %s144, 3
      %s146 = scalar_select %p145, %s144, 3
      %s147 = smul.addr %s146, 4
      %s148 = scalar_lea.vmem %s0, %s147
      %p149 = pneg %p35
      %p150 = pneg %p32
      %p151 = pneg %p56
      %p152 = pneg %p53
      %p153 = pneg %p77
      %p154 = pneg %p74
      %p155 = pneg %p103
      %p156 = pneg %p100
      %s157 = smul.u32 2, %s14
      %p158 = scmp.lt.s32.totalorder %s157, 3
      %s159 = scalar_select %p158, %s157, 3
      %s160 = smul.addr %s159, 4
      %s161 = scalar_lea.vmem %s3, %s160
      %s162 = smul.u32 2, %s14
      %p163 = scmp.lt.s32.totalorder %s162, 3
      %s164 = scalar_select %p163, %s162, 3
      %s165 = smul.addr %s164, 4
      %s166 = scalar_lea.vmem %s0, %s165
      %s167 = smul.u32 2, %s14
      %s168 = smul.u32 2, %s14
      %p169 = scmp.lt.s32.totalorder %s168, 3
      %s170 = scalar_select %p169, %s168, 3
      %s171 = smul.addr %s170, 4
      %s172 = scalar_lea.vmem %s3, %s171
      %s173 = smul.u32 2, %s14
      %v175 = vld [vmem:[%s166] sm:$0xf]
      %v176 = vld [vmem:[%s166 + $0x4] sm:$0xf]
      %v177 = vld [vmem:[%s1] sm:$0xf]
      %v178 = vld [vmem:[%s1 + $0x4] sm:$0xf]
      %v179 = vld [vmem:[%s1 + $0x8] sm:$0xf]
      %v180 = vld [vmem:[%s1 + $0xc] sm:$0xf]
      %v181 = vld [vmem:[%s1 + $0x10] sm:$0xf]
      %v182 = vld [vmem:[%s1 + $0x14] sm:$0xf]
      %v183 = vld [vmem:[%s1 + $0x18] sm:$0xf]
      %v184 = vld [vmem:[%s1 + $0x1c] sm:$0xf]
      %v185 = vld [vmem:[%s2] sm:$0x1]
      %v187 = vlaneseq
      %v188 = vshrl.u32 %v187, 7
      %v189 = vsub.s32 0, %v188
      %v190 = vrot.slane %v185, %v189
      %v194 = vunpack.c.l.b16 %v175
      %v195 = vunpack.c.l.b16 %v176
      %v196 = vpack.c.b16 %v195, %v194
      %v205 = vunpack.c.l.b16 %v177
      %v206 = vunpack.c.l.b16 %v178
      %v207 = vunpack.c.l.b16 %v179
      %v208 = vunpack.c.l.b16 %v180
      %v209 = vunpack.c.l.b16 %v181
      %v210 = vunpack.c.l.b16 %v182
      %v211 = vunpack.c.l.b16 %v183
      %v212 = vunpack.c.l.b16 %v184
      %v213 = vpack.c.b16 %v206, %v205
      %v214 = vpack.c.b16 %v208, %v207
      %v215 = vpack.c.b16 %v210, %v209
      %v216 = vpack.c.b16 %v212, %v211
      %vm221 = vcmask 523264
      %v223 = vsel %vm221, %v196, 0
      %225 = vmatprep.subr.bf16.mxu0 0
      %226 = vmatpush1.bf16.msra.mxu0 %v213
      %227 = vmatprep.subr.bf16.mxu0 0
      %228 = vmatpush1.bf16.msra.mxu0 %v214
      %229 = vmatprep.subr.bf16.mxu0 0
      %230 = vmatpush1.bf16.msra.mxu0 %v215
      %231 = vmatprep.subr.bf16.mxu0 0
      %232 = vmatpush1.bf16.msra.mxu0 %v216
      %233 = vmatprep.subr.bf16.mxu0 0
      %234 = vmatpush1.bf16.msra.mxu0 0
      %235 = vmatprep.subr.bf16.mxu0 0
      %236 = vmatpush1.bf16.msra.mxu0 0
      %237 = vmatprep.subr.bf16.mxu0 0
      %238 = vmatpush1.bf16.msra.mxu0 0
      %239 = vmatprep.subr.bf16.mxu0 0
      %240 = vmatpush1.bf16.msra.mxu0 0
      %241 = vmatprep.subr.bf16.mxu0 0
      %242 = vmatpush1.bf16.msra.mxu0 0
      %243 = vmatprep.subr.bf16.mxu0 0
      %244 = vmatpush1.bf16.msra.mxu0 0
      %245 = vmatprep.subr.bf16.mxu0 0
      %246 = vmatpush1.bf16.msra.mxu0 0
      %247 = vmatprep.subr.bf16.mxu0 0
      %248 = vmatpush1.bf16.msra.mxu0 0
      %249 = vmatprep.subr.bf16.mxu0 0
      %250 = vmatpush1.bf16.msra.mxu0 0
      %251 = vmatprep.subr.bf16.mxu0 0
      %252 = vmatpush1.bf16.msra.mxu0 0
      %253 = vmatprep.subr.bf16.mxu0 0
      %254 = vmatpush1.bf16.msra.mxu0 0
      %255 = vmatprep.subr.bf16.mxu0 0
      %256 = vmatpush1.bf16.msra.mxu0 0
      %257 = vmatprep.mubr.bf16.mxu0 0
      %258 = vmatmul.mubr.bf16.gmra.mrb[0].mxu0 %v223
      %v259 = vpop.f32.mrb[0].mxu0
      %v260 = vadd.f32 %v190, %v259
      %v261 = vpop.f32.mrb[0].mxu0
      %v262 = vpop.f32.mrb[0].mxu0
      %v263 = vadd.f32 %v190, %v262
      %v264 = vpop.f32.mrb[0].mxu0
      %265 = vdwg.mxu0
      %v266 = vpack.c.bf16 %v263, %v260
      %v268 = vunpack.c.l.b16 %v266
      %v269 = vunpack.c.h.b16 %v266
      %v270 = vpack.c.b16 %v268, %v268
      %v271 = vpack.c.b16 %v269, %v269
      %vm274 = vcmask 257024
      %275 = vst.msk [vmem:[%s172] sm:$0xf] %vm274, %v270
      %276 = vst.msk [vmem:[%s172 + $0x4] sm:$0xf] %vm274, %v271
      %s277 = smul.u32 2, %s14
      %p278 = scmp.lt.s32.totalorder %s277, 3
      %s279 = scalar_select %p278, %s277, 3
      %s280 = smul.addr %s279, 4
      %s281 = scalar_lea.vmem %s3, %s280
      // Predicated region
      $region33: #{vit_forward.4} parent=31 // pred_check
        %p282 = pneg %p100
      $region34: #{vit_forward.4} parent=31 // pred_check_branch
        %284 = sbr.rel (%p282) target = $region36
      $region35: #{vit_forward.4} parent=31 // pred_region
        %s285 = smul.u32 2, %s14
      $region36: #{vit_forward.4} parent=31 // pred_fallthru
        _
    $region32: #{vit_forward.4} parent=5 // pred_fallthru
      _
    %p286 = scmp.le.s32.totalorder 2, %s9
    // Predicated region
    $region37: #{vit_forward.4} parent=5 // pred_check
      %p287 = pneg %p286
    $region38: #{vit_forward.4} parent=5 // pred_check_branch
      %289 = sbr.rel (%p287) target = $region40
    $region39: #{vit_forward.4} parent=5 // pred_region
      %s290 = ssub.s32 %s9, 2
      // Predicated region
      $region41: #{vit_forward.4} parent=39 // pred_check
        %p291 = pneg %p106
      $region42: #{vit_forward.4} parent=39 // pred_check_branch
        %293 = sbr.rel (%p291) target = $region44
      $region43: #{vit_forward.4} parent=39 // pred_region
        %s294 = smul.u32 2, %s15
        %p295 = scmp.lt.s32.totalorder %s294, 3
        %s296 = scalar_select %p295, %s294, 3
        %s297 = smul.addr %s296, 4
        %s298 = scalar_lea.vmem %s3, %s297
      $region44: #{vit_forward.4} parent=39 // pred_fallthru
        _
    $region40: #{vit_forward.4} parent=5 // pred_fallthru
      _
  $region6: #{vit_forward.4} parent=0 // loop_footer
    %s13 = sadd.s32 1, %s9
  $region7: #{vit_forward.4} parent=0 // loop_footer_branch
    %8 = sbr.rel target = $region3
  $region8: #{vit_forward.4} parent=0 // loop_exit
    _

// kernel: vit_forward.7
$region0: #{vit_forward.7}
  #allocation0 [shape = 'u32[]', space=smem, size = 0x4, offset = 0x4, fixed_abs, tag = 'smem constant byte address 0x4 - core index']
  #allocation1 [shape = 'u32[144,128]{1,0:T(1,128)}', space=vmem, size = 0x12000, scoped, tag = 'internal scratch']
  %s0 = inlined_call_operand.vmem [shape: bf16[16,32], index: 0, kind: input, shape index: {}]
  %s1 = inlined_call_operand.vmem [shape: f32[1,32], index: 1, kind: input, shape index: {}]
  %s2 = inlined_call_operand.vmem [shape: f32[1,32], index: 2, kind: input, shape index: {}]
  %s3 = inlined_call_operand.vmem [shape: bf16[32,128], index: 3, kind: input, shape index: {}]
  %s4 = inlined_call_operand.vmem [shape: f32[1,128], index: 4, kind: input, shape index: {}]
  %s5 = inlined_call_operand.vmem [shape: f32[16,128], index: 5, kind: output, shape index: {}]
  %s6 = sld [smem:[#allocation0]]
  $region30: #{vit_forward.7} parent=0
    _
  %s8 = ssub.s32 1, %s6
  %s9 = scalar_select 0, %s8, %s6
  // Predicated region
  $region2: #{vit_forward.7} parent=0 // pred_check
    _
  $region3: #{vit_forward.7} parent=0 // pred_check_branch
    %11 = sbr.rel (0) target = $region5
  $region4: #{vit_forward.7} parent=0 // pred_region
    _
  $region5: #{vit_forward.7} parent=0 // pred_fallthru
    _
  // Predicated region
  $region6: #{vit_forward.7} parent=0 // pred_check
    _
  $region7: #{vit_forward.7} parent=0 // pred_check_branch
    %13 = sbr.rel (0) target = $region9
  $region8: #{vit_forward.7} parent=0 // pred_region
    _
  $region9: #{vit_forward.7} parent=0 // pred_fallthru
    _
  // Predicated region
  $region10: #{vit_forward.7} parent=0 // pred_check
    _
  $region11: #{vit_forward.7} parent=0 // pred_check_branch
    %15 = sbr.rel (0) target = $region13
  $region12: #{vit_forward.7} parent=0 // pred_region
    _
  $region13: #{vit_forward.7} parent=0 // pred_fallthru
    _
  // Predicated region
  $region14: #{vit_forward.7} parent=0 // pred_check
    _
  $region15: #{vit_forward.7} parent=0 // pred_check_branch
    %17 = sbr.rel (0) target = $region17
  $region16: #{vit_forward.7} parent=0 // pred_region
    _
  $region17: #{vit_forward.7} parent=0 // pred_fallthru
    _
  // Predicated region
  $region18: #{vit_forward.7} parent=0 // pred_check
    _
  $region19: #{vit_forward.7} parent=0 // pred_check_branch
    %19 = sbr.rel (0) target = $region21
  $region20: #{vit_forward.7} parent=0 // pred_region
    _
  $region21: #{vit_forward.7} parent=0 // pred_fallthru
    _
  %v21 = vld [vmem:[%s0] sm:$0xf]
  %v22 = vld [vmem:[%s0 + $0x4] sm:$0xf]
  %v23 = vunpack.c.l.bf16 %v21
  %v24 = vunpack.c.l.bf16 %v22
  %v25 = vld [vmem:[%s1] sm:$0x1]
  %v26 = vld [vmem:[%s2] sm:$0x1]
  %vm27 = vcmask 261120
  %v28 = vsel %vm27, %v23, 0.0
  %29 = vadd.xlane.f32.xlu0 %v28
  %v30 = vpop.xlane.xlu0 %29
  %v31 = vsel %vm27, %v24, 0.0
  %32 = vadd.xlane.f32.xlu0 %v31
  %v33 = vpop.xlane.xlu0 %32
  %v34 = vrcp.pop 32.0
  %v35 = vmul.f32 %v30, %v34
  %v36 = vmul.f32 %v33, %v34
  %v37 = vsub.f32 %v23, %v35
  %v38 = vsub.f32 %v24, %v36
  %v39 = vmul.f32 %v37, %v37
  %v40 = vmul.f32 %v38, %v38
  %v41 = vsel %vm27, %v39, 0.0
  %42 = vadd.xlane.f32.xlu0 %v41
  %v43 = vpop.xlane.xlu0 %42
  %v44 = vsel %vm27, %v40, 0.0
  %45 = vadd.xlane.f32.xlu0 %v44
  %v46 = vpop.xlane.xlu0 %45
  %v47 = vmul.f32 %v43, %v34
  %v48 = vmul.f32 %v46, %v34
  %v49 = vadd.f32 %v47, 1e-05
  %v50 = vadd.f32 %v48, 1e-05
  %v51 = vrsqrt.pop %v49
  %v52 = vrsqrt.pop %v50
  %v53 = vmul.f32 %v37, %v51
  %v54 = vmul.f32 %v38, %v52
  %v56 = vlaneseq
  %v57 = vshrl.u32 %v56, 7
  %v58 = vsub.s32 0, %v57
  %v59 = vrot.slane %v25, %v58
  %v61 = vmul.f32 %v53, %v59
  %v62 = vmul.f32 %v54, %v59
  %v64 = vlaneseq
  %v65 = vshrl.u32 %v64, 7
  %v66 = vsub.s32 0, %v65
  %v67 = vrot.slane %v26, %v66
  %v69 = vadd.f32 %v61, %v67
  %v70 = vadd.f32 %v62, %v67
  %v71 = vpack.c.bf16 %v70, %v69
  %v72 = vld [vmem:[%s3] sm:$0xf]
  %v73 = vld [vmem:[%s3 + $0x4] sm:$0xf]
  %v74 = vld [vmem:[%s3 + $0x8] sm:$0xf]
  %v75 = vld [vmem:[%s3 + $0xc] sm:$0xf]
  %v76 = vld [vmem:[%s4] sm:$0x1]
  %v78 = vlaneseq
  %v79 = vshrl.u32 %v78, 7
  %v80 = vsub.s32 0, %v79
  %v81 = vrot.slane %v76, %v80
  %v87 = vunpack.c.l.b16 %v72
  %v88 = vunpack.c.l.b16 %v73
  %v89 = vunpack.c.l.b16 %v74
  %v90 = vunpack.c.l.b16 %v75
  %v91 = vpack.c.b16 %v88, %v87
  %v92 = vpack.c.b16 %v90, %v89
  %v96 = vsel %vm27, %v71, 0
  %98 = vmatprep.subr.bf16.mxu0 0
  %99 = vmatpush1.bf16.msra.mxu0 %v91
  %100 = vmatprep.subr.bf16.mxu0 0
  %101 = vmatpush1.bf16.msra.mxu0 %v92
  %102 = vmatprep.subr.bf16.mxu0 0
  %103 = vmatpush1.bf16.msra.mxu0 0
  %104 = vmatprep.subr.bf16.mxu0 0
  %105 = vmatpush1.bf16.msra.mxu0 0
  %106 = vmatprep.subr.bf16.mxu0 0
  %107 = vmatpush1.bf16.msra.mxu0 0
  %108 = vmatprep.subr.bf16.mxu0 0
  %109 = vmatpush1.bf16.msra.mxu0 0
  %110 = vmatprep.subr.bf16.mxu0 0
  %111 = vmatpush1.bf16.msra.mxu0 0
  %112 = vmatprep.subr.bf16.mxu0 0
  %113 = vmatpush1.bf16.msra.mxu0 0
  %114 = vmatprep.subr.bf16.mxu0 0
  %115 = vmatpush1.bf16.msra.mxu0 0
  %116 = vmatprep.subr.bf16.mxu0 0
  %117 = vmatpush1.bf16.msra.mxu0 0
  %118 = vmatprep.subr.bf16.mxu0 0
  %119 = vmatpush1.bf16.msra.mxu0 0
  %120 = vmatprep.subr.bf16.mxu0 0
  %121 = vmatpush1.bf16.msra.mxu0 0
  %122 = vmatprep.subr.bf16.mxu0 0
  %123 = vmatpush1.bf16.msra.mxu0 0
  %124 = vmatprep.subr.bf16.mxu0 0
  %125 = vmatpush1.bf16.msra.mxu0 0
  %126 = vmatprep.subr.bf16.mxu0 0
  %127 = vmatpush1.bf16.msra.mxu0 0
  %128 = vmatprep.subr.bf16.mxu0 0
  %129 = vmatpush1.bf16.msra.mxu0 0
  %130 = vmatprep.mubr.bf16.mxu0 0
  %131 = vmatmul.mubr.bf16.gmra.mrb[0].mxu0 %v96
  %v132 = vpop.f32.mrb[0].mxu0
  %v133 = vadd.f32 %v81, %v132
  %v134 = vpop.f32.mrb[0].mxu0
  %v135 = vpop.f32.mrb[0].mxu0
  %v136 = vadd.f32 %v81, %v135
  %v137 = vpop.f32.mrb[0].mxu0
  %138 = vdwg.mxu0
  %139 = vst [vmem:[%s5] sm:$0xff] %v133
  %140 = vst [vmem:[%s5 + $0x8] sm:$0xff] %v136
  // Predicated region
  $region22: #{vit_forward.7} parent=0 // pred_check
    _
  $region23: #{vit_forward.7} parent=0 // pred_check_branch
    %142 = sbr.rel (0) target = $region25
  $region24: #{vit_forward.7} parent=0 // pred_region
    _
  $region25: #{vit_forward.7} parent=0 // pred_fallthru
    _
  // Predicated region
  $region26: #{vit_forward.7} parent=0 // pred_check
    _
  $region27: #{vit_forward.7} parent=0 // pred_check_branch
    %144 = sbr.rel (0) target = $region29
  $region28: #{vit_forward.7} parent=0 // pred_region
    _
  $region29: #{vit_forward.7} parent=0 // pred_fallthru
    _

// kernel: vit_forward.5
$region0: #{vit_forward.5}
  #allocation0 [shape = 'u32[]', space=smem, size = 0x4, offset = 0x4, fixed_abs, tag = 'smem constant byte address 0x4 - core index']
  #allocation1 [shape = 'u32[144,128]{1,0:T(1,128)}', space=vmem, size = 0x12000, scoped, tag = 'internal scratch']
  %s0 = inlined_call_operand.vmem [shape: bf16[2,32,32], index: 0, kind: input, shape index: {}]
  %s1 = inlined_call_operand.vmem [shape: bf16[32,32], index: 1, kind: input, shape index: {}]
  %s2 = inlined_call_operand.vmem [shape: bf16[32,32], index: 2, kind: input, shape index: {}]
  %s3 = inlined_call_operand.vmem [shape: bf16[32,32], index: 3, kind: input, shape index: {}]
  %s4 = inlined_call_operand.vmem [shape: f32[1,32], index: 4, kind: input, shape index: {}]
  %s5 = inlined_call_operand.vmem [shape: f32[1,32], index: 5, kind: input, shape index: {}]
  %s6 = inlined_call_operand.vmem [shape: f32[1,32], index: 6, kind: input, shape index: {}]
  %s7 = inlined_call_operand.vmem [shape: bf16[32,32], index: 7, kind: input, shape index: {}]
  %s8 = inlined_call_operand.vmem [shape: f32[1,32], index: 8, kind: input, shape index: {}]
  %s9 = inlined_call_operand.vmem [shape: f32[1,32], index: 9, kind: input, shape index: {}]
  %s10 = inlined_call_operand.vmem [shape: f32[1,32], index: 10, kind: input, shape index: {}]
  %s11 = inlined_call_operand.vmem [shape: bf16[32,2048], index: 11, kind: input, shape index: {}]
  %s12 = inlined_call_operand.vmem [shape: f32[1,2048], index: 12, kind: input, shape index: {}]
  %s13 = inlined_call_operand.vmem [shape: bf16[2048,32], index: 13, kind: input, shape index: {}]
  %s14 = inlined_call_operand.vmem [shape: f32[1,32], index: 14, kind: input, shape index: {}]
  %s15 = inlined_call_operand.vmem [shape: f32[1,32], index: 15, kind: input, shape index: {}]
  %s16 = inlined_call_operand.vmem [shape: f32[1,32], index: 16, kind: input, shape index: {}]
  %s17 = inlined_call_operand.vmem [shape: bf16[32,4], index: 17, kind: input, shape index: {}]
  %s18 = inlined_call_operand.vmem [shape: bf16[4,32], index: 18, kind: input, shape index: {}]
  %s19 = inlined_call_operand.vmem [shape: bf16[2,32,32], index: 19, kind: output, shape index: {}]
  %s20 = sld [smem:[#allocation0]]
  $region187: #{vit_forward.5} parent=0
    _
  %s22 = ssub.s32 1, %s20
  %s23 = scalar_select 0, %s22, %s20
  $region1: #{vit_forward.5} parent=0
    #allocation2 [shape = 'u8[16384]{0}', space=vmem, size = 0x4000, scoped, tag = 'input window, operand 0']
    #allocation3 [shape = 'u8[16384]{0}', space=vmem, size = 0x4000, scoped, tag = 'output window, operand 0']
    loop: start=0, step=1, limit=4
    $region2: #{vit_forward.5} parent=1 // loop_pre_header
      _
    $region3: #{vit_forward.5} parent=1 // loop_header
      %s25 = sphi 0, %s29
      %p26 = scmp.ge.s32.totalorder %s25, 4
      %s35 = sphi 0, %s37
      %s38 = sphi 0, %s35
      %s39 = sphi 0, %s38
      %s55 = sphi 0, %s39
      %s59 = sphi 0, %s59
      %s61 = sphi 0, %s59
      %s62 = sphi 0, %s61
      %s76 = sphi 0, %s62
      %s80 = sphi 0, %s80
      %s82 = sphi 0, %s80
      %s83 = sphi 0, %s82
      %s97 = sphi 0, %s83
      %s101 = sphi 0, %s101
      %s103 = sphi 0, %s101
      %s104 = sphi 0, %s103
      %s118 = sphi 0, %s104
      %s122 = sphi 0, %s122
      %s124 = sphi 0, %s122
      %s125 = sphi 0, %s124
      %s139 = sphi 0, %s125
      %s143 = sphi 0, %s143
      %s145 = sphi 0, %s143
      %s146 = sphi 0, %s145
      %s160 = sphi 0, %s146
      %s164 = sphi 0, %s164
      %s166 = sphi 0, %s164
      %s167 = sphi 0, %s166
      %s181 = sphi 0, %s167
      %s185 = sphi 0, %s185
      %s187 = sphi 0, %s185
      %s188 = sphi 0, %s187
      %s202 = sphi 0, %s188
      %s206 = sphi 0, %s206
      %s208 = sphi 0, %s206
      %s209 = sphi 0, %s208
      %s223 = sphi 0, %s209
      %s227 = sphi 0, %s227
      %s229 = sphi 0, %s227
      %s230 = sphi 0, %s229
      %s244 = sphi 0, %s230
      %s248 = sphi 0, %s248
      %s250 = sphi 0, %s248
      %s251 = sphi 0, %s250
      %s265 = sphi 0, %s251
      %s269 = sphi 0, %s269
      %s271 = sphi 0, %s269
      %s272 = sphi 0, %s271
      %s286 = sphi 0, %s272
      %s290 = sphi 0, %s290
      %s292 = sphi 0, %s290
      %s293 = sphi 0, %s292
      %s307 = sphi 0, %s293
      %s311 = sphi 0, %s311
      %s313 = sphi 0, %s311
      %s314 = sphi 0, %s313
      %s328 = sphi 0, %s314
      %s332 = sphi 0, %s332
      %s334 = sphi 0, %s332
      %s335 = sphi 0, %s334
      %s349 = sphi 0, %s335
      %s353 = sphi 0, %s353
      %s355 = sphi 0, %s353
      %s356 = sphi 0, %s355
      %s370 = sphi 0, %s356
      %s374 = sphi 0, %s374
      %s376 = sphi 0, %s374
      %s377 = sphi 0, %s376
      %s391 = sphi 0, %s377
      %s395 = sphi 0, %s395
      %s397 = sphi 0, %s395
      %s398 = sphi 0, %s397
      %s412 = sphi 0, %s398
      %s416 = sphi 0, %s416
      %s418 = sphi 0, %s416
      %s419 = sphi 0, %s418
      %s433 = sphi 0, %s419
      %s439 = sphi 0, %s441
      %s442 = sphi 0, %s439
      %s443 = sphi 0, %s442
      %s459 = sphi 0, %s443
    $region4: #{vit_forward.5} parent=1 // loop_header_branch
      %28 = sbr.rel (%p26) target = $region8
    $region5: #{vit_forward.5} parent=1 // loop_body
      %s30 = ssub.s32 %s25, 1
      %s31 = ssub.s32 %s25, 2
      %s32 = sadd.s32 %s25, 1
      %s33 = ssub.s32 %s25, %s32
      %p34 = scmp.eq.s32.totalorder %s33, 0
      %s36 = sadd.s32 %s35, 1
      %s37 = scalar_select %p34, %s35, %s36
      %p40 = pneg %p34
      %p41 = scmp.eq.s32.totalorder %s25, 1
      %p42 = por %p40, %p41
      %p43 = scmp.ne.s32.totalorder %s35, %s38
      %p44 = scmp.eq.s32.totalorder %s25, 0
      %p45 = por %p43, %p44
      %p46 = scmp.ne.s32.totalorder %s35, %s38
      %p47 = scmp.eq.s32.totalorder %s30, 1
      %p48 = por %p46, %p47
      %p49 = scmp.ne.s32.totalorder %s38, %s39
      %p50 = scmp.eq.s32.totalorder %s30, 0
      %p51 = por %p49, %p50
      %p52 = scmp.ne.s32.totalorder %s38, %s39
      %p53 = scmp.eq.s32.totalorder %s31, 1
      %p54 = por %p52, %p53
      %p56 = scmp.ne.s32.totalorder %s39, %s55
      %p57 = scmp.eq.s32.totalorder %s31, 0
      %p58 = por %p56, %p57
      %s60 = sadd.s32 %s59, 1
      %p63 = scmp.eq.s32.totalorder %s25, 1
      %p64 = scmp.ne.s32.totalorder %s59, %s61
      %p65 = scmp.eq.s32.totalorder %s25, 0
      %p66 = por %p64, %p65
      %p67 = scmp.ne.s32.totalorder %s59, %s61
      %p68 = scmp.eq.s32.totalorder %s30, 1
      %p69 = por %p67, %p68
      %p70 = scmp.ne.s32.totalorder %s61, %s62
      %p71 = scmp.eq.s32.totalorder %s30, 0
      %p72 = por %p70, %p71
      %p73 = scmp.ne.s32.totalorder %s61, %s62
      %p74 = scmp.eq.s32.totalorder %s31, 1
      %p75 = por %p73, %p74
      %p77 = scmp.ne.s32.totalorder %s62, %s76
      %p78 = scmp.eq.s32.totalorder %s31, 0
      %p79 = por %p77, %p78
      %s81 = sadd.s32 %s80, 1
      %p84 = scmp.eq.s32.totalorder %s25, 1
      %p85 = scmp.ne.s32.totalorder %s80, %s82
      %p86 = scmp.eq.s32.totalorder %s25, 0
      %p87 = por %p85, %p86
      %p88 = scmp.ne.s32.totalorder %s80, %s82
      %p89 = scmp.eq.s32.totalorder %s30, 1
      %p90 = por %p88, %p89
      %p91 = scmp.ne.s32.totalorder %s82, %s83
      %p92 = scmp.eq.s32.totalorder %s30, 0
      %p93 = por %p91, %p92
      %p94 = scmp.ne.s32.totalorder %s82, %s83
      %p95 = scmp.eq.s32.totalorder %s31, 1
      %p96 = por %p94, %p95
      %p98 = scmp.ne.s32.totalorder %s83, %s97
      %p99 = scmp.eq.s32.totalorder %s31, 0
      %p100 = por %p98, %p99
      %s102 = sadd.s32 %s101, 1
      %p105 = scmp.eq.s32.totalorder %s25, 1
      %p106 = scmp.ne.s32.totalorder %s101, %s103
      %p107 = scmp.eq.s32.totalorder %s25, 0
      %p108 = por %p106, %p107
      %p109 = scmp.ne.s32.totalorder %s101, %s103
      %p110 = scmp.eq.s32.totalorder %s30, 1
      %p111 = por %p109, %p110
      %p112 = scmp.ne.s32.totalorder %s103, %s104
      %p113 = scmp.eq.s32.totalorder %s30, 0
      %p114 = por %p112, %p113
      %p115 = scmp.ne.s32.totalorder %s103, %s104
      %p116 = scmp.eq.s32.totalorder %s31, 1
      %p117 = por %p115, %p116
      %p119 = scmp.ne.s32.totalorder %s104, %s118
      %p120 = scmp.eq.s32.totalorder %s31, 0
      %p121 = por %p119, %p120
      %s123 = sadd.s32 %s122, 1
      %p126 = scmp.eq.s32.totalorder %s25, 1
      %p127 = scmp.ne.s32.totalorder %s122, %s124
      %p128 = scmp.eq.s32.totalorder %s25, 0
      %p129 = por %p127, %p128
      %p130 = scmp.ne.s32.totalorder %s122, %s124
      %p131 = scmp.eq.s32.totalorder %s30, 1
      %p132 = por %p130, %p131
      %p133 = scmp.ne.s32.totalorder %s124, %s125
      %p134 = scmp.eq.s32.totalorder %s30, 0
      %p135 = por %p133, %p134
      %p136 = scmp.ne.s32.totalorder %s124, %s125
      %p137 = scmp.eq.s32.totalorder %s31, 1
      %p138 = por %p136, %p137
      %p140 = scmp.ne.s32.totalorder %s125, %s139
      %p141 = scmp.eq.s32.totalorder %s31, 0
      %p142 = por %p140, %p141
      %s144 = sadd.s32 %s143, 1
      %p147 = scmp.eq.s32.totalorder %s25, 1
      %p148 = scmp.ne.s32.totalorder %s143, %s145
      %p149 = scmp.eq.s32.totalorder %s25, 0
      %p150 = por %p148, %p149
      %p151 = scmp.ne.s32.totalorder %s143, %s145
      %p152 = scmp.eq.s32.totalorder %s30, 1
      %p153 = por %p151, %p152
      %p154 = scmp.ne.s32.totalorder %s145, %s146
      %p155 = scmp.eq.s32.totalorder %s30, 0
      %p156 = por %p154, %p155
      %p157 = scmp.ne.s32.totalorder %s145, %s146
      %p158 = scmp.eq.s32.totalorder %s31, 1
      %p159 = por %p157, %p158
      %p161 = scmp.ne.s32.totalorder %s146, %s160
      %p162 = scmp.eq.s32.totalorder %s31, 0
      %p163 = por %p161, %p162
      %s165 = sadd.s32 %s164, 1
      %p168 = scmp.eq.s32.totalorder %s25, 1
      %p169 = scmp.ne.s32.totalorder %s164, %s166
      %p170 = scmp.eq.s32.totalorder %s25, 0
      %p171 = por %p169, %p170
      %p172 = scmp.ne.s32.totalorder %s164, %s166
      %p173 = scmp.eq.s32.totalorder %s30, 1
      %p174 = por %p172, %p173
      %p175 = scmp.ne.s32.totalorder %s166, %s167
      %p176 = scmp.eq.s32.totalorder %s30, 0
      %p177 = por %p175, %p176
      %p178 = scmp.ne.s32.totalorder %s166, %s167
      %p179 = scmp.eq.s32.totalorder %s31, 1
      %p180 = por %p178, %p179
      %p182 = scmp.ne.s32.totalorder %s167, %s181
      %p183 = scmp.eq.s32.totalorder %s31, 0
      %p184 = por %p182, %p183
      %s186 = sadd.s32 %s185, 1
      %p189 = scmp.eq.s32.totalorder %s25, 1
      %p190 = scmp.ne.s32.totalorder %s185, %s187
      %p191 = scmp.eq.s32.totalorder %s25, 0
      %p192 = por %p190, %p191
      %p193 = scmp.ne.s32.totalorder %s185, %s187
      %p194 = scmp.eq.s32.totalorder %s30, 1
      %p195 = por %p193, %p194
      %p196 = scmp.ne.s32.totalorder %s187, %s188
      %p197 = scmp.eq.s32.totalorder %s30, 0
      %p198 = por %p196, %p197
      %p199 = scmp.ne.s32.totalorder %s187, %s188
      %p200 = scmp.eq.s32.totalorder %s31, 1
      %p201 = por %p199, %p200
      %p203 = scmp.ne.s32.totalorder %s188, %s202
      %p204 = scmp.eq.s32.totalorder %s31, 0
      %p205 = por %p203, %p204
      %s207 = sadd.s32 %s206, 1
      %p210 = scmp.eq.s32.totalorder %s25, 1
      %p211 = scmp.ne.s32.totalorder %s206, %s208
      %p212 = scmp.eq.s32.totalorder %s25, 0
      %p213 = por %p211, %p212
      %p214 = scmp.ne.s32.totalorder %s206, %s208
      %p215 = scmp.eq.s32.totalorder %s30, 1
      %p216 = por %p214, %p215
      %p217 = scmp.ne.s32.totalorder %s208, %s209
      %p218 = scmp.eq.s32.totalorder %s30, 0
      %p219 = por %p217, %p218
      %p220 = scmp.ne.s32.totalorder %s208, %s209
      %p221 = scmp.eq.s32.totalorder %s31, 1
      %p222 = por %p220, %p221
      %p224 = scmp.ne.s32.totalorder %s209, %s223
      %p225 = scmp.eq.s32.totalorder %s31, 0
      %p226 = por %p224, %p225
      %s228 = sadd.s32 %s227, 1
      %p231 = scmp.eq.s32.totalorder %s25, 1
      %p232 = scmp.ne.s32.totalorder %s227, %s229
      %p233 = scmp.eq.s32.totalorder %s25, 0
      %p234 = por %p232, %p233
      %p235 = scmp.ne.s32.totalorder %s227, %s229
      %p236 = scmp.eq.s32.totalorder %s30, 1
      %p237 = por %p235, %p236
      %p238 = scmp.ne.s32.totalorder %s229, %s230
      %p239 = scmp.eq.s32.totalorder %s30, 0
      %p240 = por %p238, %p239
      %p241 = scmp.ne.s32.totalorder %s229, %s230
      %p242 = scmp.eq.s32.totalorder %s31, 1
      %p243 = por %p241, %p242
      %p245 = scmp.ne.s32.totalorder %s230, %s244
      %p246 = scmp.eq.s32.totalorder %s31, 0
      %p247 = por %p245, %p246
      %s249 = sadd.s32 %s248, 1
      %p252 = scmp.eq.s32.totalorder %s25, 1
      %p253 = scmp.ne.s32.totalorder %s248, %s250
      %p254 = scmp.eq.s32.totalorder %s25, 0
      %p255 = por %p253, %p254
      %p256 = scmp.ne.s32.totalorder %s248, %s250
      %p257 = scmp.eq.s32.totalorder %s30, 1
      %p258 = por %p256, %p257
      %p259 = scmp.ne.s32.totalorder %s250, %s251
      %p260 = scmp.eq.s32.totalorder %s30, 0
      %p261 = por %p259, %p260
      %p262 = scmp.ne.s32.totalorder %s250, %s251
      %p263 = scmp.eq.s32.totalorder %s31, 1
      %p264 = por %p262, %p263
      %p266 = scmp.ne.s32.totalorder %s251, %s265
      %p267 = scmp.eq.s32.totalorder %s31, 0
      %p268 = por %p266, %p267
      %s270 = sadd.s32 %s269, 1
      %p273 = scmp.eq.s32.totalorder %s25, 1
      %p274 = scmp.ne.s32.totalorder %s269, %s271
      %p275 = scmp.eq.s32.totalorder %s25, 0
      %p276 = por %p274, %p275
      %p277 = scmp.ne.s32.totalorder %s269, %s271
      %p278 = scmp.eq.s32.totalorder %s30, 1
      %p279 = por %p277, %p278
      %p280 = scmp.ne.s32.totalorder %s271, %s272
      %p281 = scmp.eq.s32.totalorder %s30, 0
      %p282 = por %p280, %p281
      %p283 = scmp.ne.s32.totalorder %s271, %s272
      %p284 = scmp.eq.s32.totalorder %s31, 1
      %p285 = por %p283, %p284
      %p287 = scmp.ne.s32.totalorder %s272, %s286
      %p288 = scmp.eq.s32.totalorder %s31, 0
      %p289 = por %p287, %p288
      %s291 = sadd.s32 %s290, 1
      %p294 = scmp.eq.s32.totalorder %s25, 1
      %p295 = scmp.ne.s32.totalorder %s290, %s292
      %p296 = scmp.eq.s32.totalorder %s25, 0
      %p297 = por %p295, %p296
      %p298 = scmp.ne.s32.totalorder %s290, %s292
      %p299 = scmp.eq.s32.totalorder %s30, 1
      %p300 = por %p298, %p299
      %p301 = scmp.ne.s32.totalorder %s292, %s293
      %p302 = scmp.eq.s32.totalorder %s30, 0
      %p303 = por %p301, %p302
      %p304 = scmp.ne.s32.totalorder %s292, %s293
      %p305 = scmp.eq.s32.totalorder %s31, 1
      %p306 = por %p304, %p305
      %p308 = scmp.ne.s32.totalorder %s293, %s307
      %p309 = scmp.eq.s32.totalorder %s31, 0
      %p310 = por %p308, %p309
      %s312 = sadd.s32 %s311, 1
      %p315 = scmp.eq.s32.totalorder %s25, 1
      %p316 = scmp.ne.s32.totalorder %s311, %s313
      %p317 = scmp.eq.s32.totalorder %s25, 0
      %p318 = por %p316, %p317
      %p319 = scmp.ne.s32.totalorder %s311, %s313
      %p320 = scmp.eq.s32.totalorder %s30, 1
      %p321 = por %p319, %p320
      %p322 = scmp.ne.s32.totalorder %s313, %s314
      %p323 = scmp.eq.s32.totalorder %s30, 0
      %p324 = por %p322, %p323
      %p325 = scmp.ne.s32.totalorder %s313, %s314
      %p326 = scmp.eq.s32.totalorder %s31, 1
      %p327 = por %p325, %p326
      %p329 = scmp.ne.s32.totalorder %s314, %s328
      %p330 = scmp.eq.s32.totalorder %s31, 0
      %p331 = por %p329, %p330
      %s333 = sadd.s32 %s332, 1
      %p336 = scmp.eq.s32.totalorder %s25, 1
      %p337 = scmp.ne.s32.totalorder %s332, %s334
      %p338 = scmp.eq.s32.totalorder %s25, 0
      %p339 = por %p337, %p338
      %p340 = scmp.ne.s32.totalorder %s332, %s334
      %p341 = scmp.eq.s32.totalorder %s30, 1
      %p342 = por %p340, %p341
      %p343 = scmp.ne.s32.totalorder %s334, %s335
      %p344 = scmp.eq.s32.totalorder %s30, 0
      %p345 = por %p343, %p344
      %p346 = scmp.ne.s32.totalorder %s334, %s335
      %p347 = scmp.eq.s32.totalorder %s31, 1
      %p348 = por %p346, %p347
      %p350 = scmp.ne.s32.totalorder %s335, %s349
      %p351 = scmp.eq.s32.totalorder %s31, 0
      %p352 = por %p350, %p351
      %s354 = sadd.s32 %s353, 1
      %p357 = scmp.eq.s32.totalorder %s25, 1
      %p358 = scmp.ne.s32.totalorder %s353, %s355
      %p359 = scmp.eq.s32.totalorder %s25, 0
      %p360 = por %p358, %p359
      %p361 = scmp.ne.s32.totalorder %s353, %s355
      %p362 = scmp.eq.s32.totalorder %s30, 1
      %p363 = por %p361, %p362
      %p364 = scmp.ne.s32.totalorder %s355, %s356
      %p365 = scmp.eq.s32.totalorder %s30, 0
      %p366 = por %p364, %p365
      %p367 = scmp.ne.s32.totalorder %s355, %s356
      %p368 = scmp.eq.s32.totalorder %s31, 1
      %p369 = por %p367, %p368
      %p371 = scmp.ne.s32.totalorder %s356, %s370
      %p372 = scmp.eq.s32.totalorder %s31, 0
      %p373 = por %p371, %p372
      %s375 = sadd.s32 %s374, 1
      %p378 = scmp.eq.s32.totalorder %s25, 1
      %p379 = scmp.ne.s32.totalorder %s374, %s376
      %p380 = scmp.eq.s32.totalorder %s25, 0
      %p381 = por %p379, %p380
      %p382 = scmp.ne.s32.totalorder %s374, %s376
      %p383 = scmp.eq.s32.totalorder %s30, 1
      %p384 = por %p382, %p383
      %p385 = scmp.ne.s32.totalorder %s376, %s377
      %p386 = scmp.eq.s32.totalorder %s30, 0
      %p387 = por %p385, %p386
      %p388 = scmp.ne.s32.totalorder %s376, %s377
      %p389 = scmp.eq.s32.totalorder %s31, 1
      %p390 = por %p388, %p389
      %p392 = scmp.ne.s32.totalorder %s377, %s391
      %p393 = scmp.eq.s32.totalorder %s31, 0
      %p394 = por %p392, %p393
      %s396 = sadd.s32 %s395, 1
      %p399 = scmp.eq.s32.totalorder %s25, 1
      %p400 = scmp.ne.s32.totalorder %s395, %s397
      %p401 = scmp.eq.s32.totalorder %s25, 0
      %p402 = por %p400, %p401
      %p403 = scmp.ne.s32.totalorder %s395, %s397
      %p404 = scmp.eq.s32.totalorder %s30, 1
      %p405 = por %p403, %p404
      %p406 = scmp.ne.s32.totalorder %s397, %s398
      %p407 = scmp.eq.s32.totalorder %s30, 0
      %p408 = por %p406, %p407
      %p409 = scmp.ne.s32.totalorder %s397, %s398
      %p410 = scmp.eq.s32.totalorder %s31, 1
      %p411 = por %p409, %p410
      %p413 = scmp.ne.s32.totalorder %s398, %s412
      %p414 = scmp.eq.s32.totalorder %s31, 0
      %p415 = por %p413, %p414
      %s417 = sadd.s32 %s416, 1
      %p420 = scmp.eq.s32.totalorder %s25, 1
      %p421 = scmp.ne.s32.totalorder %s416, %s418
      %p422 = scmp.eq.s32.totalorder %s25, 0
      %p423 = por %p421, %p422
      %p424 = scmp.ne.s32.totalorder %s416, %s418
      %p425 = scmp.eq.s32.totalorder %s30, 1
      %p426 = por %p424, %p425
      %p427 = scmp.ne.s32.totalorder %s418, %s419
      %p428 = scmp.eq.s32.totalorder %s30, 0
      %p429 = por %p427, %p428
      %p430 = scmp.ne.s32.totalorder %s418, %s419
      %p431 = scmp.eq.s32.totalorder %s31, 1
      %p432 = por %p430, %p431
      %p434 = scmp.ne.s32.totalorder %s419, %s433
      %p435 = scmp.eq.s32.totalorder %s31, 0
      %p436 = por %p434, %p435
      %s437 = ssub.s32 %s25, %s32
      %p438 = scmp.eq.s32.totalorder %s437, 0
      %s440 = sadd.s32 %s439, 1
      %s441 = scalar_select %p438, %s439, %s440
      %p444 = pneg %p438
      %p445 = scmp.eq.s32.totalorder %s25, 1
      %p446 = por %p444, %p445
      %p447 = scmp.ne.s32.totalorder %s439, %s442
      %p448 = scmp.eq.s32.totalorder %s25, 0
      %p449 = por %p447, %p448
      %p450 = scmp.ne.s32.totalorder %s439, %s442
      %p451 = scmp.eq.s32.totalorder %s30, 1
      %p452 = por %p450, %p451
      %p453 = scmp.ne.s32.totalorder %s442, %s443
      %p454 = scmp.eq.s32.totalorder %s30, 0
      %p455 = por %p453, %p454
      %p456 = scmp.ne.s32.totalorder %s442, %s443
      %p457 = scmp.eq.s32.totalorder %s31, 1
      %p458 = por %p456, %p457
      %p460 = scmp.ne.s32.totalorder %s443, %s459
      %p461 = scmp.eq.s32.totalorder %s31, 0
      %p462 = por %p460, %p461
      %p463 = scmp.le.s32.totalorder 1, %s25
      %p464 = scmp.lt.s32.totalorder %s25, 3
      %p465 = pnand %p463, %p464
      %p466 = pneg %p465
      // Predicated region
      $region9: #{vit_forward.5} parent=5 // pred_check
        _
      $region10: #{vit_forward.5} parent=5 // pred_check_branch
        %468 = sbr.rel (%p465) target = $region12
      $region11: #{vit_forward.5} parent=5 // pred_region
        %s469 = ssub.s32 %s25, 1
        // Predicated region
        $region13: #{vit_forward.5} parent=11 // pred_check
          %p470 = pneg %p72
        $region14: #{vit_forward.5} parent=11 // pred_check_branch
          %472 = sbr.rel (%p470) target = $region16
        $region15: #{vit_forward.5} parent=11 // pred_region
          _
        $region16: #{vit_forward.5} parent=11 // pred_fallthru
          _
        // Predicated region
        $region17: #{vit_forward.5} parent=11 // pred_check
          %p473 = pneg %p93
        $region18: #{vit_forward.5} parent=11 // pred_check_branch
          %475 = sbr.rel (%p473) target = $region20
        $region19: #{vit_forward.5} parent=11 // pred_region
          _
        $region20: #{vit_forward.5} parent=11 // pred_fallthru
          _
        // Predicated region
        $region21: #{vit_forward.5} parent=11 // pred_check
          %p476 = pneg %p114
        $region22: #{vit_forward.5} parent=11 // pred_check_branch
          %478 = sbr.rel (%p476) target = $region24
        $region23: #{vit_forward.5} parent=11 // pred_region
          _
        $region24: #{vit_forward.5} parent=11 // pred_fallthru
          _
        // Predicated region
        $region25: #{vit_forward.5} parent=11 // pred_check
          %p479 = pneg %p135
        $region26: #{vit_forward.5} parent=11 // pred_check_branch
          %481 = sbr.rel (%p479) target = $region28
        $region27: #{vit_forward.5} parent=11 // pred_region
          _
        $region28: #{vit_forward.5} parent=11 // pred_fallthru
          _
        // Predicated region
        $region29: #{vit_forward.5} parent=11 // pred_check
          %p482 = pneg %p156
        $region30: #{vit_forward.5} parent=11 // pred_check_branch
          %484 = sbr.rel (%p482) target = $region32
        $region31: #{vit_forward.5} parent=11 // pred_region
          _
        $region32: #{vit_forward.5} parent=11 // pred_fallthru
          _
        // Predicated region
        $region33: #{vit_forward.5} parent=11 // pred_check
          %p485 = pneg %p177
        $region34: #{vit_forward.5} parent=11 // pred_check_branch
          %487 = sbr.rel (%p485) target = $region36
        $region35: #{vit_forward.5} parent=11 // pred_region
          _
        $region36: #{vit_forward.5} parent=11 // pred_fallthru
          _
        // Predicated region
        $region37: #{vit_forward.5} parent=11 // pred_check
          %p488 = pneg %p198
        $region38: #{vit_forward.5} parent=11 // pred_check_branch
          %490 = sbr.rel (%p488) target = $region40
        $region39: #{vit_forward.5} parent=11 // pred_region
          _
        $region40: #{vit_forward.5} parent=11 // pred_fallthru
          _
        // Predicated region
        $region41: #{vit_forward.5} parent=11 // pred_check
          %p491 = pneg %p219
        $region42: #{vit_forward.5} parent=11 // pred_check_branch
          %493 = sbr.rel (%p491) target = $region44
        $region43: #{vit_forward.5} parent=11 // pred_region
          _
        $region44: #{vit_forward.5} parent=11 // pred_fallthru
          _
        // Predicated region
        $region45: #{vit_forward.5} parent=11 // pred_check
          %p494 = pneg %p240
        $region46: #{vit_forward.5} parent=11 // pred_check_branch
          %496 = sbr.rel (%p494) target = $region48
        $region47: #{vit_forward.5} parent=11 // pred_region
          _
        $region48: #{vit_forward.5} parent=11 // pred_fallthru
          _
        // Predicated region
        $region49: #{vit_forward.5} parent=11 // pred_check
          %p497 = pneg %p261
        $region50: #{vit_forward.5} parent=11 // pred_check_branch
          %499 = sbr.rel (%p497) target = $region52
        $region51: #{vit_forward.5} parent=11 // pred_region
          _
        $region52: #{vit_forward.5} parent=11 // pred_fallthru
          _
        // Predicated region
        $region53: #{vit_forward.5} parent=11 // pred_check
          %p500 = pneg %p282
        $region54: #{vit_forward.5} parent=11 // pred_check_branch
          %502 = sbr.rel (%p500) target = $region56
        $region55: #{vit_forward.5} parent=11 // pred_region
          _
        $region56: #{vit_forward.5} parent=11 // pred_fallthru
          _
        // Predicated region
        $region57: #{vit_forward.5} parent=11 // pred_check
          %p503 = pneg %p303
        $region58: #{vit_forward.5} parent=11 // pred_check_branch
          %505 = sbr.rel (%p503) target = $region60
        $region59: #{vit_forward.5} parent=11 // pred_region
          _
        $region60: #{vit_forward.5} parent=11 // pred_fallthru
          _
        // Predicated region
        $region61: #{vit_forward.5} parent=11 // pred_check
          %p506 = pneg %p324
        $region62: #{vit_forward.5} parent=11 // pred_check_branch
          %508 = sbr.rel (%p506) target = $region64
        $region63: #{vit_forward.5} parent=11 // pred_region
          _
        $region64: #{vit_forward.5} parent=11 // pred_fallthru
          _
        // Predicated region
        $region65: #{vit_forward.5} parent=11 // pred_check
          %p509 = pneg %p345
        $region66: #{vit_forward.5} parent=11 // pred_check_branch
          %511 = sbr.rel (%p509) target = $region68
        $region67: #{vit_forward.5} parent=11 // pred_region
          _
        $region68: #{vit_forward.5} parent=11 // pred_fallthru
          _
        // Predicated region
        $region69: #{vit_forward.5} parent=11 // pred_check
          %p512 = pneg %p366
        $region70: #{vit_forward.5} parent=11 // pred_check_branch
          %514 = sbr.rel (%p512) target = $region72
        $region71: #{vit_forward.5} parent=11 // pred_region
          _
        $region72: #{vit_forward.5} parent=11 // pred_fallthru
          _
        // Predicated region
        $region73: #{vit_forward.5} parent=11 // pred_check
          %p515 = pneg %p387
        $region74: #{vit_forward.5} parent=11 // pred_check_branch
          %517 = sbr.rel (%p515) target = $region76
        $region75: #{vit_forward.5} parent=11 // pred_region
          _
        $region76: #{vit_forward.5} parent=11 // pred_fallthru
          _
        // Predicated region
        $region77: #{vit_forward.5} parent=11 // pred_check
          %p518 = pneg %p408
        $region78: #{vit_forward.5} parent=11 // pred_check_branch
          %520 = sbr.rel (%p518) target = $region80
        $region79: #{vit_forward.5} parent=11 // pred_region
          _
        $region80: #{vit_forward.5} parent=11 // pred_fallthru
          _
        // Predicated region
        $region81: #{vit_forward.5} parent=11 // pred_check
          %p521 = pneg %p429
        $region82: #{vit_forward.5} parent=11 // pred_check_branch
          %523 = sbr.rel (%p521) target = $region84
        $region83: #{vit_forward.5} parent=11 // pred_region
          _
        $region84: #{vit_forward.5} parent=11 // pred_fallthru
          _
      $region12: #{vit_forward.5} parent=5 // pred_fallthru
        _
      %p524 = scmp.lt.s32.totalorder %s25, 2
      // Predicated region
      $region85: #{vit_forward.5} parent=5 // pred_check
        %p525 = pneg %p524
      $region86: #{vit_forward.5} parent=5 // pred_check_branch
        %527 = sbr.rel (%p525) target = $region88
      $region87: #{vit_forward.5} parent=5 // pred_region
        // Predicated region
        $region89: #{vit_forward.5} parent=87 // pred_check
          %p528 = pneg %p45
        $region90: #{vit_forward.5} parent=87 // pred_check_branch
          %530 = sbr.rel (%p528) target = $region92
        $region91: #{vit_forward.5} parent=87 // pred_region
          %s531 = sand.u32 %s35, 1
          %s532 = sand.u32 %s35, 1
          %s533 = smul.addr %s532, 16
          %s534 = scalar_lea.vmem [#allocation2], %s533
          %s535 = smul.u32 2, %s25
          %s536 = smul.addr %s535, 4
          %s537 = scalar_lea.vmem %s0, %s536
          // Predicated region
          $region93: #{vit_forward.5} parent=91 // pred_check
            _
          $region94: #{vit_forward.5} parent=91 // pred_check_branch
            %539 = sbr.rel (0) target = $region96
          $region95: #{vit_forward.5} parent=91 // pred_region
            // Predicated region
            $region97: #{vit_forward.5} parent=95 // pred_check
              _
            $region98: #{vit_forward.5} parent=95 // pred_check_branch
              %541 = sbr.rel target = $region100
            $region99: #{vit_forward.5} parent=95 // pred_region
              // Predicated region
              $region112: #{vit_forward.5} parent=99 // pred_check
                _
              $region113: #{vit_forward.5} parent=99 // pred_check_branch
                %562 = sbr.rel (0) target = $region115
              $region114: #{vit_forward.5} parent=99 // pred_region
                loop: start=0, step=1, limit=1
                $region116: #{vit_forward.5} parent=114 // loop_pre_header
                  _
                $region117: #{vit_forward.5} parent=114 // loop_header
                  %s564 = sphi 0, %s568
                  %p565 = scmp.ge.s32.totalorder %s564, 1
                  %s569 = sphi %s537, %s537
                  %s570 = sphi %s534, %s534
                $region118: #{vit_forward.5} parent=114 // loop_header_branch
                  %567 = sbr.rel (%p565) target = $region122
                $region119: #{vit_forward.5} parent=114 // loop_body
                  _
                $region120: #{vit_forward.5} parent=114 // loop_footer
                  %s568 = sadd.s32 1, %s564
                $region121: #{vit_forward.5} parent=114 // loop_footer_branch
                  %563 = sbr.rel target = $region117
                $region122: #{vit_forward.5} parent=114 // loop_exit
                  _
                loop: start=0, step=1, limit=1
                $region123: #{vit_forward.5} parent=114 // loop_pre_header
                  _
                $region124: #{vit_forward.5} parent=114 // loop_header
                  %s573 = sphi 0, %s577
                  %p574 = scmp.ge.s32.totalorder %s573, 1
                  %s578 = sphi %s537, %s537
                  %s579 = sphi %s534, %s534
                $region125: #{vit_forward.5} parent=114 // loop_header_branch
                  %576 = sbr.rel (%p574) target = $region129
                $region126: #{vit_forward.5} parent=114 // loop_body
                  %v580 = vld [vmem:[%s578] sm:$0xf]
                  %581 = vst [vmem:[%s579] sm:$0xf] %v580
                  %v582 = vld [vmem:[%s578 + $0x4] sm:$0xf]
                  %583 = vst [vmem:[%s579 + $0x4] sm:$0xf] %v582
                  %v584 = vld [vmem:[%s578 + $0x10] sm:$0xf]
                  %585 = vst [vmem:[%s579 + $0x8] sm:$0xf] %v584
                  %v586 = vld [vmem:[%s578 + $0x14] sm:$0xf]
                  %587 = vst [vmem:[%s579 + $0xc] sm:$0xf] %v586
                $region127: #{vit_forward.5} parent=114 // loop_footer
                  %s577 = sadd.s32 1, %s573
                $region128: #{vit_forward.5} parent=114 // loop_footer_branch
                  %572 = sbr.rel target = $region124
                $region129: #{vit_forward.5} parent=114 // loop_exit
                  _
              $region115: #{vit_forward.5} parent=99 // pred_fallthru
                _
            $region100: #{vit_forward.5} parent=95 // pred_fallthru
              _
            // Predicated region
            $region101: #{vit_forward.5} parent=95 // pred_check
              _
            $region102: #{vit_forward.5} parent=95 // pred_check_branch
              %543 = sbr.rel (0) target = $region104
            $region103: #{vit_forward.5} parent=95 // pred_region
              loop: start=0, step=1, limit=1
              $region105: #{vit_forward.5} parent=103 // loop_pre_header
                _
              $region106: #{vit_forward.5} parent=103 // loop_header
                %s546 = sphi 0, %s550
                %p547 = scmp.ge.s32.totalorder %s546, 1
                %s551 = sphi %s537, %s537
                %s552 = sphi %s534, %s534
              $region107: #{vit_forward.5} parent=103 // loop_header_branch
                %549 = sbr.rel (%p547) target = $region111
              $region108: #{vit_forward.5} parent=103 // loop_body
                %v553 = vld [vmem:[%s551] sm:$0xf]
                %554 = vst [vmem:[%s552] sm:$0xf] %v553
                %v555 = vld [vmem:[%s551 + $0x4] sm:$0xf]
                %556 = vst [vmem:[%s552 + $0x4] sm:$0xf] %v555
                %v557 = vld [vmem:[%s551 + $0x10] sm:$0xf]
                %558 = vst [vmem:[%s552 + $0x8] sm:$0xf] %v557
                %v559 = vld [vmem:[%s551 + $0x14] sm:$0xf]
                %560 = vst [vmem:[%s552 + $0xc] sm:$0xf] %v559
              $region109: #{vit_forward.5} parent=103 // loop_footer
                %s550 = sadd.s32 1, %s546
              $region110: #{vit_forward.5} parent=103 // loop_footer_branch
                %545 = sbr.rel target = $region106
              $region111: #{vit_forward.5} parent=103 // loop_exit
                _
            $region104: #{vit_forward.5} parent=95 // pred_fallthru
              _
          $region96: #{vit_forward.5} parent=91 // pred_fallthru
            _
          %588 = vnop
        $region92: #{vit_forward.5} parent=87 // pred_fallthru
          _
      $region88: #{vit_forward.5} parent=5 // pred_fallthru
        _
      %p589 = scmp.le.s32.totalorder 1, %s25
      %p590 = scmp.lt.s32.totalorder %s25, 3
      %p591 = pnand %p589, %p590
      %p592 = pneg %p591
      // Predicated region
      $region130: #{vit_forward.5} parent=5 // pred_check
        _
      $region131: #{vit_forward.5} parent=5 // pred_check_branch
        %594 = sbr.rel (%p591) target = $region133
      $region132: #{vit_forward.5} parent=5 // pred_region
        %s595 = ssub.s32 %s25, 1
        %s596 = sand.u32 %s38, 1
        %s597 = sand.u32 %s38, 1
        %s598 = smul.addr %s597, 16
        %s599 = scalar_lea.vmem [#allocation2], %s598
        // Predicated region
        $region134: #{vit_forward.5} parent=132 // pred_check
          %p600 = pneg %p51
        $region135: #{vit_forward.5} parent=132 // pred_check_branch
          %602 = sbr.rel (%p600) target = $region137
        $region136: #{vit_forward.5} parent=132 // pred_region
          _
        $region137: #{vit_forward.5} parent=132 // pred_fallthru
          _
        %s603 = sand.u32 %s38, 1
        %s604 = sand.u32 %s38, 1
        %s605 = smul.addr %s604, 16
        %s606 = scalar_lea.vmem [#allocation2], %s605
        %p607 = pneg %p51
        %p608 = pneg %p48
        %p609 = pneg %p72
        %p610 = pneg %p69
        %p611 = pneg %p93
        %p612 = pneg %p90
        %p613 = pneg %p114
        %p614 = pneg %p111
        %p615 = pneg %p135
        %p616 = pneg %p132
        %p617 = pneg %p156
        %p618 = pneg %p153
        %p619 = pneg %p177
        %p620 = pneg %p174
        %p621 = pneg %p198
        %p622 = pneg %p195
        %p623 = pneg %p219
        %p624 = pneg %p216
        %p625 = pneg %p240
        %p626 = pneg %p237
        %p627 = pneg %p261
        %p628 = pneg %p258
        %p629 = pneg %p282
        %p630 = pneg %p279
        %p631 = pneg %p303
        %p632 = pneg %p300
        %p633 = pneg %p324
        %p634 = pneg %p321
        %p635 = pneg %p345
        %p636 = pneg %p342
        %p637 = pneg %p366
        %p638 = pneg %p363
        %p639 = pneg %p387
        %p640 = pneg %p384
        %p641 = pneg %p408
        %p642 = pneg %p405
        %p643 = pneg %p429
        %p644 = pneg %p426
        %p645 = pneg %p455
        %p646 = pneg %p452
        %s647 = sand.u32 %s442, 1
        %s648 = sand.u32 %s442, 1
        %s649 = smul.addr %s648, 16
        %s650 = scalar_lea.vmem [#allocation3], %s649
        %s651 = smul.u32 2, %s30
        %s652 = smul.u32 2, %s30
        %v654 = vld [vmem:[%s599] sm:$0xf]
        %v655 = vld [vmem:[%s599 + $0x4] sm:$0xf]
        %v656 = vld [vmem:[%s599 + $0x8] sm:$0xf]
        %v657 = vld [vmem:[%s599 + $0xc] sm:$0xf]
        %v658 = vld [vmem:[%s1] sm:$0xf]
        %v659 = vld [vmem:[%s1 + $0x4] sm:$0xf]
        %v660 = vld [vmem:[%s1 + $0x8] sm:$0xf]
        %v661 = vld [vmem:[%s1 + $0xc] sm:$0xf]
        %v662 = vld [vmem:[%s4] sm:$0x1]
        %v664 = vlaneseq
        %v665 = vshrl.u32 %v664, 7
        %v666 = vsub.s32 0, %v665
        %v667 = vrot.slane %v662, %v666
        %v673 = vunpack.c.l.b16 %v654
        %v674 = vunpack.c.l.b16 %v655
        %v675 = vunpack.c.l.b16 %v656
        %v676 = vunpack.c.l.b16 %v657
        %v677 = vpack.c.b16 %v674, %v673
        %v678 = vpack.c.b16 %v676, %v675
        %v683 = vunpack.c.l.b16 %v658
        %v684 = vunpack.c.l.b16 %v659
        %v685 = vunpack.c.l.b16 %v660
        %v686 = vunpack.c.l.b16 %v661
        %v687 = vpack.c.b16 %v684, %v683
        %v688 = vpack.c.b16 %v686, %v685
        %vm691 = vcmask 261120
        %v693 = vsel %vm691, %v677, 0
        %v696 = vsel %vm691, %v678, 0
        %698 = vmatprep.subr.bf16.mxu0 0
        %699 = vmatpush1.bf16.msra.mxu0 %v687
        %700 = vmatprep.subr.bf16.mxu0 0
        %701 = vmatpush1.bf16.msra.mxu0 %v688
        %702 = vmatprep.subr.bf16.mxu0 0
        %703 = vmatpush1.bf16.msra.mxu0 0
        %704 = vmatprep.subr.bf16.mxu0 0
        %705 = vmatpush1.bf16.msra.mxu0 0
        %706 = vmatprep.subr.bf16.mxu0 0
        %707 = vmatpush1.bf16.msra.mxu0 0
        %708 = vmatprep.subr.bf16.mxu0 0
        %709 = vmatpush1.bf16.msra.mxu0 0
        %710 = vmatprep.subr.bf16.mxu0 0
        %711 = vmatpush1.bf16.msra.mxu0 0
        %712 = vmatprep.subr.bf16.mxu0 0
        %713 = vmatpush1.bf16.msra.mxu0 0
        %714 = vmatprep.subr.bf16.mxu0 0
        %715 = vmatpush1.bf16.msra.mxu0 0
        %716 = vmatprep.subr.bf16.mxu0 0
        %717 = vmatpush1.bf16.msra.mxu0 0
        %718 = vmatprep.subr.bf16.mxu0 0
        %719 = vmatpush1.bf16.msra.mxu0 0
        %720 = vmatprep.subr.bf16.mxu0 0
        %721 = vmatpush1.bf16.msra.mxu0 0
        %722 = vmatprep.subr.bf16.mxu0 0
        %723 = vmatpush1.bf16.msra.mxu0 0
        %724 = vmatprep.subr.bf16.mxu0 0
        %725 = vmatpush1.bf16.msra.mxu0 0
        %726 = vmatprep.subr.bf16.mxu0 0
        %727 = vmatpush1.bf16.msra.mxu0 0
        %728 = vmatprep.subr.bf16.mxu0 0
        %729 = vmatpush1.bf16.msra.mxu0 0
        %730 = vmatprep.mubr.bf16.mxu0 0
        %731 = vmatmul.mubr.bf16.gmra.mrb[0].mxu0 %v693
        %v732 = vpop.f32.mrb[0].mxu0
        %v733 = vadd.f32 %v667, %v732
        %v734 = vpop.f32.mrb[0].mxu0
        %v735 = vpop.f32.mrb[0].mxu0
        %v736 = vadd.f32 %v667, %v735
        %v737 = vpop.f32.mrb[0].mxu0
        %738 = vmatprep.mubr.bf16.mxu0 0
        %739 = vmatmul.mubr.bf16.gmra.mrb[0].mxu0 %v696
        %v740 = vpop.f32.mrb[0].mxu0
        %v741 = vadd.f32 %v667, %v740
        %v742 = vpop.f32.mrb[0].mxu0
        %v743 = vpop.f32.mrb[0].mxu0
        %v744 = vadd.f32 %v667, %v743
        %v745 = vpop.f32.mrb[0].mxu0
        %746 = vdwg.mxu0
        %v747 = vmul.f32 %v733, 0.35355338
        %v748 = vmul.f32 %v736, 0.35355338
        %v749 = vmul.f32 %v741, 0.35355338
        %v750 = vmul.f32 %v744, 0.35355338
        %v751 = vld [vmem:[%s2] sm:$0xf]
        %v752 = vld [vmem:[%s2 + $0x4] sm:$0xf]
        %v753 = vld [vmem:[%s2 + $0x8] sm:$0xf]
        %v754 = vld [vmem:[%s2 + $0xc] sm:$0xf]
        %v755 = vld [vmem:[%s5] sm:$0x1]
        %v757 = vlaneseq
        %v758 = vshrl.u32 %v757, 7
        %v759 = vsub.s32 0, %v758
        %v760 = vrot.slane %v755, %v759
        %v766 = vunpack.c.l.b16 %v751
        %v767 = vunpack.c.l.b16 %v752
        %v768 = vunpack.c.l.b16 %v753
        %v769 = vunpack.c.l.b16 %v754
        %v770 = vpack.c.b16 %v767, %v766
        %v771 = vpack.c.b16 %v769, %v768
        %774 = vmatprep.subr.bf16.mxu0 0
        %775 = vmatpush1.bf16.msra.mxu0 %v770
        %776 = vmatprep.subr.bf16.mxu0 0
        %777 = vmatpush1.bf16.msra.mxu0 %v771
        %778 = vmatprep.subr.bf16.mxu0 0
        %779 = vmatpush1.bf16.msra.mxu0 0
        %780 = vmatprep.subr.bf16.mxu0 0
        %781 = vmatpush1.bf16.msra.mxu0 0
        %782 = vmatprep.subr.bf16.mxu0 0
        %783 = vmatpush1.bf16.msra.mxu0 0
        %784 = vmatprep.subr.bf16.mxu0 0
        %785 = vmatpush1.bf16.msra.mxu0 0
        %786 = vmatprep.subr.bf16.mxu0 0
        %787 = vmatpush1.bf16.msra.mxu0 0
        %788 = vmatprep.subr.bf16.mxu0 0
        %789 = vmatpush1.bf16.msra.mxu0 0
        %790 = vmatprep.subr.bf16.mxu0 0
        %791 = vmatpush1.bf16.msra.mxu0 0
        %792 = vmatprep.subr.bf16.mxu0 0
        %793 = vmatpush1.bf16.msra.mxu0 0
        %794 = vmatprep.subr.bf16.mxu0 0
        %795 = vmatpush1.bf16.msra.mxu0 0
        %796 = vmatprep.subr.bf16.mxu0 0
        %797 = vmatpush1.bf16.msra.mxu0 0
        %798 = vmatprep.subr.bf16.mxu0 0
        %799 = vmatpush1.bf16.msra.mxu0 0
        %800 = vmatprep.subr.bf16.mxu0 0
        %801 = vmatpush1.bf16.msra.mxu0 0
        %802 = vmatprep.subr.bf16.mxu0 0
        %803 = vmatpush1.bf16.msra.mxu0 0
        %804 = vmatprep.subr.bf16.mxu0 0
        %805 = vmatpush1.bf16.msra.mxu0 0
        %806 = vmatprep.mubr.bf16.mxu0 0
        %807 = vmatmul.mubr.bf16.gmra.mrb[0].mxu0 %v693
        %v808 = vpop.f32.mrb[0].mxu0
        %v809 = vadd.f32 %v760, %v808
        %v810 = vpop.f32.mrb[0].mxu0
        %v811 = vpop.f32.mrb[0].mxu0
        %v812 = vadd.f32 %v760, %v811
        %v813 = vpop.f32.mrb[0].mxu0
        %814 = vmatprep.mubr.bf16.mxu0 0
        %815 = vmatmul.mubr.bf16.gmra.mrb[0].mxu0 %v696
        %v816 = vpop.f32.mrb[0].mxu0
        %v817 = vadd.f32 %v760, %v816
        %v818 = vpop.f32.mrb[0].mxu0
        %v819 = vpop.f32.mrb[0].mxu0
        %v820 = vadd.f32 %v760, %v819
        %v821 = vpop.f32.mrb[0].mxu0
        %822 = vdwg.mxu0
        %v823 = vld [vmem:[%s3] sm:$0xf]
        %v824 = vld [vmem:[%s3 + $0x4] sm:$0xf]
        %v825 = vld [vmem:[%s3 + $0x8] sm:$0xf]
        %v826 = vld [vmem:[%s3 + $0xc] sm:$0xf]
        %v827 = vld [vmem:[%s6] sm:$0x1]
        %v829 = vlaneseq
        %v830 = vshrl.u32 %v829, 7
        %v831 = vsub.s32 0, %v830
        %v832 = vrot.slane %v827, %v831
        %v838 = vunpack.c.l.b16 %v823
        %v839 = vunpack.c.l.b16 %v824
        %v840 = vunpack.c.l.b16 %v825
        %v841 = vunpack.c.l.b16 %v826
        %v842 = vpack.c.b16 %v839, %v838
        %v843 = vpack.c.b16 %v841, %v840
        %846 = vmatprep.subr.bf16.mxu0 0
        %847 = vmatpush1.bf16.msra.mxu0 %v842
        %848 = vmatprep.subr.bf16.mxu0 0
        %849 = vmatpush1.bf16.msra.mxu0 %v843
        %850 = vmatprep.subr.bf16.mxu0 0
        %851 = vmatpush1.bf16.msra.mxu0 0
        %852 = vmatprep.subr.bf16.mxu0 0
        %853 = vmatpush1.bf16.msra.mxu0 0
        %854 = vmatprep.subr.bf16.mxu0 0
        %855 = vmatpush1.bf16.msra.mxu0 0
        %856 = vmatprep.subr.bf16.mxu0 0
        %857 = vmatpush1.bf16.msra.mxu0 0
        %858 = vmatprep.subr.bf16.mxu0 0
        %859 = vmatpush1.bf16.msra.mxu0 0
        %860 = vmatprep.subr.bf16.mxu0 0
        %861 = vmatpush1.bf16.msra.mxu0 0
        %862 = vmatprep.subr.bf16.mxu0 0
        %863 = vmatpush1.bf16.msra.mxu0 0
        %864 = vmatprep.subr.bf16.mxu0 0
        %865 = vmatpush1.bf16.msra.mxu0 0
        %866 = vmatprep.subr.bf16.mxu0 0
        %867 = vmatpush1.bf16.msra.mxu0 0
        %868 = vmatprep.subr.bf16.mxu0 0
        %869 = vmatpush1.bf16.msra.mxu0 0
        %870 = vmatprep.subr.bf16.mxu0 0
        %871 = vmatpush1.bf16.msra.mxu0 0
        %872 = vmatprep.subr.bf16.mxu0 0
        %873 = vmatpush1.bf16.msra.mxu0 0
        %874 = vmatprep.subr.bf16.mxu0 0
        %875 = vmatpush1.bf16.msra.mxu0 0
        %876 = vmatprep.subr.bf16.mxu0 0
        %877 = vmatpush1.bf16.msra.mxu0 0
        %878 = vmatprep.mubr.bf16.mxu0 0
        %879 = vmatmul.mubr.bf16.gmra.mrb[0].mxu0 %v693
        %v880 = vpop.f32.mrb[0].mxu0
        %v881 = vadd.f32 %v832, %v880
        %v882 = vpop.f32.mrb[0].mxu0
        %v883 = vpop.f32.mrb[0].mxu0
        %v884 = vadd.f32 %v832, %v883
        %v885 = vpop.f32.mrb[0].mxu0
        %886 = vmatprep.mubr.bf16.mxu0 0
        %887 = vmatmul.mubr.bf16.gmra.mrb[0].mxu0 %v696
        %v888 = vpop.f32.mrb[0].mxu0
        %v889 = vadd.f32 %v832, %v888
        %v890 = vpop.f32.mrb[0].mxu0
        %v891 = vpop.f32.mrb[0].mxu0
        %v892 = vadd.f32 %v832, %v891
        %v893 = vpop.f32.mrb[0].mxu0
        %894 = vdwg.mxu0
        %v895 = vmul.f32 %v747, %v809
        %v896 = vmul.f32 %v748, %v812
        %v897 = vmul.f32 %v747, %v817
        %v898 = vmul.f32 %v748, %v820
        %v899 = vmul.f32 %v749, %v809
        %v900 = vmul.f32 %v750, %v812
        %v901 = vmul.f32 %v749, %v817
        %v902 = vmul.f32 %v750, %v820
        %v903 = vpack.c.bf16 %v896, %v895
        %v904 = vpack.c.bf16 %v898, %v897
        %v905 = vpack.c.bf16 %v900, %v899
        %v906 = vpack.c.bf16 %v902, %v901
        %v907 = vld [vmem:[%s17] sm:$0xf]
        %v908 = vld [vmem:[%s17 + $0x4] sm:$0xf]
        %v909 = vld [vmem:[%s17 + $0x8] sm:$0xf]
        %v910 = vld [vmem:[%s17 + $0xc] sm:$0xf]
        %v915 = vunpack.c.l.b16 %v907
        %v916 = vunpack.c.l.b16 %v908
        %v917 = vunpack.c.l.b16 %v909
        %v918 = vunpack.c.l.b16 %v910
        %v919 = vpack.c.b16 %v916, %v915
        %v920 = vpack.c.b16 %v918, %v917
        %v924 = vsel %vm691, %v903, 0
        %v927 = vsel %vm691, %v904, 0
        %v930 = vsel %vm691, %v905, 0
        %v933 = vsel %vm691, %v906, 0
        %935 = vmatprep.subr.bf16.mxu0 0
        %936 = vmatpush1.bf16.msra.mxu0 %v919
        %937 = vmatprep.subr.bf16.mxu0 0
        %938 = vmatpush1.bf16.msra.mxu0 %v920
        %939 = vmatprep.subr.bf16.mxu0 0
        %940 = vmatpush1.bf16.msra.mxu0 0
        %941 = vmatprep.subr.bf16.mxu0 0
        %942 = vmatpush1.bf16.msra.mxu0 0
        %943 = vmatprep.subr.bf16.mxu0 0
        %944 = vmatpush1.bf16.msra.mxu0 0
        %945 = vmatprep.subr.bf16.mxu0 0
        %946 = vmatpush1.bf16.msra.mxu0 0
        %947 = vmatprep.subr.bf16.mxu0 0
        %948 = vmatpush1.bf16.msra.mxu0 0
        %949 = vmatprep.subr.bf16.mxu0 0
        %950 = vmatpush1.bf16.msra.mxu0 0
        %951 = vmatprep.subr.bf16.mxu0 0
        %952 = vmatpush1.bf16.msra.mxu0 0
        %953 = vmatprep.subr.bf16.mxu0 0
        %954 = vmatpush1.bf16.msra.mxu0 0
        %955 = vmatprep.subr.bf16.mxu0 0
        %956 = vmatpush1.bf16.msra.mxu0 0
        %957 = vmatprep.subr.bf16.mxu0 0
        %958 = vmatpush1.bf16.msra.mxu0 0
        %959 = vmatprep.subr.bf16.mxu0 0
        %960 = vmatpush1.bf16.msra.mxu0 0
        %961 = vmatprep.subr.bf16.mxu0 0
        %962 = vmatpush1.bf16.msra.mxu0 0
        %963 = vmatprep.subr.bf16.mxu0 0
        %964 = vmatpush1.bf16.msra.mxu0 0
        %965 = vmatprep.subr.bf16.mxu0 0
        %966 = vmatpush1.bf16.msra.mxu0 0
        %967 = vmatprep.mubr.bf16.mxu0 0
        %968 = vmatmul.mubr.bf16.gmra.mrb[0].mxu0 %v924
        %v969 = vpop.f32.mrb[0].mxu0
        %v970 = vadd.f32 0.0, %v969
        %v971 = vpop.f32.mrb[0].mxu0
        %v972 = vpop.f32.mrb[0].mxu0
        %v973 = vadd.f32 0.0, %v972
        %v974 = vpop.f32.mrb[0].mxu0
        %975 = vmatprep.mubr.bf16.mxu0 0
        %976 = vmatmul.mubr.bf16.gmra.mrb[0].mxu0 %v927
        %v977 = vpop.f32.mrb[0].mxu0
        %v978 = vadd.f32 0.0, %v977
        %v979 = vpop.f32.mrb[0].mxu0
        %v980 = vpop.f32.mrb[0].mxu0
        %v981 = vadd.f32 0.0, %v980
        %v982 = vpop.f32.mrb[0].mxu0
        %983 = vmatprep.mubr.bf16.mxu0 0
        %984 = vmatmul.mubr.bf16.gmra.mrb[0].mxu0 %v930
        %v985 = vpop.f32.mrb[0].mxu0
        %v986 = vadd.f32 0.0, %v985
        %v987 = vpop.f32.mrb[0].mxu0
        %v988 = vpop.f32.mrb[0].mxu0
        %v989 = vadd.f32 0.0, %v988
        %v990 = vpop.f32.mrb[0].mxu0
        %991 = vmatprep.mubr.bf16.mxu0 0
        %992 = vmatmul.mubr.bf16.gmra.mrb[0].mxu0 %v933
        %v993 = vpop.f32.mrb[0].mxu0
        %v994 = vadd.f32 0.0, %v993
        %v995 = vpop.f32.mrb[0].mxu0
        %v996 = vpop.f32.mrb[0].mxu0
        %v997 = vadd.f32 0.0, %v996
        %v998 = vpop.f32.mrb[0].mxu0
        %999 = vdwg.mxu0
        %v1000 = vmax.f32 %v970, %v978
        %v1001 = vmax.f32 %v973, %v981
        %v1002 = vsub.f32 %v970, %v1000
        %v1003 = vsub.f32 %v973, %v1001
        %v1004 = vmul.f32 %v1002, 1.442695
        %v1005 = vpow.pop %v1004
        %v1006 = vmul.f32 %v1003, 1.442695
        %v1007 = vpow.pop %v1006
        %v1008 = vsub.f32 %v978, %v1000
        %v1009 = vsub.f32 %v981, %v1001
        %v1010 = vmul.f32 %v1008, 1.442695
        %v1011 = vpow.pop %v1010
        %v1012 = vmul.f32 %v1009, 1.442695
        %v1013 = vpow.pop %v1012
        %v1014 = vadd.f32 %v1005, %v1011
        %v1015 = vadd.f32 %v1007, %v1013
        %v1016 = vrcp.pop %v1014
        %v1017 = vrcp.pop %v1015
        %v1018 = vmul.f32 %v1005, %v1016
        %v1019 = vmul.f32 %v1007, %v1017
        %v1020 = vmul.f32 %v1011, %v1016
        %v1021 = vmul.f32 %v1013, %v1017
        %v1022 = vmax.f32 %v986, %v994
        %v1023 = vmax.f32 %v989, %v997
        %v1024 = vsub.f32 %v986, %v1022
        %v1025 = vsub.f32 %v989, %v1023
        %v1026 = vmul.f32 %v1024, 1.442695
        %v1027 = vpow.pop %v1026
        %v1028 = vmul.f32 %v1025, 1.442695
        %v1029 = vpow.pop %v1028
        %v1030 = vsub.f32 %v994, %v1022
        %v1031 = vsub.f32 %v997, %v1023
        %v1032 = vmul.f32 %v1030, 1.442695
        %v1033 = vpow.pop %v1032
        %v1034 = vmul.f32 %v1031, 1.442695
        %v1035 = vpow.pop %v1034
        %v1036 = vadd.f32 %v1027, %v1033
        %v1037 = vadd.f32 %v1029, %v1035
        %v1038 = vrcp.pop %v1036
        %v1039 = vrcp.pop %v1037
        %v1040 = vmul.f32 %v1027, %v1038
        %v1041 = vmul.f32 %v1029, %v1039
        %v1042 = vmul.f32 %v1033, %v1038
        %v1043 = vmul.f32 %v1035, %v1039
        %v1044 = vpack.c.bf16 %v1019, %v1018
        %v1045 = vpack.c.bf16 %v1021, %v1020
        %v1046 = vpack.c.bf16 %v1041, %v1040
        %v1047 = vpack.c.bf16 %v1043, %v1042
        %v1048 = vld [vmem:[%s18] sm:$0x3]
        %vm1049 = vcmask 31744
        %v1051 = vsel %vm1049, %v1044, 0
        %v1054 = vsel %vm1049, %v1045, 0
        %v1057 = vsel %vm1049, %v1046, 0
        %v1060 = vsel %vm1049, %v1047, 0
        %vm1062 = vcmask 1041408
        %v1064 = vsel %vm1062, %v1048, 0
        %1066 = vmatprep.subr.bf16.mxu0 0
        %1067 = vmatpush1.bf16.msra.mxu0 %v1064
        %1068 = vmatprep.subr.bf16.mxu0 0
        %1069 = vmatpush1.bf16.msra.mxu0 0
        %1070 = vmatprep.subr.bf16.mxu0 0
        %1071 = vmatpush1.bf16.msra.mxu0 0
        %1072 = vmatprep.subr.bf16.mxu0 0
        %1073 = vmatpush1.bf16.msra.mxu0 0
        %1074 = vmatprep.subr.bf16.mxu0 0
        %1075 = vmatpush1.bf16.msra.mxu0 0
        %1076 = vmatprep.subr.bf16.mxu0 0
        %1077 = vmatpush1.bf16.msra.mxu0 0
        %1078 = vmatprep.subr.bf16.mxu0 0
        %1079 = vmatpush1.bf16.msra.mxu0 0
        %1080 = vmatprep.subr.bf16.mxu0 0
        %1081 = vmatpush1.bf16.msra.mxu0 0
        %1082 = vmatprep.subr.bf16.mxu0 0
        %1083 = vmatpush1.bf16.msra.mxu0 0
        %1084 = vmatprep.subr.bf16.mxu0 0
        %1085 = vmatpush1.bf16.msra.mxu0 0
        %1086 = vmatprep.subr.bf16.mxu0 0
        %1087 = vmatpush1.bf16.msra.mxu0 0
        %1088 = vmatprep.subr.bf16.mxu0 0
        %1089 = vmatpush1.bf16.msra.mxu0 0
        %1090 = vmatprep.subr.bf16.mxu0 0
        %1091 = vmatpush1.bf16.msra.mxu0 0
        %1092 = vmatprep.subr.bf16.mxu0 0
        %1093 = vmatpush1.bf16.msra.mxu0 0
        %1094 = vmatprep.subr.bf16.mxu0 0
        %1095 = vmatpush1.bf16.msra.mxu0 0
        %1096 = vmatprep.subr.bf16.mxu0 0
        %1097 = vmatpush1.bf16.msra.mxu0 0
        %1098 = vmatprep.mubr.bf16.mxu0 0
        %1099 = vmatmul.mubr.bf16.gmra.mrb[0].mxu0 %v1051
        %v1100 = vpop.f32.mrb[0].mxu0
        %v1101 = vadd.f32 0.0, %v1100
        %v1102 = vpop.f32.mrb[0].mxu0
        %v1103 = vpop.f32.mrb[0].mxu0
        %v1104 = vadd.f32 0.0, %v1103
        %v1105 = vpop.f32.mrb[0].mxu0
        %1106 = vmatprep.mubr.bf16.mxu0 0
        %1107 = vmatmul.mubr.bf16.gmra.mrb[0].mxu0 %v1054
        %v1108 = vpop.f32.mrb[0].mxu0
        %v1109 = vadd.f32 0.0, %v1108
        %v1110 = vpop.f32.mrb[0].mxu0
        %v1111 = vpop.f32.mrb[0].mxu0
        %v1112 = vadd.f32 0.0, %v1111
        %v1113 = vpop.f32.mrb[0].mxu0
        %1114 = vmatprep.mubr.bf16.mxu0 0
        %1115 = vmatmul.mubr.bf16.gmra.mrb[0].mxu0 %v1057
        %v1116 = vpop.f32.mrb[0].mxu0
        %v1117 = vadd.f32 0.0, %v1116
        %v1118 = vpop.f32.mrb[0].mxu0
        %v1119 = vpop.f32.mrb[0].mxu0
        %v1120 = vadd.f32 0.0, %v1119
        %v1121 = vpop.f32.mrb[0].mxu0
        %1122 = vmatprep.mubr.bf16.mxu0 0
        %1123 = vmatmul.mubr.bf16.gmra.mrb[0].mxu0 %v1060
        %v1124 = vpop.f32.mrb[0].mxu0
        %v1125 = vadd.f32 0.0, %v1124
        %v1126 = vpop.f32.mrb[0].mxu0
        %v1127 = vpop.f32.mrb[0].mxu0
        %v1128 = vadd.f32 0.0, %v1127
        %v1129 = vpop.f32.mrb[0].mxu0
        %1130 = vdwg.mxu0
        %v1131 = vmul.f32 %v1101, %v881
        %v1132 = vmul.f32 %v1104, %v884
        %v1133 = vmul.f32 %v1109, %v889
        %v1134 = vmul.f32 %v1112, %v892
        %v1135 = vadd.f32 %v1131, %v1133
        %v1136 = vadd.f32 %v1132, %v1134
        %v1137 = vmul.f32 %v1117, %v881
        %v1138 = vmul.f32 %v1120, %v884
        %v1139 = vmul.f32 %v1125, %v889
        %v1140 = vmul.f32 %v1128, %v892
        %v1141 = vadd.f32 %v1137, %v1139
        %v1142 = vadd.f32 %v1138, %v1140
        %v1143 = vpack.c.bf16 %v1136, %v1135
        %v1144 = vpack.c.bf16 %v1142, %v1141
        %v1145 = vld [vmem:[%s7] sm:$0xf]
        %v1146 = vld [vmem:[%s7 + $0x4] sm:$0xf]
        %v1147 = vld [vmem:[%s7 + $0x8] sm:$0xf]
        %v1148 = vld [vmem:[%s7 + $0xc] sm:$0xf]
        %v1149 = vld [vmem:[%s8] sm:$0x1]
        %v1151 = vlaneseq
        %v1152 = vshrl.u32 %v1151, 7
        %v1153 = vsub.s32 0, %v1152
        %v1154 = vrot.slane %v1149, %v1153
        %v1160 = vunpack.c.l.b16 %v1145
        %v1161 = vunpack.c.l.b16 %v1146
        %v1162 = vunpack.c.l.b16 %v1147
        %v1163 = vunpack.c.l.b16 %v1148
        %v1164 = vpack.c.b16 %v1161, %v1160
        %v1165 = vpack.c.b16 %v1163, %v1162
        %v1169 = vsel %vm691, %v1143, 0
        %v1172 = vsel %vm691, %v1144, 0
        %1174 = vmatprep.subr.bf16.mxu0 0
        %1175 = vmatpush1.bf16.msra.mxu0 %v1164
        %1176 = vmatprep.subr.bf16.mxu0 0
        %1177 = vmatpush1.bf16.msra.mxu0 %v1165
        %1178 = vmatprep.subr.bf16.mxu0 0
        %1179 = vmatpush1.bf16.msra.mxu0 0
        %1180 = vmatprep.subr.bf16.mxu0 0
        %1181 = vmatpush1.bf16.msra.mxu0 0
        %1182 = vmatprep.subr.bf16.mxu0 0
        %1183 = vmatpush1.bf16.msra.mxu0 0
        %1184 = vmatprep.subr.bf16.mxu0 0
        %1185 = vmatpush1.bf16.msra.mxu0 0
        %1186 = vmatprep.subr.bf16.mxu0 0
        %1187 = vmatpush1.bf16.msra.mxu0 0
        %1188 = vmatprep.subr.bf16.mxu0 0
        %1189 = vmatpush1.bf16.msra.mxu0 0
        %1190 = vmatprep.subr.bf16.mxu0 0
        %1191 = vmatpush1.bf16.msra.mxu0 0
        %1192 = vmatprep.subr.bf16.mxu0 0
        %1193 = vmatpush1.bf16.msra.mxu0 0
        %1194 = vmatprep.subr.bf16.mxu0 0
        %1195 = vmatpush1.bf16.msra.mxu0 0
        %1196 = vmatprep.subr.bf16.mxu0 0
        %1197 = vmatpush1.bf16.msra.mxu0 0
        %1198 = vmatprep.subr.bf16.mxu0 0
        %1199 = vmatpush1.bf16.msra.mxu0 0
        %1200 = vmatprep.subr.bf16.mxu0 0
        %1201 = vmatpush1.bf16.msra.mxu0 0
        %1202 = vmatprep.subr.bf16.mxu0 0
        %1203 = vmatpush1.bf16.msra.mxu0 0
        %1204 = vmatprep.subr.bf16.mxu0 0
        %1205 = vmatpush1.bf16.msra.mxu0 0
        %1206 = vmatprep.mubr.bf16.mxu0 0
        %1207 = vmatmul.mubr.bf16.gmra.mrb[0].mxu0 %v1169
        %v1208 = vpop.f32.mrb[0].mxu0
        %v1209 = vadd.f32 %v1154, %v1208
        %v1210 = vpop.f32.mrb[0].mxu0
        %v1211 = vpop.f32.mrb[0].mxu0
        %v1212 = vadd.f32 %v1154, %v1211
        %v1213 = vpop.f32.mrb[0].mxu0
        %1214 = vmatprep.mubr.bf16.mxu0 0
        %1215 = vmatmul.mubr.bf16.gmra.mrb[0].mxu0 %v1172
        %v1216 = vpop.f32.mrb[0].mxu0
        %v1217 = vadd.f32 %v1154, %v1216
        %v1218 = vpop.f32.mrb[0].mxu0
        %v1219 = vpop.f32.mrb[0].mxu0
        %v1220 = vadd.f32 %v1154, %v1219
        %v1221 = vpop.f32.mrb[0].mxu0
        %1222 = vdwg.mxu0
        %v1223 = vunpack.c.l.bf16 %v654
        %v1224 = vunpack.c.l.bf16 %v655
        %v1225 = vunpack.c.l.bf16 %v656
        %v1226 = vunpack.c.l.bf16 %v657
        %v1227 = vadd.f32 %v1209, %v1223
        %v1228 = vadd.f32 %v1212, %v1224
        %v1229 = vadd.f32 %v1217, %v1225
        %v1230 = vadd.f32 %v1220, %v1226
        %v1231 = vld [vmem:[%s9] sm:$0x1]
        %v1232 = vld [vmem:[%s10] sm:$0x1]
        %v1233 = vsel %vm691, %v1227, 0.0
        %1234 = vadd.xlane.f32.xlu0 %v1233
        %v1235 = vpop.xlane.xlu0 %1234
        %v1236 = vsel %vm691, %v1228, 0.0
        %1237 = vadd.xlane.f32.xlu0 %v1236
        %v1238 = vpop.xlane.xlu0 %1237
        %v1239 = vsel %vm691, %v1229, 0.0
        %1240 = vadd.xlane.f32.xlu0 %v1239
        %v1241 = vpop.xlane.xlu0 %1240
        %v1242 = vsel %vm691, %v1230, 0.0
        %1243 = vadd.xlane.f32.xlu0 %v1242
        %v1244 = vpop.xlane.xlu0 %1243
        %v1245 = vrcp.pop 32.0
        %v1246 = vmul.f32 %v1235, %v1245
        %v1247 = vmul.f32 %v1238, %v1245
        %v1248 = vmul.f32 %v1241, %v1245
        %v1249 = vmul.f32 %v1244, %v1245
        %v1250 = vsub.f32 %v1227, %v1246
        %v1251 = vsub.f32 %v1228, %v1247
        %v1252 = vsub.f32 %v1229, %v1248
        %v1253 = vsub.f32 %v1230, %v1249
        %v1254 = vmul.f32 %v1250, %v1250
        %v1255 = vmul.f32 %v1251, %v1251
        %v1256 = vmul.f32 %v1252, %v1252
        %v1257 = vmul.f32 %v1253, %v1253
        %v1258 = vsel %vm691, %v1254, 0.0
        %1259 = vadd.xlane.f32.xlu0 %v1258
        %v1260 = vpop.xlane.xlu0 %1259
        %v1261 = vsel %vm691, %v1255, 0.0
        %1262 = vadd.xlane.f32.xlu0 %v1261
        %v1263 = vpop.xlane.xlu0 %1262
        %v1264 = vsel %vm691, %v1256, 0.0
        %1265 = vadd.xlane.f32.xlu0 %v1264
        %v1266 = vpop.xlane.xlu0 %1265
        %v1267 = vsel %vm691, %v1257, 0.0
        %1268 = vadd.xlane.f32.xlu0 %v1267
        %v1269 = vpop.xlane.xlu0 %1268
        %v1270 = vmul.f32 %v1260, %v1245
        %v1271 = vmul.f32 %v1263, %v1245
        %v1272 = vmul.f32 %v1266, %v1245
        %v1273 = vmul.f32 %v1269, %v1245
        %v1274 = vadd.f32 %v1270, 1e-05
        %v1275 = vadd.f32 %v1271, 1e-05
        %v1276 = vadd.f32 %v1272, 1e-05
        %v1277 = vadd.f32 %v1273, 1e-05
        %v1278 = vrsqrt.pop %v1274
        %v1279 = vrsqrt.pop %v1275
        %v1280 = vrsqrt.pop %v1276
        %v1281 = vrsqrt.pop %v1277
        %v1282 = vmul.f32 %v1250, %v1278
        %v1283 = vmul.f32 %v1251, %v1279
        %v1284 = vmul.f32 %v1252, %v1280
        %v1285 = vmul.f32 %v1253, %v1281
        %v1287 = vlaneseq
        %v1288 = vshrl.u32 %v1287, 7
        %v1289 = vsub.s32 0, %v1288
        %v1290 = vrot.slane %v1231, %v1289
        %v1292 = vmul.f32 %v1282, %v1290
        %v1293 = vmul.f32 %v1283, %v1290
        %v1294 = vmul.f32 %v1284, %v1290
        %v1295 = vmul.f32 %v1285, %v1290
        %v1297 = vlaneseq
        %v1298 = vshrl.u32 %v1297, 7
        %v1299 = vsub.s32 0, %v1298
        %v1300 = vrot.slane %v1232, %v1299
        %v1302 = vadd.f32 %v1292, %v1300
        %v1303 = vadd.f32 %v1293, %v1300
        %v1304 = vadd.f32 %v1294, %v1300
        %v1305 = vadd.f32 %v1295, %v1300
        %v1306 = vpack.c.bf16 %v1303, %v1302
        %v1307 = vpack.c.bf16 %v1305, %v1304
        %v1308 = vld [vmem:[%s11] sm:$0xff]
        %v1309 = vld [vmem:[%s11 + $0x8] sm:$0xff]
        %v1310 = vld [vmem:[%s11 + $0x10] sm:$0xff]
        %v1311 = vld [vmem:[%s11 + $0x18] sm:$0xff]
        %v1312 = vld [vmem:[%s11 + $0x20] sm:$0xff]
        %v1313 = vld [vmem:[%s11 + $0x28] sm:$0xff]
        %v1314 = vld [vmem:[%s11 + $0x30] sm:$0xff]
        %v1315 = vld [vmem:[%s11 + $0x38] sm:$0xff]
        %v1316 = vld [vmem:[%s11 + $0x40] sm:$0xff]
        %v1317 = vld [vmem:[%s11 + $0x48] sm:$0xff]
        %v1318 = vld [vmem:[%s11 + $0x50] sm:$0xff]
        %v1319 = vld [vmem:[%s11 + $0x58] sm:$0xff]
        %v1320 = vld [vmem:[%s11 + $0x60] sm:$0xff]
        %v1321 = vld [vmem:[%s11 + $0x68] sm:$0xff]
        %v1322 = vld [vmem:[%s11 + $0x70] sm:$0xff]
        %v1323 = vld [vmem:[%s11 + $0x78] sm:$0xff]
        %v1324 = vld [vmem:[%s11 + $0x80] sm:$0xff]
        %v1325 = vld [vmem:[%s11 + $0x88] sm:$0xff]
        %v1326 = vld [vmem:[%s11 + $0x90] sm:$0xff]
        %v1327 = vld [vmem:[%s11 + $0x98] sm:$0xff]
        %v1328 = vld [vmem:[%s11 + $0xa0] sm:$0xff]
        %v1329 = vld [vmem:[%s11 + $0xa8] sm:$0xff]
        %v1330 = vld [vmem:[%s11 + $0xb0] sm:$0xff]
        %v1331 = vld [vmem:[%s11 + $0xb8] sm:$0xff]
        %v1332 = vld [vmem:[%s11 + $0xc0] sm:$0xff]
        %v1333 = vld [vmem:[%s11 + $0xc8] sm:$0xff]
        %v1334 = vld [vmem:[%s11 + $0xd0] sm:$0xff]
        %v1335 = vld [vmem:[%s11 + $0xd8] sm:$0xff]
        %v1336 = vld [vmem:[%s11 + $0xe0] sm:$0xff]
        %v1337 = vld [vmem:[%s11 + $0xe8] sm:$0xff]
        %v1338 = vld [vmem:[%s11 + $0xf0] sm:$0xff]
        %v1339 = vld [vmem:[%s11 + $0xf8] sm:$0xff]
        %v1340 = vld [vmem:[%s12] sm:$0xff]
        %v1341 = vld [vmem:[%s12 + $0x8] sm:$0xff]
        %v1344 = vlaneseq
        %v1345 = vshrl.u32 %v1344, 7
        %v1346 = vsub.s32 0, %v1345
        %v1347 = vrot.slane %v1340, %v1346
        %v1348 = vlaneseq
        %v1349 = vshrl.u32 %v1348, 7
        %v1350 = vsub.s32 1, %v1349
        %v1351 = vrot.slane %v1340, %v1350
        %v1352 = vlaneseq
        %v1353 = vshrl.u32 %v1352, 7
        %v1354 = vsub.s32 2, %v1353
        %v1355 = vrot.slane %v1340, %v1354
        %v1356 = vlaneseq
        %v1357 = vshrl.u32 %v1356, 7
        %v1358 = vsub.s32 3, %v1357
        %v1359 = vrot.slane %v1340, %v1358
        %v1360 = vlaneseq
        %v1361 = vshrl.u32 %v1360, 7
        %v1362 = vsub.s32 4, %v1361
        %v1363 = vrot.slane %v1340, %v1362
        %v1364 = vlaneseq
        %v1365 = vshrl.u32 %v1364, 7
        %v1366 = vsub.s32 5, %v1365
        %v1367 = vrot.slane %v1340, %v1366
        %v1368 = vlaneseq
        %v1369 = vshrl.u32 %v1368, 7
        %v1370 = vsub.s32 6, %v1369
        %v1371 = vrot.slane %v1340, %v1370
        %v1372 = vlaneseq
        %v1373 = vshrl.u32 %v1372, 7
        %v1374 = vsub.s32 7, %v1373
        %v1375 = vrot.slane %v1340, %v1374
        %v1376 = vlaneseq
        %v1377 = vshrl.u32 %v1376, 7
        %v1378 = vsub.s32 0, %v1377
        %v1379 = vrot.slane %v1341, %v1378
        %v1380 = vlaneseq
        %v1381 = vshrl.u32 %v1380, 7
        %v1382 = vsub.s32 1, %v1381
        %v1383 = vrot.slane %v1341, %v1382
        %v1384 = vlaneseq
        %v1385 = vshrl.u32 %v1384, 7
        %v1386 = vsub.s32 2, %v1385
        %v1387 = vrot.slane %v1341, %v1386
        %v1388 = vlaneseq
        %v1389 = vshrl.u32 %v1388, 7
        %v1390 = vsub.s32 3, %v1389
        %v1391 = vrot.slane %v1341, %v1390
        %v1392 = vlaneseq
        %v1393 = vshrl.u32 %v1392, 7
        %v1394 = vsub.s32 4, %v1393
        %v1395 = vrot.slane %v1341, %v1394
        %v1396 = vlaneseq
        %v1397 = vshrl.u32 %v1396, 7
        %v1398 = vsub.s32 5, %v1397
        %v1399 = vrot.slane %v1341, %v1398
        %v1400 = vlaneseq
        %v1401 = vshrl.u32 %v1400, 7
        %v1402 = vsub.s32 6, %v1401
        %v1403 = vrot.slane %v1341, %v1402
        %v1404 = vlaneseq
        %v1405 = vshrl.u32 %v1404, 7
        %v1406 = vsub.s32 7, %v1405
        %v1407 = vrot.slane %v1341, %v1406
        %v1456 = vunpack.c.l.b16 %v1308
        %v1457 = vunpack.c.h.b16 %v1308
        %v1458 = vunpack.c.l.b16 %v1309
        %v1459 = vunpack.c.h.b16 %v1309
        %v1460 = vunpack.c.l.b16 %v1310
        %v1461 = vunpack.c.h.b16 %v1310
        %v1462 = vunpack.c.l.b16 %v1311
        %v1463 = vunpack.c.h.b16 %v1311
        %v1464 = vunpack.c.l.b16 %v1312
        %v1465 = vunpack.c.h.b16 %v1312
        %v1466 = vunpack.c.l.b16 %v1313
        %v1467 = vunpack.c.h.b16 %v1313
        %v1468 = vunpack.c.l.b16 %v1314
        %v1469 = vunpack.c.h.b16 %v1314
        %v1470 = vunpack.c.l.b16 %v1315
        %v1471 = vunpack.c.h.b16 %v1315
        %v1472 = vunpack.c.l.b16 %v1316
        %v1473 = vunpack.c.h.b16 %v1316
        %v1474 = vunpack.c.l.b16 %v1317
        %v1475 = vunpack.c.h.b16 %v1317
        %v1476 = vunpack.c.l.b16 %v1318
        %v1477 = vunpack.c.h.b16 %v1318
        %v1478 = vunpack.c.l.b16 %v1319
        %v1479 = vunpack.c.h.b16 %v1319
        %v1480 = vunpack.c.l.b16 %v1320
        %v1481 = vunpack.c.h.b16 %v1320
        %v1482 = vunpack.c.l.b16 %v1321
        %v1483 = vunpack.c.h.b16 %v1321
        %v1484 = vunpack.c.l.b16 %v1322
        %v1485 = vunpack.c.h.b16 %v1322
        %v1486 = vunpack.c.l.b16 %v1323
        %v1487 = vunpack.c.h.b16 %v1323
        %v1488 = vunpack.c.l.b16 %v1324
        %v1489 = vunpack.c.h.b16 %v1324
        %v1490 = vunpack.c.l.b16 %v1325
        %v1491 = vunpack.c.h.b16 %v1325
        %v1492 = vunpack.c.l.b16 %v1326
        %v1493 = vunpack.c.h.b16 %v1326
        %v1494 = vunpack.c.l.b16 %v1327
        %v1495 = vunpack.c.h.b16 %v1327
        %v1496 = vunpack.c.l.b16 %v1328
        %v1497 = vunpack.c.h.b16 %v1328
        %v1498 = vunpack.c.l.b16 %v1329
        %v1499 = vunpack.c.h.b16 %v1329
        %v1500 = vunpack.c.l.b16 %v1330
        %v1501 = vunpack.c.h.b16 %v1330
        %v1502 = vunpack.c.l.b16 %v1331
        %v1503 = vunpack.c.h.b16 %v1331
        %v1504 = vunpack.c.l.b16 %v1332
        %v1505 = vunpack.c.h.b16 %v1332
        %v1506 = vunpack.c.l.b16 %v1333
        %v1507 = vunpack.c.h.b16 %v1333
        %v1508 = vunpack.c.l.b16 %v1334
        %v1509 = vunpack.c.h.b16 %v1334
        %v1510 = vunpack.c.l.b16 %v1335
        %v1511 = vunpack.c.h.b16 %v1335
        %v1512 = vunpack.c.l.b16 %v1336
        %v1513 = vunpack.c.h.b16 %v1336
        %v1514 = vunpack.c.l.b16 %v1337
        %v1515 = vunpack.c.h.b16 %v1337
        %v1516 = vunpack.c.l.b16 %v1338
        %v1517 = vunpack.c.h.b16 %v1338
        %v1518 = vunpack.c.l.b16 %v1339
        %v1519 = vunpack.c.h.b16 %v1339
        %v1520 = vpack.c.b16 %v1472, %v1456
        %v1521 = vpack.c.b16 %v1473, %v1457
        %v1522 = vpack.c.b16 %v1474, %v1458
        %v1523 = vpack.c.b16 %v1475, %v1459
        %v1524 = vpack.c.b16 %v1476, %v1460
        %v1525 = vpack.c.b16 %v1477, %v1461
        %v1526 = vpack.c.b16 %v1478, %v1462
        %v1527 = vpack.c.b16 %v1479, %v1463
        %v1528 = vpack.c.b16 %v1480, %v1464
        %v1529 = vpack.c.b16 %v1481, %v1465
        %v1530 = vpack.c.b16 %v1482, %v1466
        %v1531 = vpack.c.b16 %v1483, %v1467
        %v1532 = vpack.c.b16 %v1484, %v1468
        %v1533 = vpack.c.b16 %v1485, %v1469
        %v1534 = vpack.c.b16 %v1486, %v1470
        %v1535 = vpack.c.b16 %v1487, %v1471
        %v1536 = vpack.c.b16 %v1504, %v1488
        %v1537 = vpack.c.b16 %v1505, %v1489
        %v1538 = vpack.c.b16 %v1506, %v1490
        %v1539 = vpack.c.b16 %v1507, %v1491
        %v1540 = vpack.c.b16 %v1508, %v1492
        %v1541 = vpack.c.b16 %v1509, %v1493
        %v1542 = vpack.c.b16 %v1510, %v1494
        %v1543 = vpack.c.b16 %v1511, %v1495
        %v1544 = vpack.c.b16 %v1512, %v1496
        %v1545 = vpack.c.b16 %v1513, %v1497
        %v1546 = vpack.c.b16 %v1514, %v1498
        %v1547 = vpack.c.b16 %v1515, %v1499
        %v1548 = vpack.c.b16 %v1516, %v1500
        %v1549 = vpack.c.b16 %v1517, %v1501
        %v1550 = vpack.c.b16 %v1518, %v1502
        %v1551 = vpack.c.b16 %v1519, %v1503
        %v1585 = vsel %vm691, %v1306, 0
        %v1588 = vsel %vm691, %v1307, 0
        %1590 = vmatprep.subr.bf16.mxu0 %v1521
        %1591 = vmatpush1.bf16.msra.mxu0 %v1520
        %1592 = vmatprep.subr.bf16.mxu0 %v1537
        %1593 = vmatpush1.bf16.msra.mxu0 %v1536
        %1594 = vmatprep.subr.bf16.mxu0 0
        %1595 = vmatpush1.bf16.msra.mxu0 0
        %1596 = vmatprep.subr.bf16.mxu0 0
        %1597 = vmatpush1.bf16.msra.mxu0 0
        %1598 = vmatprep.subr.bf16.mxu0 0
        %1599 = vmatpush1.bf16.msra.mxu0 0
        %1600 = vmatprep.subr.bf16.mxu0 0
        %1601 = vmatpush1.bf16.msra.mxu0 0
        %1602 = vmatprep.subr.bf16.mxu0 0
        %1603 = vmatpush1.bf16.msra.mxu0 0
        %1604 = vmatprep.subr.bf16.mxu0 0
        %1605 = vmatpush1.bf16.msra.mxu0 0
        %1606 = vmatprep.subr.bf16.mxu0 0
        %1607 = vmatpush1.bf16.msra.mxu0 0
        %1608 = vmatprep.subr.bf16.mxu0 0
        %1609 = vmatpush1.bf16.msra.mxu0 0
        %1610 = vmatprep.subr.bf16.mxu0 0
        %1611 = vmatpush1.bf16.msra.mxu0 0
        %1612 = vmatprep.subr.bf16.mxu0 0
        %1613 = vmatpush1.bf16.msra.mxu0 0
        %1614 = vmatprep.subr.bf16.mxu0 0
        %1615 = vmatpush1.bf16.msra.mxu0 0
        %1616 = vmatprep.subr.bf16.mxu0 0
        %1617 = vmatpush1.bf16.msra.mxu0 0
        %1618 = vmatprep.subr.bf16.mxu0 0
        %1619 = vmatpush1.bf16.msra.mxu0 0
        %1620 = vmatprep.subr.bf16.mxu0 0
        %1621 = vmatpush1.bf16.msra.mxu0 0
        %1622 = vmatprep.mubr.bf16.mxu0 0
        %1623 = vmatmul.mubr.bf16.gmra.mrb[0].mxu0 %v1585
        %v1624 = vpop.f32.mrb[0].mxu0
        %v1625 = vadd.f32 %v1347, %v1624
        %v1626 = vpop.f32.mrb[0].mxu0
        %v1627 = vadd.f32 %v1351, %v1626
        %v1628 = vpop.f32.mrb[0].mxu0
        %v1629 = vadd.f32 %v1347, %v1628
        %v1630 = vpop.f32.mrb[0].mxu0
        %v1631 = vadd.f32 %v1351, %v1630
        %1632 = vmatprep.mubr.bf16.mxu0 0
        %1633 = vmatmul.mubr.bf16.gmra.mrb[0].mxu0 %v1588
        %v1634 = vpop.f32.mrb[0].mxu0
        %v1635 = vadd.f32 %v1347, %v1634
        %v1636 = vpop.f32.mrb[0].mxu0
        %v1637 = vadd.f32 %v1351, %v1636
        %v1638 = vpop.f32.mrb[0].mxu0
        %v1639 = vadd.f32 %v1347, %v1638
        %v1640 = vpop.f32.mrb[0].mxu0
        %v1641 = vadd.f32 %v1351, %v1640
        %1642 = vdwg.mxu0
        %1643 = vmatprep.subr.bf16.mxu0 %v1523
        %1644 = vmatpush1.bf16.msra.mxu0 %v1522
        %1645 = vmatprep.subr.bf16.mxu0 %v1539
        %1646 = vmatpush1.bf16.msra.mxu0 %v1538
        %1647 = vmatprep.subr.bf16.mxu0 0
        %1648 = vmatpush1.bf16.msra.mxu0 0
        %1649 = vmatprep.subr.bf16.mxu0 0
        %1650 = vmatpush1.bf16.msra.mxu0 0
        %1651 = vmatprep.subr.bf16.mxu0 0
        %1652 = vmatpush1.bf16.msra.mxu0 0
        %1653 = vmatprep.subr.bf16.mxu0 0
        %1654 = vmatpush1.bf16.msra.mxu0 0
        %1655 = vmatprep.subr.bf16.mxu0 0
        %1656 = vmatpush1.bf16.msra.mxu0 0
        %1657 = vmatprep.subr.bf16.mxu0 0
        %1658 = vmatpush1.bf16.msra.mxu0 0
        %1659 = vmatprep.subr.bf16.mxu0 0
        %1660 = vmatpush1.bf16.msra.mxu0 0
        %1661 = vmatprep.subr.bf16.mxu0 0
        %1662 = vmatpush1.bf16.msra.mxu0 0
        %1663 = vmatprep.subr.bf16.mxu0 0
        %1664 = vmatpush1.bf16.msra.mxu0 0
        %1665 = vmatprep.subr.bf16.mxu0 0
        %1666 = vmatpush1.bf16.msra.mxu0 0
        %1667 = vmatprep.subr.bf16.mxu0 0
        %1668 = vmatpush1.bf16.msra.mxu0 0
        %1669 = vmatprep.subr.bf16.mxu0 0
        %1670 = vmatpush1.bf16.msra.mxu0 0
        %1671 = vmatprep.subr.bf16.mxu0 0
        %1672 = vmatpush1.bf16.msra.mxu0 0
        %1673 = vmatprep.subr.bf16.mxu0 0
        %1674 = vmatpush1.bf16.msra.mxu0 0
        %1675 = vmatprep.mubr.bf16.mxu0 0
        %1676 = vmatmul.mubr.bf16.gmra.mrb[0].mxu0 %v1585
        %v1677 = vpop.f32.mrb[0].mxu0
        %v1678 = vadd.f32 %v1355, %v1677
        %v1679 = vpop.f32.mrb[0].mxu0
        %v1680 = vadd.f32 %v1359, %v1679
        %v1681 = vpop.f32.mrb[0].mxu0
        %v1682 = vadd.f32 %v1355, %v1681
        %v1683 = vpop.f32.mrb[0].mxu0
        %v1684 = vadd.f32 %v1359, %v1683
        %1685 = vmatprep.mubr.bf16.mxu0 0
        %1686 = vmatmul.mubr.bf16.gmra.mrb[0].mxu0 %v1588
        %v1687 = vpop.f32.mrb[0].mxu0
        %v1688 = vadd.f32 %v1355, %v1687
        %v1689 = vpop.f32.mrb[0].mxu0
        %v1690 = vadd.f32 %v1359, %v1689
        %v1691 = vpop.f32.mrb[0].mxu0
        %v1692 = vadd.f32 %v1355, %v1691
        %v1693 = vpop.f32.mrb[0].mxu0
        %v1694 = vadd.f32 %v1359, %v1693
        %1695 = vdwg.mxu0
        %1696 = vmatprep.subr.bf16.mxu0 %v1525
        %1697 = vmatpush1.bf16.msra.mxu0 %v1524
        %1698 = vmatprep.subr.bf16.mxu0 %v1541
        %1699 = vmatpush1.bf16.msra.mxu0 %v1540
        %1700 = vmatprep.subr.bf16.mxu0 0
        %1701 = vmatpush1.bf16.msra.mxu0 0
        %1702 = vmatprep.subr.bf16.mxu0 0
        %1703 = vmatpush1.bf16.msra.mxu0 0
        %1704 = vmatprep.subr.bf16.mxu0 0
        %1705 = vmatpush1.bf16.msra.mxu0 0
        %1706 = vmatprep.subr.bf16.mxu0 0
        %1707 = vmatpush1.bf16.msra.mxu0 0
        %1708 = vmatprep.subr.bf16.mxu0 0
        %1709 = vmatpush1.bf16.msra.mxu0 0
        %1710 = vmatprep.subr.bf16.mxu0 0
        %1711 = vmatpush1.bf16.msra.mxu0 0
        %1712 = vmatprep.subr.bf16.mxu0 0
        %1713 = vmatpush1.bf16.msra.mxu0 0
        %1714 = vmatprep.subr.bf16.mxu0 0
        %1715 = vmatpush1.bf16.msra.mxu0 0
        %1716 = vmatprep.subr.bf16.mxu0 0
        %1717 = vmatpush1.bf16.msra.mxu0 0
        %1718 = vmatprep.subr.bf16.mxu0 0
        %1719 = vmatpush1.bf16.msra.mxu0 0
        %1720 = vmatprep.subr.bf16.mxu0 0
        %1721 = vmatpush1.bf16.msra.mxu0 0
        %1722 = vmatprep.subr.bf16.mxu0 0
        %1723 = vmatpush1.bf16.msra.mxu0 0
        %1724 = vmatprep.subr.bf16.mxu0 0
        %1725 = vmatpush1.bf16.msra.mxu0 0
        %1726 = vmatprep.subr.bf16.mxu0 0
        %1727 = vmatpush1.bf16.msra.mxu0 0
        %1728 = vmatprep.mubr.bf16.mxu0 0
        %1729 = vmatmul.mubr.bf16.gmra.mrb[0].mxu0 %v1585
        %v1730 = vpop.f32.mrb[0].mxu0
        %v1731 = vadd.f32 %v1363, %v1730
        %v1732 = vpop.f32.mrb[0].mxu0
        %v1733 = vadd.f32 %v1367, %v1732
        %v1734 = vpop.f32.mrb[0].mxu0
        %v1735 = vadd.f32 %v1363, %v1734
        %v1736 = vpop.f32.mrb[0].mxu0
        %v1737 = vadd.f32 %v1367, %v1736
        %1738 = vmatprep.mubr.bf16.mxu0 0
        %1739 = vmatmul.mubr.bf16.gmra.mrb[0].mxu0 %v1588
        %v1740 = vpop.f32.mrb[0].mxu0
        %v1741 = vadd.f32 %v1363, %v1740
        %v1742 = vpop.f32.mrb[0].mxu0
        %v1743 = vadd.f32 %v1367, %v1742
        %v1744 = vpop.f32.mrb[0].mxu0
        %v1745 = vadd.f32 %v1363, %v1744
        %v1746 = vpop.f32.mrb[0].mxu0
        %v1747 = vadd.f32 %v1367, %v1746
        %1748 = vdwg.mxu0
        %1749 = vmatprep.subr.bf16.mxu0 %v1527
        %1750 = vmatpush1.bf16.msra.mxu0 %v1526
        %1751 = vmatprep.subr.bf16.mxu0 %v1543
        %1752 = vmatpush1.bf16.msra.mxu0 %v1542
        %1753 = vmatprep.subr.bf16.mxu0 0
        %1754 = vmatpush1.bf16.msra.mxu0 0
        %1755 = vmatprep.subr.bf16.mxu0 0
        %1756 = vmatpush1.bf16.msra.mxu0 0
        %1757 = vmatprep.subr.bf16.mxu0 0
        %1758 = vmatpush1.bf16.msra.mxu0 0
        %1759 = vmatprep.subr.bf16.mxu0 0
        %1760 = vmatpush1.bf16.msra.mxu0 0
        %1761 = vmatprep.subr.bf16.mxu0 0
        %1762 = vmatpush1.bf16.msra.mxu0 0
        %1763 = vmatprep.subr.bf16.mxu0 0
        %1764 = vmatpush1.bf16.msra.mxu0 0
        %1765 = vmatprep.subr.bf16.mxu0 0
        %1766 = vmatpush1.bf16.msra.mxu0 0
        %1767 = vmatprep.subr.bf16.mxu0 0
        %1768 = vmatpush1.bf16.msra.mxu0 0
        %1769 = vmatprep.subr.bf16.mxu0 0
        %1770 = vmatpush1.bf16.msra.mxu0 0
        %1771 = vmatprep.subr.bf16.mxu0 0
        %1772 = vmatpush1.bf16.msra.mxu0 0
        %1773 = vmatprep.subr.bf16.mxu0 0
        %1774 = vmatpush1.bf16.msra.mxu0 0
        %1775 = vmatprep.subr.bf16.mxu0 0
        %1776 = vmatpush1.bf16.msra.mxu0 0
        %1777 = vmatprep.subr.bf16.mxu0 0
        %1778 = vmatpush1.bf16.msra.mxu0 0
        %1779 = vmatprep.subr.bf16.mxu0 0
        %1780 = vmatpush1.bf16.msra.mxu0 0
        %1781 = vmatprep.mubr.bf16.mxu0 0
        %1782 = vmatmul.mubr.bf16.gmra.mrb[0].mxu0 %v1585
        %v1783 = vpop.f32.mrb[0].mxu0
        %v1784 = vadd.f32 %v1371, %v1783
        %v1785 = vpop.f32.mrb[0].mxu0
        %v1786 = vadd.f32 %v1375, %v1785
        %v1787 = vpop.f32.mrb[0].mxu0
        %v1788 = vadd.f32 %v1371, %v1787
        %v1789 = vpop.f32.mrb[0].mxu0
        %v1790 = vadd.f32 %v1375, %v1789
        %1791 = vmatprep.mubr.bf16.mxu0 0
        %1792 = vmatmul.mubr.bf16.gmra.mrb[0].mxu0 %v1588
        %v1793 = vpop.f32.mrb[0].mxu0
        %v1794 = vadd.f32 %v1371, %v1793
        %v1795 = vpop.f32.mrb[0].mxu0
        %v1796 = vadd.f32 %v1375, %v1795
        %v1797 = vpop.f32.mrb[0].mxu0
        %v1798 = vadd.f32 %v1371, %v1797
        %v1799 = vpop.f32.mrb[0].mxu0
        %v1800 = vadd.f32 %v1375, %v1799
        %1801 = vdwg.mxu0
        %1802 = vmatprep.subr.bf16.mxu0 %v1529
        %1803 = vmatpush1.bf16.msra.mxu0 %v1528
        %1804 = vmatprep.subr.bf16.mxu0 %v1545
        %1805 = vmatpush1.bf16.msra.mxu0 %v1544
        %1806 = vmatprep.subr.bf16.mxu0 0
        %1807 = vmatpush1.bf16.msra.mxu0 0
        %1808 = vmatprep.subr.bf16.mxu0 0
        %1809 = vmatpush1.bf16.msra.mxu0 0
        %1810 = vmatprep.subr.bf16.mxu0 0
        %1811 = vmatpush1.bf16.msra.mxu0 0
        %1812 = vmatprep.subr.bf16.mxu0 0
        %1813 = vmatpush1.bf16.msra.mxu0 0
        %1814 = vmatprep.subr.bf16.mxu0 0
        %1815 = vmatpush1.bf16.msra.mxu0 0
        %1816 = vmatprep.subr.bf16.mxu0 0
        %1817 = vmatpush1.bf16.msra.mxu0 0
        %1818 = vmatprep.subr.bf16.mxu0 0
        %1819 = vmatpush1.bf16.msra.mxu0 0
        %1820 = vmatprep.subr.bf16.mxu0 0
        %1821 = vmatpush1.bf16.msra.mxu0 0
        %1822 = vmatprep.subr.bf16.mxu0 0
        %1823 = vmatpush1.bf16.msra.mxu0 0
        %1824 = vmatprep.subr.bf16.mxu0 0
        %1825 = vmatpush1.bf16.msra.mxu0 0
        %1826 = vmatprep.subr.bf16.mxu0 0
        %1827 = vmatpush1.bf16.msra.mxu0 0
        %1828 = vmatprep.subr.bf16.mxu0 0
        %1829 = vmatpush1.bf16.msra.mxu0 0
        %1830 = vmatprep.subr.bf16.mxu0 0
        %1831 = vmatpush1.bf16.msra.mxu0 0
        %1832 = vmatprep.subr.bf16.mxu0 0
        %1833 = vmatpush1.bf16.msra.mxu0 0
        %1834 = vmatprep.mubr.bf16.mxu0 0
        %1835 = vmatmul.mubr.bf16.gmra.mrb[0].mxu0 %v1585
        %v1836 = vpop.f32.mrb[0].mxu0
        %v1837 = vadd.f32 %v1379, %v1836
        %v1838 = vpop.f32.mrb[0].mxu0
        %v1839 = vadd.f32 %v1383, %v1838
        %v1840 = vpop.f32.mrb[0].mxu0
        %v1841 = vadd.f32 %v1379, %v1840
        %v1842 = vpop.f32.mrb[0].mxu0
        %v1843 = vadd.f32 %v1383, %v1842
        %1844 = vmatprep.mubr.bf16.mxu0 0
        %1845 = vmatmul.mubr.bf16.gmra.mrb[0].mxu0 %v1588
        %v1846 = vpop.f32.mrb[0].mxu0
        %v1847 = vadd.f32 %v1379, %v1846
        %v1848 = vpop.f32.mrb[0].mxu0
        %v1849 = vadd.f32 %v1383, %v1848
        %v1850 = vpop.f32.mrb[0].mxu0
        %v1851 = vadd.f32 %v1379, %v1850
        %v1852 = vpop.f32.mrb[0].mxu0
        %v1853 = vadd.f32 %v1383, %v1852
        %1854 = vdwg.mxu0
        %1855 = vmatprep.subr.bf16.mxu0 %v1531
        %1856 = vmatpush1.bf16.msra.mxu0 %v1530
        %1857 = vmatprep.subr.bf16.mxu0 %v1547
        %1858 = vmatpush1.bf16.msra.mxu0 %v1546
        %1859 = vmatprep.subr.bf16.mxu0 0
        %1860 = vmatpush1.bf16.msra.mxu0 0
        %1861 = vmatprep.subr.bf16.mxu0 0
        %1862 = vmatpush1.bf16.msra.mxu0 0
        %1863 = vmatprep.subr.bf16.mxu0 0
        %1864 = vmatpush1.bf16.msra.mxu0 0
        %1865 = vmatprep.subr.bf16.mxu0 0
        %1866 = vmatpush1.bf16.msra.mxu0 0
        %1867 = vmatprep.subr.bf16.mxu0 0
        %1868 = vmatpush1.bf16.msra.mxu0 0
        %1869 = vmatprep.subr.bf16.mxu0 0
        %1870 = vmatpush1.bf16.msra.mxu0 0
        %1871 = vmatprep.subr.bf16.mxu0 0
        %1872 = vmatpush1.bf16.msra.mxu0 0
        %1873 = vmatprep.subr.bf16.mxu0 0
        %1874 = vmatpush1.bf16.msra.mxu0 0
        %1875 = vmatprep.subr.bf16.mxu0 0
        %1876 = vmatpush1.bf16.msra.mxu0 0
        %1877 = vmatprep.subr.bf16.mxu0 0
        %1878 = vmatpush1.bf16.msra.mxu0 0
        %1879 = vmatprep.subr.bf16.mxu0 0
        %1880 = vmatpush1.bf16.msra.mxu0 0
        %1881 = vmatprep.subr.bf16.mxu0 0
        %1882 = vmatpush1.bf16.msra.mxu0 0
        %1883 = vmatprep.subr.bf16.mxu0 0
        %1884 = vmatpush1.bf16.msra.mxu0 0
        %1885 = vmatprep.subr.bf16.mxu0 0
        %1886 = vmatpush1.bf16.msra.mxu0 0
        %1887 = vmatprep.mubr.bf16.mxu0 0
        %1888 = vmatmul.mubr.bf16.gmra.mrb[0].mxu0 %v1585
        %v1889 = vpop.f32.mrb[0].mxu0
        %v1890 = vadd.f32 %v1387, %v1889
        %v1891 = vpop.f32.mrb[0].mxu0
        %v1892 = vadd.f32 %v1391, %v1891
        %v1893 = vpop.f32.mrb[0].mxu0
        %v1894 = vadd.f32 %v1387, %v1893
        %v1895 = vpop.f32.mrb[0].mxu0
        %v1896 = vadd.f32 %v1391, %v1895
        %1897 = vmatprep.mubr.bf16.mxu0 0
        %1898 = vmatmul.mubr.bf16.gmra.mrb[0].mxu0 %v1588
        %v1899 = vpop.f32.mrb[0].mxu0
        %v1900 = vadd.f32 %v1387, %v1899
        %v1901 = vpop.f32.mrb[0].mxu0
        %v1902 = vadd.f32 %v1391, %v1901
        %v1903 = vpop.f32.mrb[0].mxu0
        %v1904 = vadd.f32 %v1387, %v1903
        %v1905 = vpop.f32.mrb[0].mxu0
        %v1906 = vadd.f32 %v1391, %v1905
        %1907 = vdwg.mxu0
        %1908 = vmatprep.subr.bf16.mxu0 %v1533
        %1909 = vmatpush1.bf16.msra.mxu0 %v1532
        %1910 = vmatprep.subr.bf16.mxu0 %v1549
        %1911 = vmatpush1.bf16.msra.mxu0 %v1548
        %1912 = vmatprep.subr.bf16.mxu0 0
        %1913 = vmatpush1.bf16.msra.mxu0 0
        %1914 = vmatprep.subr.bf16.mxu0 0
        %1915 = vmatpush1.bf16.msra.mxu0 0
        %1916 = vmatprep.subr.bf16.mxu0 0
        %1917 = vmatpush1.bf16.msra.mxu0 0
        %1918 = vmatprep.subr.bf16.mxu0 0
        %1919 = vmatpush1.bf16.msra.mxu0 0
        %1920 = vmatprep.subr.bf16.mxu0 0
        %1921 = vmatpush1.bf16.msra.mxu0 0
        %1922 = vmatprep.subr.bf16.mxu0 0
        %1923 = vmatpush1.bf16.msra.mxu0 0
        %1924 = vmatprep.subr.bf16.mxu0 0
        %1925 = vmatpush1.bf16.msra.mxu0 0
        %1926 = vmatprep.subr.bf16.mxu0 0
        %1927 = vmatpush1.bf16.msra.mxu0 0
        %1928 = vmatprep.subr.bf16.mxu0 0
        %1929 = vmatpush1.bf16.msra.mxu0 0
        %1930 = vmatprep.subr.bf16.mxu0 0
        %1931 = vmatpush1.bf16.msra.mxu0 0
        %1932 = vmatprep.subr.bf16.mxu0 0
        %1933 = vmatpush1.bf16.msra.mxu0 0
        %1934 = vmatprep.subr.bf16.mxu0 0
        %1935 = vmatpush1.bf16.msra.mxu0 0
        %1936 = vmatprep.subr.bf16.mxu0 0
        %1937 = vmatpush1.bf16.msra.mxu0 0
        %1938 = vmatprep.subr.bf16.mxu0 0
        %1939 = vmatpush1.bf16.msra.mxu0 0
        %1940 = vmatprep.mubr.bf16.mxu0 0
        %1941 = vmatmul.mubr.bf16.gmra.mrb[0].mxu0 %v1585
        %v1942 = vpop.f32.mrb[0].mxu0
        %v1943 = vadd.f32 %v1395, %v1942
        %v1944 = vpop.f32.mrb[0].mxu0
        %v1945 = vadd.f32 %v1399, %v1944
        %v1946 = vpop.f32.mrb[0].mxu0
        %v1947 = vadd.f32 %v1395, %v1946
        %v1948 = vpop.f32.mrb[0].mxu0
        %v1949 = vadd.f32 %v1399, %v1948
        %1950 = vmatprep.mubr.bf16.mxu0 0
        %1951 = vmatmul.mubr.bf16.gmra.mrb[0].mxu0 %v1588
        %v1952 = vpop.f32.mrb[0].mxu0
        %v1953 = vadd.f32 %v1395, %v1952
        %v1954 = vpop.f32.mrb[0].mxu0
        %v1955 = vadd.f32 %v1399, %v1954
        %v1956 = vpop.f32.mrb[0].mxu0
        %v1957 = vadd.f32 %v1395, %v1956
        %v1958 = vpop.f32.mrb[0].mxu0
        %v1959 = vadd.f32 %v1399, %v1958
        %1960 = vdwg.mxu0
        %1961 = vmatprep.subr.bf16.mxu0 %v1535
        %1962 = vmatpush1.bf16.msra.mxu0 %v1534
        %1963 = vmatprep.subr.bf16.mxu0 %v1551
        %1964 = vmatpush1.bf16.msra.mxu0 %v1550
        %1965 = vmatprep.subr.bf16.mxu0 0
        %1966 = vmatpush1.bf16.msra.mxu0 0
        %1967 = vmatprep.subr.bf16.mxu0 0
        %1968 = vmatpush1.bf16.msra.mxu0 0
        %1969 = vmatprep.subr.bf16.mxu0 0
        %1970 = vmatpush1.bf16.msra.mxu0 0
        %1971 = vmatprep.subr.bf16.mxu0 0
        %1972 = vmatpush1.bf16.msra.mxu0 0
        %1973 = vmatprep.subr.bf16.mxu0 0
        %1974 = vmatpush1.bf16.msra.mxu0 0
        %1975 = vmatprep.subr.bf16.mxu0 0
        %1976 = vmatpush1.bf16.msra.mxu0 0
        %1977 = vmatprep.subr.bf16.mxu0 0
        %1978 = vmatpush1.bf16.msra.mxu0 0
        %1979 = vmatprep.subr.bf16.mxu0 0
        %1980 = vmatpush1.bf16.msra.mxu0 0
        %1981 = vmatprep.subr.bf16.mxu0 0
        %1982 = vmatpush1.bf16.msra.mxu0 0
        %1983 = vmatprep.subr.bf16.mxu0 0
        %1984 = vmatpush1.bf16.msra.mxu0 0
        %1985 = vmatprep.subr.bf16.mxu0 0
        %1986 = vmatpush1.bf16.msra.mxu0 0
        %1987 = vmatprep.subr.bf16.mxu0 0
        %1988 = vmatpush1.bf16.msra.mxu0 0
        %1989 = vmatprep.subr.bf16.mxu0 0
        %1990 = vmatpush1.bf16.msra.mxu0 0
        %1991 = vmatprep.subr.bf16.mxu0 0
        %1992 = vmatpush1.bf16.msra.mxu0 0
        %1993 = vmatprep.mubr.bf16.mxu0 0
        %1994 = vmatmul.mubr.bf16.gmra.mrb[0].mxu0 %v1585
        %v1995 = vpop.f32.mrb[0].mxu0
        %v1996 = vadd.f32 %v1403, %v1995
        %v1997 = vpop.f32.mrb[0].mxu0
        %v1998 = vadd.f32 %v1407, %v1997
        %v1999 = vpop.f32.mrb[0].mxu0
        %v2000 = vadd.f32 %v1403, %v1999
        %v2001 = vpop.f32.mrb[0].mxu0
        %v2002 = vadd.f32 %v1407, %v2001
        %2003 = vmatprep.mubr.bf16.mxu0 0
        %2004 = vmatmul.mubr.bf16.gmra.mrb[0].mxu0 %v1588
        %v2005 = vpop.f32.mrb[0].mxu0
        %v2006 = vadd.f32 %v1403, %v2005
        %v2007 = vpop.f32.mrb[0].mxu0
        %v2008 = vadd.f32 %v1407, %v2007
        %v2009 = vpop.f32.mrb[0].mxu0
        %v2010 = vadd.f32 %v1403, %v2009
        %v2011 = vpop.f32.mrb[0].mxu0
        %v2012 = vadd.f32 %v1407, %v2011
        %2013 = vdwg.mxu0
        %v2014 = vmax.f32 %v1625, 0.0
        %v2015 = vmax.f32 %v1627, 0.0
        %v2016 = vmax.f32 %v1678, 0.0
        %v2017 = vmax.f32 %v1680, 0.0
        %v2018 = vmax.f32 %v1731, 0.0
        %v2019 = vmax.f32 %v1733, 0.0
        %v2020 = vmax.f32 %v1784, 0.0
        %v2021 = vmax.f32 %v1786, 0.0
        %v2022 = vmax.f32 %v1837, 0.0
        %v2023 = vmax.f32 %v1839, 0.0
        %v2024 = vmax.f32 %v1890, 0.0
        %v2025 = vmax.f32 %v1892, 0.0
        %v2026 = vmax.f32 %v1943, 0.0
        %v2027 = vmax.f32 %v1945, 0.0
        %v2028 = vmax.f32 %v1996, 0.0
        %v2029 = vmax.f32 %v1998, 0.0
        %v2030 = vmax.f32 %v1629, 0.0
        %v2031 = vmax.f32 %v1631, 0.0
        %v2032 = vmax.f32 %v1682, 0.0
        %v2033 = vmax.f32 %v1684, 0.0
        %v2034 = vmax.f32 %v1735, 0.0
        %v2035 = vmax.f32 %v1737, 0.0
        %v2036 = vmax.f32 %v1788, 0.0
        %v2037 = vmax.f32 %v1790, 0.0
        %v2038 = vmax.f32 %v1841, 0.0
        %v2039 = vmax.f32 %v1843, 0.0
        %v2040 = vmax.f32 %v1894, 0.0
        %v2041 = vmax.f32 %v1896, 0.0
        %v2042 = vmax.f32 %v1947, 0.0
        %v2043 = vmax.f32 %v1949, 0.0
        %v2044 = vmax.f32 %v2000, 0.0
        %v2045 = vmax.f32 %v2002, 0.0
        %v2046 = vmax.f32 %v1635, 0.0
        %v2047 = vmax.f32 %v1637, 0.0
        %v2048 = vmax.f32 %v1688, 0.0
        %v2049 = vmax.f32 %v1690, 0.0
        %v2050 = vmax.f32 %v1741, 0.0
        %v2051 = vmax.f32 %v1743, 0.0
        %v2052 = vmax.f32 %v1794, 0.0
        %v2053 = vmax.f32 %v1796, 0.0
        %v2054 = vmax.f32 %v1847, 0.0
        %v2055 = vmax.f32 %v1849, 0.0
        %v2056 = vmax.f32 %v1900, 0.0
        %v2057 = vmax.f32 %v1902, 0.0
        %v2058 = vmax.f32 %v1953, 0.0
        %v2059 = vmax.f32 %v1955, 0.0
        %v2060 = vmax.f32 %v2006, 0.0
        %v2061 = vmax.f32 %v2008, 0.0
        %v2062 = vmax.f32 %v1639, 0.0
        %v2063 = vmax.f32 %v1641, 0.0
        %v2064 = vmax.f32 %v1692, 0.0
        %v2065 = vmax.f32 %v1694, 0.0
        %v2066 = vmax.f32 %v1745, 0.0
        %v2067 = vmax.f32 %v1747, 0.0
        %v2068 = vmax.f32 %v1798, 0.0
        %v2069 = vmax.f32 %v1800, 0.0
        %v2070 = vmax.f32 %v1851, 0.0
        %v2071 = vmax.f32 %v1853, 0.0
        %v2072 = vmax.f32 %v1904, 0.0
        %v2073 = vmax.f32 %v1906, 0.0
        %v2074 = vmax.f32 %v1957, 0.0
        %v2075 = vmax.f32 %v1959, 0.0
        %v2076 = vmax.f32 %v2010, 0.0
        %v2077 = vmax.f32 %v2012, 0.0
        %v2078 = vpack.c.bf16 %v2030, %v2014
        %v2079 = vpack.c.bf16 %v2031, %v2015
        %v2080 = vpack.c.bf16 %v2032, %v2016
        %v2081 = vpack.c.bf16 %v2033, %v2017
        %v2082 = vpack.c.bf16 %v2034, %v2018
        %v2083 = vpack.c.bf16 %v2035, %v2019
        %v2084 = vpack.c.bf16 %v2036, %v2020
        %v2085 = vpack.c.bf16 %v2037, %v2021
        %v2086 = vpack.c.bf16 %v2038, %v2022
        %v2087 = vpack.c.bf16 %v2039, %v2023
        %v2088 = vpack.c.bf16 %v2040, %v2024
        %v2089 = vpack.c.bf16 %v2041, %v2025
        %v2090 = vpack.c.bf16 %v2042, %v2026
        %v2091 = vpack.c.bf16 %v2043, %v2027
        %v2092 = vpack.c.bf16 %v2044, %v2028
        %v2093 = vpack.c.bf16 %v2045, %v2029
        %v2094 = vpack.c.bf16 %v2062, %v2046
        %v2095 = vpack.c.bf16 %v2063, %v2047
        %v2096 = vpack.c.bf16 %v2064, %v2048
        %v2097 = vpack.c.bf16 %v2065, %v2049
        %v2098 = vpack.c.bf16 %v2066, %v2050
        %v2099 = vpack.c.bf16 %v2067, %v2051
        %v2100 = vpack.c.bf16 %v2068, %v2052
        %v2101 = vpack.c.bf16 %v2069, %v2053
        %v2102 = vpack.c.bf16 %v2070, %v2054
        %v2103 = vpack.c.bf16 %v2071, %v2055
        %v2104 = vpack.c.bf16 %v2072, %v2056
        %v2105 = vpack.c.bf16 %v2073, %v2057
        %v2106 = vpack.c.bf16 %v2074, %v2058
        %v2107 = vpack.c.bf16 %v2075, %v2059
        %v2108 = vpack.c.bf16 %v2076, %v2060
        %v2109 = vpack.c.bf16 %v2077, %v2061
        %v2110 = vld [vmem:[%s13] sm:$0xf]
        %v2111 = vld [vmem:[%s13 + $0x4] sm:$0xf]
        %v2112 = vld [vmem:[%s13 + $0x8] sm:$0xf]
        %v2113 = vld [vmem:[%s13 + $0xc] sm:$0xf]
        %v2114 = vld [vmem:[%s13 + $0x10] sm:$0xf]
        %v2115 = vld [vmem:[%s13 + $0x14] sm:$0xf]
        %v2116 = vld [vmem:[%s13 + $0x18] sm:$0xf]
        %v2117 = vld [vmem:[%s13 + $0x1c] sm:$0xf]
        %v2118 = vld [vmem:[%s13 + $0x20] sm:$0xf]
        %v2119 = vld [vmem:[%s13 + $0x24] sm:$0xf]
        %v2120 = vld [vmem:[%s13 + $0x28] sm:$0xf]
        %v2121 = vld [vmem:[%s13 + $0x2c] sm:$0xf]
        %v2122 = vld [vmem:[%s13 + $0x30] sm:$0xf]
        %v2123 = vld [vmem:[%s13 + $0x34] sm:$0xf]
        %v2124 = vld [vmem:[%s13 + $0x38] sm:$0xf]
        %v2125 = vld [vmem:[%s13 + $0x3c] sm:$0xf]
        %v2126 = vld [vmem:[%s13 + $0x40] sm:$0xf]
        %v2127 = vld [vmem:[%s13 + $0x44] sm:$0xf]
        %v2128 = vld [vmem:[%s13 + $0x48] sm:$0xf]
        %v2129 = vld [vmem:[%s13 + $0x4c] sm:$0xf]
        %v2130 = vld [vmem:[%s13 + $0x50] sm:$0xf]
        %v2131 = vld [vmem:[%s13 + $0x54] sm:$0xf]
        %v2132 = vld [vmem:[%s13 + $0x58] sm:$0xf]
        %v2133 = vld [vmem:[%s13 + $0x5c] sm:$0xf]
        %v2134 = vld [vmem:[%s13 + $0x60] sm:$0xf]
        %v2135 = vld [vmem:[%s13 + $0x64] sm:$0xf]
        %v2136 = vld [vmem:[%s13 + $0x68] sm:$0xf]
        %v2137 = vld [vmem:[%s13 + $0x6c] sm:$0xf]
        %v2138 = vld [vmem:[%s13 + $0x70] sm:$0xf]
        %v2139 = vld [vmem:[%s13 + $0x74] sm:$0xf]
        %v2140 = vld [vmem:[%s13 + $0x78] sm:$0xf]
        %v2141 = vld [vmem:[%s13 + $0x7c] sm:$0xf]
        %v2142 = vld [vmem:[%s13 + $0x80] sm:$0xf]
        %v2143 = vld [vmem:[%s13 + $0x84] sm:$0xf]
        %v2144 = vld [vmem:[%s13 + $0x88] sm:$0xf]
        %v2145 = vld [vmem:[%s13 + $0x8c] sm:$0xf]
        %v2146 = vld [vmem:[%s13 + $0x90] sm:$0xf]
        %v2147 = vld [vmem:[%s13 + $0x94] sm:$0xf]
        %v2148 = vld [vmem:[%s13 + $0x98] sm:$0xf]
        %v2149 = vld [vmem:[%s13 + $0x9c] sm:$0xf]
        %v2150 = vld [vmem:[%s13 + $0xa0] sm:$0xf]
        %v2151 = vld [vmem:[%s13 + $0xa4] sm:$0xf]
        %v2152 = vld [vmem:[%s13 + $0xa8] sm:$0xf]
        %v2153 = vld [vmem:[%s13 + $0xac] sm:$0xf]
        %v2154 = vld [vmem:[%s13 + $0xb0] sm:$0xf]
        %v2155 = vld [vmem:[%s13 + $0xb4] sm:$0xf]
        %v2156 = vld [vmem:[%s13 + $0xb8] sm:$0xf]
        %v2157 = vld [vmem:[%s13 + $0xbc] sm:$0xf]
        %v2158 = vld [vmem:[%s13 + $0xc0] sm:$0xf]
        %v2159 = vld [vmem:[%s13 + $0xc4] sm:$0xf]
        %v2160 = vld [vmem:[%s13 + $0xc8] sm:$0xf]
        %v2161 = vld [vmem:[%s13 + $0xcc] sm:$0xf]
        %v2162 = vld [vmem:[%s13 + $0xd0] sm:$0xf]
        %v2163 = vld [vmem:[%s13 + $0xd4] sm:$0xf]
        %v2164 = vld [vmem:[%s13 + $0xd8] sm:$0xf]
        %v2165 = vld [vmem:[%s13 + $0xdc] sm:$0xf]
        %v2166 = vld [vmem:[%s13 + $0xe0] sm:$0xf]
        %v2167 = vld [vmem:[%s13 + $0xe4] sm:$0xf]
        %v2168 = vld [vmem:[%s13 + $0xe8] sm:$0xf]
        %v2169 = vld [vmem:[%s13 + $0xec] sm:$0xf]
        %v2170 = vld [vmem:[%s13 + $0xf0] sm:$0xf]
        %v2171 = vld [vmem:[%s13 + $0xf4] sm:$0xf]
        %v2172 = vld [vmem:[%s13 + $0xf8] sm:$0xf]
        %v2173 = vld [vmem:[%s13 + $0xfc] sm:$0xf]
        %v2174 = vld [vmem:[%s13 + $0x100] sm:$0xf]
        %v2175 = vld [vmem:[%s13 + $0x104] sm:$0xf]
        %v2176 = vld [vmem:[%s13 + $0x108] sm:$0xf]
        %v2177 = vld [vmem:[%s13 + $0x10c] sm:$0xf]
        %v2178 = vld [vmem:[%s13 + $0x110] sm:$0xf]
        %v2179 = vld [vmem:[%s13 + $0x114] sm:$0xf]
        %v2180 = vld [vmem:[%s13 + $0x118] sm:$0xf]
        %v2181 = vld [vmem:[%s13 + $0x11c] sm:$0xf]
        %v2182 = vld [vmem:[%s13 + $0x120] sm:$0xf]
        %v2183 = vld [vmem:[%s13 + $0x124] sm:$0xf]
        %v2184 = vld [vmem:[%s13 + $0x128] sm:$0xf]
        %v2185 = vld [vmem:[%s13 + $0x12c] sm:$0xf]
        %v2186 = vld [vmem:[%s13 + $0x130] sm:$0xf]
        %v2187 = vld [vmem:[%s13 + $0x134] sm:$0xf]
        %v2188 = vld [vmem:[%s13 + $0x138] sm:$0xf]
        %v2189 = vld [vmem:[%s13 + $0x13c] sm:$0xf]
        %v2190 = vld [vmem:[%s13 + $0x140] sm:$0xf]
        %v2191 = vld [vmem:[%s13 + $0x144] sm:$0xf]
        %v2192 = vld [vmem:[%s13 + $0x148] sm:$0xf]
        %v2193 = vld [vmem:[%s13 + $0x14c] sm:$0xf]
        %v2194 = vld [vmem:[%s13 + $0x150] sm:$0xf]
        %v2195 = vld [vmem:[%s13 + $0x154] sm:$0xf]
        %v2196 = vld [vmem:[%s13 + $0x158] sm:$0xf]
        %v2197 = vld [vmem:[%s13 + $0x15c] sm:$0xf]
        %v2198 = vld [vmem:[%s13 + $0x160] sm:$0xf]
        %v2199 = vld [vmem:[%s13 + $0x164] sm:$0xf]
        %v2200 = vld [vmem:[%s13 + $0x168] sm:$0xf]
        %v2201 = vld [vmem:[%s13 + $0x16c] sm:$0xf]
        %v2202 = vld [vmem:[%s13 + $0x170] sm:$0xf]
        %v2203 = vld [vmem:[%s13 + $0x174] sm:$0xf]
        %v2204 = vld [vmem:[%s13 + $0x178] sm:$0xf]
        %v2205 = vld [vmem:[%s13 + $0x17c] sm:$0xf]
        %v2206 = vld [vmem:[%s13 + $0x180] sm:$0xf]
        %v2207 = vld [vmem:[%s13 + $0x184] sm:$0xf]
        %v2208 = vld [vmem:[%s13 + $0x188] sm:$0xf]
        %v2209 = vld [vmem:[%s13 + $0x18c] sm:$0xf]
        %v2210 = vld [vmem:[%s13 + $0x190] sm:$0xf]
        %v2211 = vld [vmem:[%s13 + $0x194] sm:$0xf]
        %v2212 = vld [vmem:[%s13 + $0x198] sm:$0xf]
        %v2213 = vld [vmem:[%s13 + $0x19c] sm:$0xf]
        %v2214 = vld [vmem:[%s13 + $0x1a0] sm:$0xf]
        %v2215 = vld [vmem:[%s13 + $0x1a4] sm:$0xf]
        %v2216 = vld [vmem:[%s13 + $0x1a8] sm:$0xf]
        %v2217 = vld [vmem:[%s13 + $0x1ac] sm:$0xf]
        %v2218 = vld [vmem:[%s13 + $0x1b0] sm:$0xf]
        %v2219 = vld [vmem:[%s13 + $0x1b4] sm:$0xf]
        %v2220 = vld [vmem:[%s13 + $0x1b8] sm:$0xf]
        %v2221 = vld [vmem:[%s13 + $0x1bc] sm:$0xf]
        %v2222 = vld [vmem:[%s13 + $0x1c0] sm:$0xf]
        %v2223 = vld [vmem:[%s13 + $0x1c4] sm:$0xf]
        %v2224 = vld [vmem:[%s13 + $0x1c8] sm:$0xf]
        %v2225 = vld [vmem:[%s13 + $0x1cc] sm:$0xf]
        %v2226 = vld [vmem:[%s13 + $0x1d0] sm:$0xf]
        %v2227 = vld [vmem:[%s13 + $0x1d4] sm:$0xf]
        %v2228 = vld [vmem:[%s13 + $0x1d8] sm:$0xf]
        %v2229 = vld [vmem:[%s13 + $0x1dc] sm:$0xf]
        %v2230 = vld [vmem:[%s13 + $0x1e0] sm:$0xf]
        %v2231 = vld [vmem:[%s13 + $0x1e4] sm:$0xf]
        %v2232 = vld [vmem:[%s13 + $0x1e8] sm:$0xf]
        %v2233 = vld [vmem:[%s13 + $0x1ec] sm:$0xf]
        %v2234 = vld [vmem:[%s13 + $0x1f0] sm:$0xf]
        %v2235 = vld [vmem:[%s13 + $0x1f4] sm:$0xf]
        %v2236 = vld [vmem:[%s13 + $0x1f8] sm:$0xf]
        %v2237 = vld [vmem:[%s13 + $0x1fc] sm:$0xf]
        %v2238 = vld [vmem:[%s13 + $0x200] sm:$0xf]
        %v2239 = vld [vmem:[%s13 + $0x204] sm:$0xf]
        %v2240 = vld [vmem:[%s13 + $0x208] sm:$0xf]
        %v2241 = vld [vmem:[%s13 + $0x20c] sm:$0xf]
        %v2242 = vld [vmem:[%s13 + $0x210] sm:$0xf]
        %v2243 = vld [vmem:[%s13 + $0x214] sm:$0xf]
        %v2244 = vld [vmem:[%s13 + $0x218] sm:$0xf]
        %v2245 = vld [vmem:[%s13 + $0x21c] sm:$0xf]
        %v2246 = vld [vmem:[%s13 + $0x220] sm:$0xf]
        %v2247 = vld [vmem:[%s13 + $0x224] sm:$0xf]
        %v2248 = vld [vmem:[%s13 + $0x228] sm:$0xf]
        %v2249 = vld [vmem:[%s13 + $0x22c] sm:$0xf]
        %v2250 = vld [vmem:[%s13 + $0x230] sm:$0xf]
        %v2251 = vld [vmem:[%s13 + $0x234] sm:$0xf]
        %v2252 = vld [vmem:[%s13 + $0x238] sm:$0xf]
        %v2253 = vld [vmem:[%s13 + $0x23c] sm:$0xf]
        %v2254 = vld [vmem:[%s13 + $0x240] sm:$0xf]
        %v2255 = vld [vmem:[%s13 + $0x244] sm:$0xf]
        %v2256 = vld [vmem:[%s13 + $0x248] sm:$0xf]
        %v2257 = vld [vmem:[%s13 + $0x24c] sm:$0xf]
        %v2258 = vld [vmem:[%s13 + $0x250] sm:$0xf]
        %v2259 = vld [vmem:[%s13 + $0x254] sm:$0xf]
        %v2260 = vld [vmem:[%s13 + $0x258] sm:$0xf]
        %v2261 = vld [vmem:[%s13 + $0x25c] sm:$0xf]
        %v2262 = vld [vmem:[%s13 + $0x260] sm:$0xf]
        %v2263 = vld [vmem:[%s13 + $0x264] sm:$0xf]
        %v2264 = vld [vmem:[%s13 + $0x268] sm:$0xf]
        %v2265 = vld [vmem:[%s13 + $0x26c] sm:$0xf]
        %v2266 = vld [vmem:[%s13 + $0x270] sm:$0xf]
        %v2267 = vld [vmem:[%s13 + $0x274] sm:$0xf]
        %v2268 = vld [vmem:[%s13 + $0x278] sm:$0xf]
        %v2269 = vld [vmem:[%s13 + $0x27c] sm:$0xf]
        %v2270 = vld [vmem:[%s13 + $0x280] sm:$0xf]
        %v2271 = vld [vmem:[%s13 + $0x284] sm:$0xf]
        %v2272 = vld [vmem:[%s13 + $0x288] sm:$0xf]
        %v2273 = vld [vmem:[%s13 + $0x28c] sm:$0xf]
        %v2274 = vld [vmem:[%s13 + $0x290] sm:$0xf]
        %v2275 = vld [vmem:[%s13 + $0x294] sm:$0xf]
        %v2276 = vld [vmem:[%s13 + $0x298] sm:$0xf]
        %v2277 = vld [vmem:[%s13 + $0x29c] sm:$0xf]
        %v2278 = vld [vmem:[%s13 + $0x2a0] sm:$0xf]
        %v2279 = vld [vmem:[%s13 + $0x2a4] sm:$0xf]
        %v2280 = vld [vmem:[%s13 + $0x2a8] sm:$0xf]
        %v2281 = vld [vmem:[%s13 + $0x2ac] sm:$0xf]
        %v2282 = vld [vmem:[%s13 + $0x2b0] sm:$0xf]
        %v2283 = vld [vmem:[%s13 + $0x2b4] sm:$0xf]
        %v2284 = vld [vmem:[%s13 + $0x2b8] sm:$0xf]
        %v2285 = vld [vmem:[%s13 + $0x2bc] sm:$0xf]
        %v2286 = vld [vmem:[%s13 + $0x2c0] sm:$0xf]
        %v2287 = vld [vmem:[%s13 + $0x2c4] sm:$0xf]
        %v2288 = vld [vmem:[%s13 + $0x2c8] sm:$0xf]
        %v2289 = vld [vmem:[%s13 + $0x2cc] sm:$0xf]
        %v2290 = vld [vmem:[%s13 + $0x2d0] sm:$0xf]
        %v2291 = vld [vmem:[%s13 + $0x2d4] sm:$0xf]
        %v2292 = vld [vmem:[%s13 + $0x2d8] sm:$0xf]
        %v2293 = vld [vmem:[%s13 + $0x2dc] sm:$0xf]
        %v2294 = vld [vmem:[%s13 + $0x2e0] sm:$0xf]
        %v2295 = vld [vmem:[%s13 + $0x2e4] sm:$0xf]
        %v2296 = vld [vmem:[%s13 + $0x2e8] sm:$0xf]
        %v2297 = vld [vmem:[%s13 + $0x2ec] sm:$0xf]
        %v2298 = vld [vmem:[%s13 + $0x2f0] sm:$0xf]
        %v2299 = vld [vmem:[%s13 + $0x2f4] sm:$0xf]
        %v2300 = vld [vmem:[%s13 + $0x2f8] sm:$0xf]
        %v2301 = vld [vmem:[%s13 + $0x2fc] sm:$0xf]
        %v2302 = vld [vmem:[%s13 + $0x300] sm:$0xf]
        %v2303 = vld [vmem:[%s13 + $0x304] sm:$0xf]
        %v2304 = vld [vmem:[%s13 + $0x308] sm:$0xf]
        %v2305 = vld [vmem:[%s13 + $0x30c] sm:$0xf]
        %v2306 = vld [vmem:[%s13 + $0x310] sm:$0xf]
        %v2307 = vld [vmem:[%s13 + $0x314] sm:$0xf]
        %v2308 = vld [vmem:[%s13 + $0x318] sm:$0xf]
        %v2309 = vld [vmem:[%s13 + $0x31c] sm:$0xf]
        %v2310 = vld [vmem:[%s13 + $0x320] sm:$0xf]
        %v2311 = vld [vmem:[%s13 + $0x324] sm:$0xf]
        %v2312 = vld [vmem:[%s13 + $0x328] sm:$0xf]
        %v2313 = vld [vmem:[%s13 + $0x32c] sm:$0xf]
        %v2314 = vld [vmem:[%s13 + $0x330] sm:$0xf]
        %v2315 = vld [vmem:[%s13 + $0x334] sm:$0xf]
        %v2316 = vld [vmem:[%s13 + $0x338] sm:$0xf]
        %v2317 = vld [vmem:[%s13 + $0x33c] sm:$0xf]
        %v2318 = vld [vmem:[%s13 + $0x340] sm:$0xf]
        %v2319 = vld [vmem:[%s13 + $0x344] sm:$0xf]
        %v2320 = vld [vmem:[%s13 + $0x348] sm:$0xf]
        %v2321 = vld [vmem:[%s13 + $0x34c] sm:$0xf]
        %v2322 = vld [vmem:[%s13 + $0x350] sm:$0xf]
        %v2323 = vld [vmem:[%s13 + $0x354] sm:$0xf]
        %v2324 = vld [vmem:[%s13 + $0x358] sm:$0xf]
        %v2325 = vld [vmem:[%s13 + $0x35c] sm:$0xf]
        %v2326 = vld [vmem:[%s13 + $0x360] sm:$0xf]
        %v2327 = vld [vmem:[%s13 + $0x364] sm:$0xf]
        %v2328 = vld [vmem:[%s13 + $0x368] sm:$0xf]
        %v2329 = vld [vmem:[%s13 + $0x36c] sm:$0xf]
        %v2330 = vld [vmem:[%s13 + $0x370] sm:$0xf]
        %v2331 = vld [vmem:[%s13 + $0x374] sm:$0xf]
        %v2332 = vld [vmem:[%s13 + $0x378] sm:$0xf]
        %v2333 = vld [vmem:[%s13 + $0x37c] sm:$0xf]
        %v2334 = vld [vmem:[%s13 + $0x380] sm:$0xf]
        %v2335 = vld [vmem:[%s13 + $0x384] sm:$0xf]
        %v2336 = vld [vmem:[%s13 + $0x388] sm:$0xf]
        %v2337 = vld [vmem:[%s13 + $0x38c] sm:$0xf]
        %v2338 = vld [vmem:[%s13 + $0x390] sm:$0xf]
        %v2339 = vld [vmem:[%s13 + $0x394] sm:$0xf]
        %v2340 = vld [vmem:[%s13 + $0x398] sm:$0xf]
        %v2341 = vld [vmem:[%s13 + $0x39c] sm:$0xf]
        %v2342 = vld [vmem:[%s13 + $0x3a0] sm:$0xf]
        %v2343 = vld [vmem:[%s13 + $0x3a4] sm:$0xf]
        %v2344 = vld [vmem:[%s13 + $0x3a8] sm:$0xf]
        %v2345 = vld [vmem:[%s13 + $0x3ac] sm:$0xf]
        %v2346 = vld [vmem:[%s13 + $0x3b0] sm:$0xf]
        %v2347 = vld [vmem:[%s13 + $0x3b4] sm:$0xf]
        %v2348 = vld [vmem:[%s13 + $0x3b8] sm:$0xf]
        %v2349 = vld [vmem:[%s13 + $0x3bc] sm:$0xf]
        %v2350 = vld [vmem:[%s13 + $0x3c0] sm:$0xf]
        %v2351 = vld [vmem:[%s13 + $0x3c4] sm:$0xf]
        %v2352 = vld [vmem:[%s13 + $0x3c8] sm:$0xf]
        %v2353 = vld [vmem:[%s13 + $0x3cc] sm:$0xf]
        %v2354 = vld [vmem:[%s13 + $0x3d0] sm:$0xf]
        %v2355 = vld [vmem:[%s13 + $0x3d4] sm:$0xf]
        %v2356 = vld [vmem:[%s13 + $0x3d8] sm:$0xf]
        %v2357 = vld [vmem:[%s13 + $0x3dc] sm:$0xf]
        %v2358 = vld [vmem:[%s13 + $0x3e0] sm:$0xf]
        %v2359 = vld [vmem:[%s13 + $0x3e4] sm:$0xf]
        %v2360 = vld [vmem:[%s13 + $0x3e8] sm:$0xf]
        %v2361 = vld [vmem:[%s13 + $0x3ec] sm:$0xf]
        %v2362 = vld [vmem:[%s13 + $0x3f0] sm:$0xf]
        %v2363 = vld [vmem:[%s13 + $0x3f4] sm:$0xf]
        %v2364 = vld [vmem:[%s13 + $0x3f8] sm:$0xf]
        %v2365 = vld [vmem:[%s13 + $0x3fc] sm:$0xf]
        %v2366 = vld [vmem:[%s14] sm:$0x1]
        %v2368 = vlaneseq
        %v2369 = vshrl.u32 %v2368, 7
        %v2370 = vsub.s32 0, %v2369
        %v2371 = vrot.slane %v2366, %v2370
        %v2629 = vunpack.c.l.b16 %v2110
        %v2630 = vunpack.c.l.b16 %v2111
        %v2631 = vunpack.c.l.b16 %v2112
        %v2632 = vunpack.c.l.b16 %v2113
        %v2633 = vunpack.c.l.b16 %v2114
        %v2634 = vunpack.c.l.b16 %v2115
        %v2635 = vunpack.c.l.b16 %v2116
        %v2636 = vunpack.c.l.b16 %v2117
        %v2637 = vunpack.c.l.b16 %v2118
        %v2638 = vunpack.c.l.b16 %v2119
        %v2639 = vunpack.c.l.b16 %v2120
        %v2640 = vunpack.c.l.b16 %v2121
        %v2641 = vunpack.c.l.b16 %v2122
        %v2642 = vunpack.c.l.b16 %v2123
        %v2643 = vunpack.c.l.b16 %v2124
        %v2644 = vunpack.c.l.b16 %v2125
        %v2645 = vunpack.c.l.b16 %v2126
        %v2646 = vunpack.c.l.b16 %v2127
        %v2647 = vunpack.c.l.b16 %v2128
        %v2648 = vunpack.c.l.b16 %v2129
        %v2649 = vunpack.c.l.b16 %v2130
        %v2650 = vunpack.c.l.b16 %v2131
        %v2651 = vunpack.c.l.b16 %v2132
        %v2652 = vunpack.c.l.b16 %v2133
        %v2653 = vunpack.c.l.b16 %v2134
        %v2654 = vunpack.c.l.b16 %v2135
        %v2655 = vunpack.c.l.b16 %v2136
        %v2656 = vunpack.c.l.b16 %v2137
        %v2657 = vunpack.c.l.b16 %v2138
        %v2658 = vunpack.c.l.b16 %v2139
        %v2659 = vunpack.c.l.b16 %v2140
        %v2660 = vunpack.c.l.b16 %v2141
        %v2661 = vunpack.c.l.b16 %v2142
        %v2662 = vunpack.c.l.b16 %v2143
        %v2663 = vunpack.c.l.b16 %v2144
        %v2664 = vunpack.c.l.b16 %v2145
        %v2665 = vunpack.c.l.b16 %v2146
        %v2666 = vunpack.c.l.b16 %v2147
        %v2667 = vunpack.c.l.b16 %v2148
        %v2668 = vunpack.c.l.b16 %v2149
        %v2669 = vunpack.c.l.b16 %v2150
        %v2670 = vunpack.c.l.b16 %v2151
        %v2671 = vunpack.c.l.b16 %v2152
        %v2672 = vunpack.c.l.b16 %v2153
        %v2673 = vunpack.c.l.b16 %v2154
        %v2674 = vunpack.c.l.b16 %v2155
        %v2675 = vunpack.c.l.b16 %v2156
        %v2676 = vunpack.c.l.b16 %v2157
        %v2677 = vunpack.c.l.b16 %v2158
        %v2678 = vunpack.c.l.b16 %v2159
        %v2679 = vunpack.c.l.b16 %v2160
        %v2680 = vunpack.c.l.b16 %v2161
        %v2681 = vunpack.c.l.b16 %v2162
        %v2682 = vunpack.c.l.b16 %v2163
        %v2683 = vunpack.c.l.b16 %v2164
        %v2684 = vunpack.c.l.b16 %v2165
        %v2685 = vunpack.c.l.b16 %v2166
        %v2686 = vunpack.c.l.b16 %v2167
        %v2687 = vunpack.c.l.b16 %v2168
        %v2688 = vunpack.c.l.b16 %v2169
        %v2689 = vunpack.c.l.b16 %v2170
        %v2690 = vunpack.c.l.b16 %v2171
        %v2691 = vunpack.c.l.b16 %v2172
        %v2692 = vunpack.c.l.b16 %v2173
        %v2693 = vunpack.c.l.b16 %v2174
        %v2694 = vunpack.c.l.b16 %v2175
        %v2695 = vunpack.c.l.b16 %v2176
        %v2696 = vunpack.c.l.b16 %v2177
        %v2697 = vunpack.c.l.b16 %v2178
        %v2698 = vunpack.c.l.b16 %v2179
        %v2699 = vunpack.c.l.b16 %v2180
        %v2700 = vunpack.c.l.b16 %v2181
        %v2701 = vunpack.c.l.b16 %v2182
        %v2702 = vunpack.c.l.b16 %v2183
        %v2703 = vunpack.c.l.b16 %v2184
        %v2704 = vunpack.c.l.b16 %v2185
        %v2705 = vunpack.c.l.b16 %v2186
        %v2706 = vunpack.c.l.b16 %v2187
        %v2707 = vunpack.c.l.b16 %v2188
        %v2708 = vunpack.c.l.b16 %v2189
        %v2709 = vunpack.c.l.b16 %v2190
        %v2710 = vunpack.c.l.b16 %v2191
        %v2711 = vunpack.c.l.b16 %v2192
        %v2712 = vunpack.c.l.b16 %v2193
        %v2713 = vunpack.c.l.b16 %v2194
        %v2714 = vunpack.c.l.b16 %v2195
        %v2715 = vunpack.c.l.b16 %v2196
        %v2716 = vunpack.c.l.b16 %v2197
        %v2717 = vunpack.c.l.b16 %v2198
        %v2718 = vunpack.c.l.b16 %v2199
        %v2719 = vunpack.c.l.b16 %v2200
        %v2720 = vunpack.c.l.b16 %v2201
        %v2721 = vunpack.c.l.b16 %v2202
        %v2722 = vunpack.c.l.b16 %v2203
        %v2723 = vunpack.c.l.b16 %v2204
        %v2724 = vunpack.c.l.b16 %v2205
        %v2725 = vunpack.c.l.b16 %v2206
        %v2726 = vunpack.c.l.b16 %v2207
        %v2727 = vunpack.c.l.b16 %v2208
        %v2728 = vunpack.c.l.b16 %v2209
        %v2729 = vunpack.c.l.b16 %v2210
        %v2730 = vunpack.c.l.b16 %v2211
        %v2731 = vunpack.c.l.b16 %v2212
        %v2732 = vunpack.c.l.b16 %v2213
        %v2733 = vunpack.c.l.b16 %v2214
        %v2734 = vunpack.c.l.b16 %v2215
        %v2735 = vunpack.c.l.b16 %v2216
        %v2736 = vunpack.c.l.b16 %v2217
        %v2737 = vunpack.c.l.b16 %v2218
        %v2738 = vunpack.c.l.b16 %v2219
        %v2739 = vunpack.c.l.b16 %v2220
        %v2740 = vunpack.c.l.b16 %v2221
        %v2741 = vunpack.c.l.b16 %v2222
        %v2742 = vunpack.c.l.b16 %v2223
        %v2743 = vunpack.c.l.b16 %v2224
        %v2744 = vunpack.c.l.b16 %v2225
        %v2745 = vunpack.c.l.b16 %v2226
        %v2746 = vunpack.c.l.b16 %v2227
        %v2747 = vunpack.c.l.b16 %v2228
        %v2748 = vunpack.c.l.b16 %v2229
        %v2749 = vunpack.c.l.b16 %v2230
        %v2750 = vunpack.c.l.b16 %v2231
        %v2751 = vunpack.c.l.b16 %v2232
        %v2752 = vunpack.c.l.b16 %v2233
        %v2753 = vunpack.c.l.b16 %v2234
        %v2754 = vunpack.c.l.b16 %v2235
        %v2755 = vunpack.c.l.b16 %v2236
        %v2756 = vunpack.c.l.b16 %v2237
        %v2757 = vunpack.c.l.b16 %v2238
        %v2758 = vunpack.c.l.b16 %v2239
        %v2759 = vunpack.c.l.b16 %v2240
        %v2760 = vunpack.c.l.b16 %v2241
        %v2761 = vunpack.c.l.b16 %v2242
        %v2762 = vunpack.c.l.b16 %v2243
        %v2763 = vunpack.c.l.b16 %v2244
        %v2764 = vunpack.c.l.b16 %v2245
        %v2765 = vunpack.c.l.b16 %v2246
        %v2766 = vunpack.c.l.b16 %v2247
        %v2767 = vunpack.c.l.b16 %v2248
        %v2768 = vunpack.c.l.b16 %v2249
        %v2769 = vunpack.c.l.b16 %v2250
        %v2770 = vunpack.c.l.b16 %v2251
        %v2771 = vunpack.c.l.b16 %v2252
        %v2772 = vunpack.c.l.b16 %v2253
        %v2773 = vunpack.c.l.b16 %v2254
        %v2774 = vunpack.c.l.b16 %v2255
        %v2775 = vunpack.c.l.b16 %v2256
        %v2776 = vunpack.c.l.b16 %v2257
        %v2777 = vunpack.c.l.b16 %v2258
        %v2778 = vunpack.c.l.b16 %v2259
        %v2779 = vunpack.c.l.b16 %v2260
        %v2780 = vunpack.c.l.b16 %v2261
        %v2781 = vunpack.c.l.b16 %v2262
        %v2782 = vunpack.c.l.b16 %v2263
        %v2783 = vunpack.c.l.b16 %v2264
        %v2784 = vunpack.c.l.b16 %v2265
        %v2785 = vunpack.c.l.b16 %v2266
        %v2786 = vunpack.c.l.b16 %v2267
        %v2787 = vunpack.c.l.b16 %v2268
        %v2788 = vunpack.c.l.b16 %v2269
        %v2789 = vunpack.c.l.b16 %v2270
        %v2790 = vunpack.c.l.b16 %v2271
        %v2791 = vunpack.c.l.b16 %v2272
        %v2792 = vunpack.c.l.b16 %v2273
        %v2793 = vunpack.c.l.b16 %v2274
        %v2794 = vunpack.c.l.b16 %v2275
        %v2795 = vunpack.c.l.b16 %v2276
        %v2796 = vunpack.c.l.b16 %v2277
        %v2797 = vunpack.c.l.b16 %v2278
        %v2798 = vunpack.c.l.b16 %v2279
        %v2799 = vunpack.c.l.b16 %v2280
        %v2800 = vunpack.c.l.b16 %v2281
        %v2801 = vunpack.c.l.b16 %v2282
        %v2802 = vunpack.c.l.b16 %v2283
        %v2803 = vunpack.c.l.b16 %v2284
        %v2804 = vunpack.c.l.b16 %v2285
        %v2805 = vunpack.c.l.b16 %v2286
        %v2806 = vunpack.c.l.b16 %v2287
        %v2807 = vunpack.c.l.b16 %v2288
        %v2808 = vunpack.c.l.b16 %v2289
        %v2809 = vunpack.c.l.b16 %v2290
        %v2810 = vunpack.c.l.b16 %v2291
        %v2811 = vunpack.c.l.b16 %v2292
        %v2812 = vunpack.c.l.b16 %v2293
        %v2813 = vunpack.c.l.b16 %v2294
        %v2814 = vunpack.c.l.b16 %v2295
        %v2815 = vunpack.c.l.b16 %v2296
        %v2816 = vunpack.c.l.b16 %v2297
        %v2817 = vunpack.c.l.b16 %v2298
        %v2818 = vunpack.c.l.b16 %v2299
        %v2819 = vunpack.c.l.b16 %v2300
        %v2820 = vunpack.c.l.b16 %v2301
        %v2821 = vunpack.c.l.b16 %v2302
        %v2822 = vunpack.c.l.b16 %v2303
        %v2823 = vunpack.c.l.b16 %v2304
        %v2824 = vunpack.c.l.b16 %v2305
        %v2825 = vunpack.c.l.b16 %v2306
        %v2826 = vunpack.c.l.b16 %v2307
        %v2827 = vunpack.c.l.b16 %v2308
        %v2828 = vunpack.c.l.b16 %v2309
        %v2829 = vunpack.c.l.b16 %v2310
        %v2830 = vunpack.c.l.b16 %v2311
        %v2831 = vunpack.c.l.b16 %v2312
        %v2832 = vunpack.c.l.b16 %v2313
        %v2833 = vunpack.c.l.b16 %v2314
        %v2834 = vunpack.c.l.b16 %v2315
        %v2835 = vunpack.c.l.b16 %v2316
        %v2836 = vunpack.c.l.b16 %v2317
        %v2837 = vunpack.c.l.b16 %v2318
        %v2838 = vunpack.c.l.b16 %v2319
        %v2839 = vunpack.c.l.b16 %v2320
        %v2840 = vunpack.c.l.b16 %v2321
        %v2841 = vunpack.c.l.b16 %v2322
        %v2842 = vunpack.c.l.b16 %v2323
        %v2843 = vunpack.c.l.b16 %v2324
        %v2844 = vunpack.c.l.b16 %v2325
        %v2845 = vunpack.c.l.b16 %v2326
        %v2846 = vunpack.c.l.b16 %v2327
        %v2847 = vunpack.c.l.b16 %v2328
        %v2848 = vunpack.c.l.b16 %v2329
        %v2849 = vunpack.c.l.b16 %v2330
        %v2850 = vunpack.c.l.b16 %v2331
        %v2851 = vunpack.c.l.b16 %v2332
        %v2852 = vunpack.c.l.b16 %v2333
        %v2853 = vunpack.c.l.b16 %v2334
        %v2854 = vunpack.c.l.b16 %v2335
        %v2855 = vunpack.c.l.b16 %v2336
        %v2856 = vunpack.c.l.b16 %v2337
        %v2857 = vunpack.c.l.b16 %v2338
        %v2858 = vunpack.c.l.b16 %v2339
        %v2859 = vunpack.c.l.b16 %v2340
        %v2860 = vunpack.c.l.b16 %v2341
        %v2861 = vunpack.c.l.b16 %v2342
        %v2862 = vunpack.c.l.b16 %v2343
        %v2863 = vunpack.c.l.b16 %v2344
        %v2864 = vunpack.c.l.b16 %v2345
        %v2865 = vunpack.c.l.b16 %v2346
        %v2866 = vunpack.c.l.b16 %v2347
        %v2867 = vunpack.c.l.b16 %v2348
        %v2868 = vunpack.c.l.b16 %v2349
        %v2869 = vunpack.c.l.b16 %v2350
        %v2870 = vunpack.c.l.b16 %v2351
        %v2871 = vunpack.c.l.b16 %v2352
        %v2872 = vunpack.c.l.b16 %v2353
        %v2873 = vunpack.c.l.b16 %v2354
        %v2874 = vunpack.c.l.b16 %v2355
        %v2875 = vunpack.c.l.b16 %v2356
        %v2876 = vunpack.c.l.b16 %v2357
        %v2877 = vunpack.c.l.b16 %v2358
        %v2878 = vunpack.c.l.b16 %v2359
        %v2879 = vunpack.c.l.b16 %v2360
        %v2880 = vunpack.c.l.b16 %v2361
        %v2881 = vunpack.c.l.b16 %v2362
        %v2882 = vunpack.c.l.b16 %v2363
        %v2883 = vunpack.c.l.b16 %v2364
        %v2884 = vunpack.c.l.b16 %v2365
        %v2885 = vpack.c.b16 %v2630, %v2629
        %v2886 = vpack.c.b16 %v2632, %v2631
        %v2887 = vpack.c.b16 %v2634, %v2633
        %v2888 = vpack.c.b16 %v2636, %v2635
        %v2889 = vpack.c.b16 %v2638, %v2637
        %v2890 = vpack.c.b16 %v2640, %v2639
        %v2891 = vpack.c.b16 %v2642, %v2641
        %v2892 = vpack.c.b16 %v2644, %v2643
        %v2893 = vpack.c.b16 %v2646, %v2645
        %v2894 = vpack.c.b16 %v2648, %v2647
        %v2895 = vpack.c.b16 %v2650, %v2649
        %v2896 = vpack.c.b16 %v2652, %v2651
        %v2897 = vpack.c.b16 %v2654, %v2653
        %v2898 = vpack.c.b16 %v2656, %v2655
        %v2899 = vpack.c.b16 %v2658, %v2657
        %v2900 = vpack.c.b16 %v2660, %v2659
        %v2901 = vpack.c.b16 %v2662, %v2661
        %v2902 = vpack.c.b16 %v2664, %v2663
        %v2903 = vpack.c.b16 %v2666, %v2665
        %v2904 = vpack.c.b16 %v2668, %v2667
        %v2905 = vpack.c.b16 %v2670, %v2669
        %v2906 = vpack.c.b16 %v2672, %v2671
        %v2907 = vpack.c.b16 %v2674, %v2673
        %v2908 = vpack.c.b16 %v2676, %v2675
        %v2909 = vpack.c.b16 %v2678, %v2677
        %v2910 = vpack.c.b16 %v2680, %v2679
        %v2911 = vpack.c.b16 %v2682, %v2681
        %v2912 = vpack.c.b16 %v2684, %v2683
        %v2913 = vpack.c.b16 %v2686, %v2685
        %v2914 = vpack.c.b16 %v2688, %v2687
        %v2915 = vpack.c.b16 %v2690, %v2689
        %v2916 = vpack.c.b16 %v2692, %v2691
        %v2917 = vpack.c.b16 %v2694, %v2693
        %v2918 = vpack.c.b16 %v2696, %v2695
        %v2919 = vpack.c.b16 %v2698, %v2697
        %v2920 = vpack.c.b16 %v2700, %v2699
        %v2921 = vpack.c.b16 %v2702, %v2701
        %v2922 = vpack.c.b16 %v2704, %v2703
        %v2923 = vpack.c.b16 %v2706, %v2705
        %v2924 = vpack.c.b16 %v2708, %v2707
        %v2925 = vpack.c.b16 %v2710, %v2709
        %v2926 = vpack.c.b16 %v2712, %v2711
        %v2927 = vpack.c.b16 %v2714, %v2713
        %v2928 = vpack.c.b16 %v2716, %v2715
        %v2929 = vpack.c.b16 %v2718, %v2717
        %v2930 = vpack.c.b16 %v2720, %v2719
        %v2931 = vpack.c.b16 %v2722, %v2721
        %v2932 = vpack.c.b16 %v2724, %v2723
        %v2933 = vpack.c.b16 %v2726, %v2725
        %v2934 = vpack.c.b16 %v2728, %v2727
        %v2935 = vpack.c.b16 %v2730, %v2729
        %v2936 = vpack.c.b16 %v2732, %v2731
        %v2937 = vpack.c.b16 %v2734, %v2733
        %v2938 = vpack.c.b16 %v2736, %v2735
        %v2939 = vpack.c.b16 %v2738, %v2737
        %v2940 = vpack.c.b16 %v2740, %v2739
        %v2941 = vpack.c.b16 %v2742, %v2741
        %v2942 = vpack.c.b16 %v2744, %v2743
        %v2943 = vpack.c.b16 %v2746, %v2745
        %v2944 = vpack.c.b16 %v2748, %v2747
        %v2945 = vpack.c.b16 %v2750, %v2749
        %v2946 = vpack.c.b16 %v2752, %v2751
        %v2947 = vpack.c.b16 %v2754, %v2753
        %v2948 = vpack.c.b16 %v2756, %v2755
        %v2949 = vpack.c.b16 %v2758, %v2757
        %v2950 = vpack.c.b16 %v2760, %v2759
        %v2951 = vpack.c.b16 %v2762, %v2761
        %v2952 = vpack.c.b16 %v2764, %v2763
        %v2953 = vpack.c.b16 %v2766, %v2765
        %v2954 = vpack.c.b16 %v2768, %v2767
        %v2955 = vpack.c.b16 %v2770, %v2769
        %v2956 = vpack.c.b16 %v2772, %v2771
        %v2957 = vpack.c.b16 %v2774, %v2773
        %v2958 = vpack.c.b16 %v2776, %v2775
        %v2959 = vpack.c.b16 %v2778, %v2777
        %v2960 = vpack.c.b16 %v2780, %v2779
        %v2961 = vpack.c.b16 %v2782, %v2781
        %v2962 = vpack.c.b16 %v2784, %v2783
        %v2963 = vpack.c.b16 %v2786, %v2785
        %v2964 = vpack.c.b16 %v2788, %v2787
        %v2965 = vpack.c.b16 %v2790, %v2789
        %v2966 = vpack.c.b16 %v2792, %v2791
        %v2967 = vpack.c.b16 %v2794, %v2793
        %v2968 = vpack.c.b16 %v2796, %v2795
        %v2969 = vpack.c.b16 %v2798, %v2797
        %v2970 = vpack.c.b16 %v2800, %v2799
        %v2971 = vpack.c.b16 %v2802, %v2801
        %v2972 = vpack.c.b16 %v2804, %v2803
        %v2973 = vpack.c.b16 %v2806, %v2805
        %v2974 = vpack.c.b16 %v2808, %v2807
        %v2975 = vpack.c.b16 %v2810, %v2809
        %v2976 = vpack.c.b16 %v2812, %v2811
        %v2977 = vpack.c.b16 %v2814, %v2813
        %v2978 = vpack.c.b16 %v2816, %v2815
        %v2979 = vpack.c.b16 %v2818, %v2817
        %v2980 = vpack.c.b16 %v2820, %v2819
        %v2981 = vpack.c.b16 %v2822, %v2821
        %v2982 = vpack.c.b16 %v2824, %v2823
        %v2983 = vpack.c.b16 %v2826, %v2825
        %v2984 = vpack.c.b16 %v2828, %v2827
        %v2985 = vpack.c.b16 %v2830, %v2829
        %v2986 = vpack.c.b16 %v2832, %v2831
        %v2987 = vpack.c.b16 %v2834, %v2833
        %v2988 = vpack.c.b16 %v2836, %v2835
        %v2989 = vpack.c.b16 %v2838, %v2837
        %v2990 = vpack.c.b16 %v2840, %v2839
        %v2991 = vpack.c.b16 %v2842, %v2841
        %v2992 = vpack.c.b16 %v2844, %v2843
        %v2993 = vpack.c.b16 %v2846, %v2845
        %v2994 = vpack.c.b16 %v2848, %v2847
        %v2995 = vpack.c.b16 %v2850, %v2849
        %v2996 = vpack.c.b16 %v2852, %v2851
        %v2997 = vpack.c.b16 %v2854, %v2853
        %v2998 = vpack.c.b16 %v2856, %v2855
        %v2999 = vpack.c.b16 %v2858, %v2857
        %v3000 = vpack.c.b16 %v2860, %v2859
        %v3001 = vpack.c.b16 %v2862, %v2861
        %v3002 = vpack.c.b16 %v2864, %v2863
        %v3003 = vpack.c.b16 %v2866, %v2865
        %v3004 = vpack.c.b16 %v2868, %v2867
        %v3005 = vpack.c.b16 %v2870, %v2869
        %v3006 = vpack.c.b16 %v2872, %v2871
        %v3007 = vpack.c.b16 %v2874, %v2873
        %v3008 = vpack.c.b16 %v2876, %v2875
        %v3009 = vpack.c.b16 %v2878, %v2877
        %v3010 = vpack.c.b16 %v2880, %v2879
        %v3011 = vpack.c.b16 %v2882, %v2881
        %v3012 = vpack.c.b16 %v2884, %v2883
        %3141 = vmatprep.subr.bf16.mxu0 0
        %3142 = vmatpush1.bf16.msra.mxu0 %v2885
        %3143 = vmatprep.subr.bf16.mxu0 0
        %3144 = vmatpush1.bf16.msra.mxu0 %v2886
        %3145 = vmatprep.subr.bf16.mxu0 0
        %3146 = vmatpush1.bf16.msra.mxu0 %v2887
        %3147 = vmatprep.subr.bf16.mxu0 0
        %3148 = vmatpush1.bf16.msra.mxu0 %v2888
        %3149 = vmatprep.subr.bf16.mxu0 0
        %3150 = vmatpush1.bf16.msra.mxu0 %v2889
        %3151 = vmatprep.subr.bf16.mxu0 0
        %3152 = vmatpush1.bf16.msra.mxu0 %v2890
        %3153 = vmatprep.subr.bf16.mxu0 0
        %3154 = vmatpush1.bf16.msra.mxu0 %v2891
        %3155 = vmatprep.subr.bf16.mxu0 0
        %3156 = vmatpush1.bf16.msra.mxu0 %v2892
        %3157 = vmatprep.subr.bf16.mxu0 0
        %3158 = vmatpush1.bf16.msra.mxu0 %v2893
        %3159 = vmatprep.subr.bf16.mxu0 0
        %3160 = vmatpush1.bf16.msra.mxu0 %v2894
        %3161 = vmatprep.subr.bf16.mxu0 0
        %3162 = vmatpush1.bf16.msra.mxu0 %v2895
        %3163 = vmatprep.subr.bf16.mxu0 0
        %3164 = vmatpush1.bf16.msra.mxu0 %v2896
        %3165 = vmatprep.subr.bf16.mxu0 0
        %3166 = vmatpush1.bf16.msra.mxu0 %v2897
        %3167 = vmatprep.subr.bf16.mxu0 0
        %3168 = vmatpush1.bf16.msra.mxu0 %v2898
        %3169 = vmatprep.subr.bf16.mxu0 0
        %3170 = vmatpush1.bf16.msra.mxu0 %v2899
        %3171 = vmatprep.subr.bf16.mxu0 0
        %3172 = vmatpush1.bf16.msra.mxu0 %v2900
        %3173 = vmatprep.mubr.bf16.mxu0 %v2079
        %3174 = vmatmul.mubr.bf16.gmra.mrb[0].mxu0 %v2078
        %v3175 = vpop.f32.mrb[0].mxu0
        %v3176 = vadd.f32 %v2371, %v3175
        %v3177 = vpop.f32.mrb[0].mxu0
        %v3178 = vpop.f32.mrb[0].mxu0
        %v3179 = vadd.f32 %v2371, %v3178
        %v3180 = vpop.f32.mrb[0].mxu0
        %3181 = vmatprep.mubr.bf16.mxu0 %v2095
        %3182 = vmatmul.mubr.bf16.gmra.mrb[0].mxu0 %v2094
        %v3183 = vpop.f32.mrb[0].mxu0
        %v3184 = vadd.f32 %v2371, %v3183
        %v3185 = vpop.f32.mrb[0].mxu0
        %v3186 = vpop.f32.mrb[0].mxu0
        %v3187 = vadd.f32 %v2371, %v3186
        %v3188 = vpop.f32.mrb[0].mxu0
        %3189 = vdwg.mxu0
        %3190 = vmatprep.subr.bf16.mxu0 0
        %3191 = vmatpush1.bf16.msra.mxu0 %v2901
        %3192 = vmatprep.subr.bf16.mxu0 0
        %3193 = vmatpush1.bf16.msra.mxu0 %v2902
        %3194 = vmatprep.subr.bf16.mxu0 0
        %3195 = vmatpush1.bf16.msra.mxu0 %v2903
        %3196 = vmatprep.subr.bf16.mxu0 0
        %3197 = vmatpush1.bf16.msra.mxu0 %v2904
        %3198 = vmatprep.subr.bf16.mxu0 0
        %3199 = vmatpush1.bf16.msra.mxu0 %v2905
        %3200 = vmatprep.subr.bf16.mxu0 0
        %3201 = vmatpush1.bf16.msra.mxu0 %v2906
        %3202 = vmatprep.subr.bf16.mxu0 0
        %3203 = vmatpush1.bf16.msra.mxu0 %v2907
        %3204 = vmatprep.subr.bf16.mxu0 0
        %3205 = vmatpush1.bf16.msra.mxu0 %v2908
        %3206 = vmatprep.subr.bf16.mxu0 0
        %3207 = vmatpush1.bf16.msra.mxu0 %v2909
        %3208 = vmatprep.subr.bf16.mxu0 0
        %3209 = vmatpush1.bf16.msra.mxu0 %v2910
        %3210 = vmatprep.subr.bf16.mxu0 0
        %3211 = vmatpush1.bf16.msra.mxu0 %v2911
        %3212 = vmatprep.subr.bf16.mxu0 0
        %3213 = vmatpush1.bf16.msra.mxu0 %v2912
        %3214 = vmatprep.subr.bf16.mxu0 0
        %3215 = vmatpush1.bf16.msra.mxu0 %v2913
        %3216 = vmatprep.subr.bf16.mxu0 0
        %3217 = vmatpush1.bf16.msra.mxu0 %v2914
        %3218 = vmatprep.subr.bf16.mxu0 0
        %3219 = vmatpush1.bf16.msra.mxu0 %v2915
        %3220 = vmatprep.subr.bf16.mxu0 0
        %3221 = vmatpush1.bf16.msra.mxu0 %v2916
        %3222 = vmatprep.mubr.bf16.mxu0 %v2081
        %3223 = vmatmul.mubr.bf16.gmra.mrb[0].mxu0 %v2080
        %v3224 = vpop.f32.mrb[0].mxu0
        %v3225 = vadd.f32 %v3176, %v3224
        %v3226 = vpop.f32.mrb[0].mxu0
        %v3227 = vpop.f32.mrb[0].mxu0
        %v3228 = vadd.f32 %v3179, %v3227
        %v3229 = vpop.f32.mrb[0].mxu0
        %3230 = vmatprep.mubr.bf16.mxu0 %v2097
        %3231 = vmatmul.mubr.bf16.gmra.mrb[0].mxu0 %v2096
        %v3232 = vpop.f32.mrb[0].mxu0
        %v3233 = vadd.f32 %v3184, %v3232
        %v3234 = vpop.f32.mrb[0].mxu0
        %v3235 = vpop.f32.mrb[0].mxu0
        %v3236 = vadd.f32 %v3187, %v3235
        %v3237 = vpop.f32.mrb[0].mxu0
        %3238 = vdwg.mxu0
        %3239 = vmatprep.subr.bf16.mxu0 0
        %3240 = vmatpush1.bf16.msra.mxu0 %v2917
        %3241 = vmatprep.subr.bf16.mxu0 0
        %3242 = vmatpush1.bf16.msra.mxu0 %v2918
        %3243 = vmatprep.subr.bf16.mxu0 0
        %3244 = vmatpush1.bf16.msra.mxu0 %v2919
        %3245 = vmatprep.subr.bf16.mxu0 0
        %3246 = vmatpush1.bf16.msra.mxu0 %v2920
        %3247 = vmatprep.subr.bf16.mxu0 0
        %3248 = vmatpush1.bf16.msra.mxu0 %v2921
        %3249 = vmatprep.subr.bf16.mxu0 0
        %3250 = vmatpush1.bf16.msra.mxu0 %v2922
        %3251 = vmatprep.subr.bf16.mxu0 0
        %3252 = vmatpush1.bf16.msra.mxu0 %v2923
        %3253 = vmatprep.subr.bf16.mxu0 0
        %3254 = vmatpush1.bf16.msra.mxu0 %v2924
        %3255 = vmatprep.subr.bf16.mxu0 0
        %3256 = vmatpush1.bf16.msra.mxu0 %v2925
        %3257 = vmatprep.subr.bf16.mxu0 0
        %3258 = vmatpush1.bf16.msra.mxu0 %v2926
        %3259 = vmatprep.subr.bf16.mxu0 0
        %3260 = vmatpush1.bf16.msra.mxu0 %v2927
        %3261 = vmatprep.subr.bf16.mxu0 0
        %3262 = vmatpush1.bf16.msra.mxu0 %v2928
        %3263 = vmatprep.subr.bf16.mxu0 0
        %3264 = vmatpush1.bf16.msra.mxu0 %v2929
        %3265 = vmatprep.subr.bf16.mxu0 0
        %3266 = vmatpush1.bf16.msra.mxu0 %v2930
        %3267 = vmatprep.subr.bf16.mxu0 0
        %3268 = vmatpush1.bf16.msra.mxu0 %v2931
        %3269 = vmatprep.subr.bf16.mxu0 0
        %3270 = vmatpush1.bf16.msra.mxu0 %v2932
        %3271 = vmatprep.mubr.bf16.mxu0 %v2083
        %3272 = vmatmul.mubr.bf16.gmra.mrb[0].mxu0 %v2082
        %v3273 = vpop.f32.mrb[0].mxu0
        %v3274 = vadd.f32 %v3225, %v3273
        %v3275 = vpop.f32.mrb[0].mxu0
        %v3276 = vpop.f32.mrb[0].mxu0
        %v3277 = vadd.f32 %v3228, %v3276
        %v3278 = vpop.f32.mrb[0].mxu0
        %3279 = vmatprep.mubr.bf16.mxu0 %v2099
        %3280 = vmatmul.mubr.bf16.gmra.mrb[0].mxu0 %v2098
        %v3281 = vpop.f32.mrb[0].mxu0
        %v3282 = vadd.f32 %v3233, %v3281
        %v3283 = vpop.f32.mrb[0].mxu0
        %v3284 = vpop.f32.mrb[0].mxu0
        %v3285 = vadd.f32 %v3236, %v3284
        %v3286 = vpop.f32.mrb[0].mxu0
        %3287 = vdwg.mxu0
        %3288 = vmatprep.subr.bf16.mxu0 0
        %3289 = vmatpush1.bf16.msra.mxu0 %v2933
        %3290 = vmatprep.subr.bf16.mxu0 0
        %3291 = vmatpush1.bf16.msra.mxu0 %v2934
        %3292 = vmatprep.subr.bf16.mxu0 0
        %3293 = vmatpush1.bf16.msra.mxu0 %v2935
        %3294 = vmatprep.subr.bf16.mxu0 0
        %3295 = vmatpush1.bf16.msra.mxu0 %v2936
        %3296 = vmatprep.subr.bf16.mxu0 0
        %3297 = vmatpush1.bf16.msra.mxu0 %v2937
        %3298 = vmatprep.subr.bf16.mxu0 0
        %3299 = vmatpush1.bf16.msra.mxu0 %v2938
        %3300 = vmatprep.subr.bf16.mxu0 0
        %3301 = vmatpush1.bf16.msra.mxu0 %v2939
        %3302 = vmatprep.subr.bf16.mxu0 0
        %3303 = vmatpush1.bf16.msra.mxu0 %v2940
        %3304 = vmatprep.subr.bf16.mxu0 0
        %3305 = vmatpush1.bf16.msra.mxu0 %v2941
        %3306 = vmatprep.subr.bf16.mxu0 0
        %3307 = vmatpush1.bf16.msra.mxu0 %v2942
        %3308 = vmatprep.subr.bf16.mxu0 0
        %3309 = vmatpush1.bf16.msra.mxu0 %v2943
        %3310 = vmatprep.subr.bf16.mxu0 0
        %3311 = vmatpush1.bf16.msra.mxu0 %v2944
        %3312 = vmatprep.subr.bf16.mxu0 0
        %3313 = vmatpush1.bf16.msra.mxu0 %v2945
        %3314 = vmatprep.subr.bf16.mxu0 0
        %3315 = vmatpush1.bf16.msra.mxu0 %v2946
        %3316 = vmatprep.subr.bf16.mxu0 0
        %3317 = vmatpush1.bf16.msra.mxu0 %v2947
        %3318 = vmatprep.subr.bf16.mxu0 0
        %3319 = vmatpush1.bf16.msra.mxu0 %v2948
        %3320 = vmatprep.mubr.bf16.mxu0 %v2085
        %3321 = vmatmul.mubr.bf16.gmra.mrb[0].mxu0 %v2084
        %v3322 = vpop.f32.mrb[0].mxu0
        %v3323 = vadd.f32 %v3274, %v3322
        %v3324 = vpop.f32.mrb[0].mxu0
        %v3325 = vpop.f32.mrb[0].mxu0
        %v3326 = vadd.f32 %v3277, %v3325
        %v3327 = vpop.f32.mrb[0].mxu0
        %3328 = vmatprep.mubr.bf16.mxu0 %v2101
        %3329 = vmatmul.mubr.bf16.gmra.mrb[0].mxu0 %v2100
        %v3330 = vpop.f32.mrb[0].mxu0
        %v3331 = vadd.f32 %v3282, %v3330
        %v3332 = vpop.f32.mrb[0].mxu0
        %v3333 = vpop.f32.mrb[0].mxu0
        %v3334 = vadd.f32 %v3285, %v3333
        %v3335 = vpop.f32.mrb[0].mxu0
        %3336 = vdwg.mxu0
        %3337 = vmatprep.subr.bf16.mxu0 0
        %3338 = vmatpush1.bf16.msra.mxu0 %v2949
        %3339 = vmatprep.subr.bf16.mxu0 0
        %3340 = vmatpush1.bf16.msra.mxu0 %v2950
        %3341 = vmatprep.subr.bf16.mxu0 0
        %3342 = vmatpush1.bf16.msra.mxu0 %v2951
        %3343 = vmatprep.subr.bf16.mxu0 0
        %3344 = vmatpush1.bf16.msra.mxu0 %v2952
        %3345 = vmatprep.subr.bf16.mxu0 0
        %3346 = vmatpush1.bf16.msra.mxu0 %v2953
        %3347 = vmatprep.subr.bf16.mxu0 0
        %3348 = vmatpush1.bf16.msra.mxu0 %v2954
        %3349 = vmatprep.subr.bf16.mxu0 0
        %3350 = vmatpush1.bf16.msra.mxu0 %v2955
        %3351 = vmatprep.subr.bf16.mxu0 0
        %3352 = vmatpush1.bf16.msra.mxu0 %v2956
        %3353 = vmatprep.subr.bf16.mxu0 0
        %3354 = vmatpush1.bf16.msra.mxu0 %v2957
        %3355 = vmatprep.subr.bf16.mxu0 0
        %3356 = vmatpush1.bf16.msra.mxu0 %v2958
        %3357 = vmatprep.subr.bf16.mxu0 0
        %3358 = vmatpush1.bf16.msra.mxu0 %v2959
        %3359 = vmatprep.subr.bf16.mxu0 0
        %3360 = vmatpush1.bf16.msra.mxu0 %v2960
        %3361 = vmatprep.subr.bf16.mxu0 0
        %3362 = vmatpush1.bf16.msra.mxu0 %v2961
        %3363 = vmatprep.subr.bf16.mxu0 0
        %3364 = vmatpush1.bf16.msra.mxu0 %v2962
        %3365 = vmatprep.subr.bf16.mxu0 0
        %3366 = vmatpush1.bf16.msra.mxu0 %v2963
        %3367 = vmatprep.subr.bf16.mxu0 0
        %3368 = vmatpush1.bf16.msra.mxu0 %v2964
        %3369 = vmatprep.mubr.bf16.mxu0 %v2087
        %3370 = vmatmul.mubr.bf16.gmra.mrb[0].mxu0 %v2086
        %v3371 = vpop.f32.mrb[0].mxu0
        %v3372 = vadd.f32 %v3323, %v3371
        %v3373 = vpop.f32.mrb[0].mxu0
        %v3374 = vpop.f32.mrb[0].mxu0
        %v3375 = vadd.f32 %v3326, %v3374
        %v3376 = vpop.f32.mrb[0].mxu0
        %3377 = vmatprep.mubr.bf16.mxu0 %v2103
        %3378 = vmatmul.mubr.bf16.gmra.mrb[0].mxu0 %v2102
        %v3379 = vpop.f32.mrb[0].mxu0
        %v3380 = vadd.f32 %v3331, %v3379
        %v3381 = vpop.f32.mrb[0].mxu0
        %v3382 = vpop.f32.mrb[0].mxu0
        %v3383 = vadd.f32 %v3334, %v3382
        %v3384 = vpop.f32.mrb[0].mxu0
        %3385 = vdwg.mxu0
        %3386 = vmatprep.subr.bf16.mxu0 0
        %3387 = vmatpush1.bf16.msra.mxu0 %v2965
        %3388 = vmatprep.subr.bf16.mxu0 0
        %3389 = vmatpush1.bf16.msra.mxu0 %v2966
        %3390 = vmatprep.subr.bf16.mxu0 0
        %3391 = vmatpush1.bf16.msra.mxu0 %v2967
        %3392 = vmatprep.subr.bf16.mxu0 0
        %3393 = vmatpush1.bf16.msra.mxu0 %v2968
        %3394 = vmatprep.subr.bf16.mxu0 0
        %3395 = vmatpush1.bf16.msra.mxu0 %v2969
        %3396 = vmatprep.subr.bf16.mxu0 0
        %3397 = vmatpush1.bf16.msra.mxu0 %v2970
        %3398 = vmatprep.subr.bf16.mxu0 0
        %3399 = vmatpush1.bf16.msra.mxu0 %v2971
        %3400 = vmatprep.subr.bf16.mxu0 0
        %3401 = vmatpush1.bf16.msra.mxu0 %v2972
        %3402 = vmatprep.subr.bf16.mxu0 0
        %3403 = vmatpush1.bf16.msra.mxu0 %v2973
        %3404 = vmatprep.subr.bf16.mxu0 0
        %3405 = vmatpush1.bf16.msra.mxu0 %v2974
        %3406 = vmatprep.subr.bf16.mxu0 0
        %3407 = vmatpush1.bf16.msra.mxu0 %v2975
        %3408 = vmatprep.subr.bf16.mxu0 0
        %3409 = vmatpush1.bf16.msra.mxu0 %v2976
        %3410 = vmatprep.subr.bf16.mxu0 0
        %3411 = vmatpush1.bf16.msra.mxu0 %v2977
        %3412 = vmatprep.subr.bf16.mxu0 0
        %3413 = vmatpush1.bf16.msra.mxu0 %v2978
        %3414 = vmatprep.subr.bf16.mxu0 0
        %3415 = vmatpush1.bf16.msra.mxu0 %v2979
        %3416 = vmatprep.subr.bf16.mxu0 0
        %3417 = vmatpush1.bf16.msra.mxu0 %v2980
        %3418 = vmatprep.mubr.bf16.mxu0 %v2089
        %3419 = vmatmul.mubr.bf16.gmra.mrb[0].mxu0 %v2088
        %v3420 = vpop.f32.mrb[0].mxu0
        %v3421 = vadd.f32 %v3372, %v3420
        %v3422 = vpop.f32.mrb[0].mxu0
        %v3423 = vpop.f32.mrb[0].mxu0
        %v3424 = vadd.f32 %v3375, %v3423
        %v3425 = vpop.f32.mrb[0].mxu0
        %3426 = vmatprep.mubr.bf16.mxu0 %v2105
        %3427 = vmatmul.mubr.bf16.gmra.mrb[0].mxu0 %v2104
        %v3428 = vpop.f32.mrb[0].mxu0
        %v3429 = vadd.f32 %v3380, %v3428
        %v3430 = vpop.f32.mrb[0].mxu0
        %v3431 = vpop.f32.mrb[0].mxu0
        %v3432 = vadd.f32 %v3383, %v3431
        %v3433 = vpop.f32.mrb[0].mxu0
        %3434 = vdwg.mxu0
        %3435 = vmatprep.subr.bf16.mxu0 0
        %3436 = vmatpush1.bf16.msra.mxu0 %v2981
        %3437 = vmatprep.subr.bf16.mxu0 0
        %3438 = vmatpush1.bf16.msra.mxu0 %v2982
        %3439 = vmatprep.subr.bf16.mxu0 0
        %3440 = vmatpush1.bf16.msra.mxu0 %v2983
        %3441 = vmatprep.subr.bf16.mxu0 0
        %3442 = vmatpush1.bf16.msra.mxu0 %v2984
        %3443 = vmatprep.subr.bf16.mxu0 0
        %3444 = vmatpush1.bf16.msra.mxu0 %v2985
        %3445 = vmatprep.subr.bf16.mxu0 0
        %3446 = vmatpush1.bf16.msra.mxu0 %v2986
        %3447 = vmatprep.subr.bf16.mxu0 0
        %3448 = vmatpush1.bf16.msra.mxu0 %v2987
        %3449 = vmatprep.subr.bf16.mxu0 0
        %3450 = vmatpush1.bf16.msra.mxu0 %v2988
        %3451 = vmatprep.subr.bf16.mxu0 0
        %3452 = vmatpush1.bf16.msra.mxu0 %v2989
        %3453 = vmatprep.subr.bf16.mxu0 0
        %3454 = vmatpush1.bf16.msra.mxu0 %v2990
        %3455 = vmatprep.subr.bf16.mxu0 0
        %3456 = vmatpush1.bf16.msra.mxu0 %v2991
        %3457 = vmatprep.subr.bf16.mxu0 0
        %3458 = vmatpush1.bf16.msra.mxu0 %v2992
        %3459 = vmatprep.subr.bf16.mxu0 0
        %3460 = vmatpush1.bf16.msra.mxu0 %v2993
        %3461 = vmatprep.subr.bf16.mxu0 0
        %3462 = vmatpush1.bf16.msra.mxu0 %v2994
        %3463 = vmatprep.subr.bf16.mxu0 0
        %3464 = vmatpush1.bf16.msra.mxu0 %v2995
        %3465 = vmatprep.subr.bf16.mxu0 0
        %3466 = vmatpush1.bf16.msra.mxu0 %v2996
        %3467 = vmatprep.mubr.bf16.mxu0 %v2091
        %3468 = vmatmul.mubr.bf16.gmra.mrb[0].mxu0 %v2090
        %v3469 = vpop.f32.mrb[0].mxu0
        %v3470 = vadd.f32 %v3421, %v3469
        %v3471 = vpop.f32.mrb[0].mxu0
        %v3472 = vpop.f32.mrb[0].mxu0
        %v3473 = vadd.f32 %v3424, %v3472
        %v3474 = vpop.f32.mrb[0].mxu0
        %3475 = vmatprep.mubr.bf16.mxu0 %v2107
        %3476 = vmatmul.mubr.bf16.gmra.mrb[0].mxu0 %v2106
        %v3477 = vpop.f32.mrb[0].mxu0
        %v3478 = vadd.f32 %v3429, %v3477
        %v3479 = vpop.f32.mrb[0].mxu0
        %v3480 = vpop.f32.mrb[0].mxu0
        %v3481 = vadd.f32 %v3432, %v3480
        %v3482 = vpop.f32.mrb[0].mxu0
        %3483 = vdwg.mxu0
        %3484 = vmatprep.subr.bf16.mxu0 0
        %3485 = vmatpush1.bf16.msra.mxu0 %v2997
        %3486 = vmatprep.subr.bf16.mxu0 0
        %3487 = vmatpush1.bf16.msra.mxu0 %v2998
        %3488 = vmatprep.subr.bf16.mxu0 0
        %3489 = vmatpush1.bf16.msra.mxu0 %v2999
        %3490 = vmatprep.subr.bf16.mxu0 0
        %3491 = vmatpush1.bf16.msra.mxu0 %v3000
        %3492 = vmatprep.subr.bf16.mxu0 0
        %3493 = vmatpush1.bf16.msra.mxu0 %v3001
        %3494 = vmatprep.subr.bf16.mxu0 0
        %3495 = vmatpush1.bf16.msra.mxu0 %v3002
        %3496 = vmatprep.subr.bf16.mxu0 0
        %3497 = vmatpush1.bf16.msra.mxu0 %v3003
        %3498 = vmatprep.subr.bf16.mxu0 0
        %3499 = vmatpush1.bf16.msra.mxu0 %v3004
        %3500 = vmatprep.subr.bf16.mxu0 0
        %3501 = vmatpush1.bf16.msra.mxu0 %v3005
        %3502 = vmatprep.subr.bf16.mxu0 0
        %3503 = vmatpush1.bf16.msra.mxu0 %v3006
        %3504 = vmatprep.subr.bf16.mxu0 0
        %3505 = vmatpush1.bf16.msra.mxu0 %v3007
        %3506 = vmatprep.subr.bf16.mxu0 0
        %3507 = vmatpush1.bf16.msra.mxu0 %v3008
        %3508 = vmatprep.subr.bf16.mxu0 0
        %3509 = vmatpush1.bf16.msra.mxu0 %v3009
        %3510 = vmatprep.subr.bf16.mxu0 0
        %3511 = vmatpush1.bf16.msra.mxu0 %v3010
        %3512 = vmatprep.subr.bf16.mxu0 0
        %3513 = vmatpush1.bf16.msra.mxu0 %v3011
        %3514 = vmatprep.subr.bf16.mxu0 0
        %3515 = vmatpush1.bf16.msra.mxu0 %v3012
        %3516 = vmatprep.mubr.bf16.mxu0 %v2093
        %3517 = vmatmul.mubr.bf16.gmra.mrb[0].mxu0 %v2092
        %v3518 = vpop.f32.mrb[0].mxu0
        %v3519 = vadd.f32 %v3470, %v3518
        %v3520 = vpop.f32.mrb[0].mxu0
        %v3521 = vpop.f32.mrb[0].mxu0
        %v3522 = vadd.f32 %v3473, %v3521
        %v3523 = vpop.f32.mrb[0].mxu0
        %3524 = vmatprep.mubr.bf16.mxu0 %v2109
        %3525 = vmatmul.mubr.bf16.gmra.mrb[0].mxu0 %v2108
        %v3526 = vpop.f32.mrb[0].mxu0
        %v3527 = vadd.f32 %v3478, %v3526
        %v3528 = vpop.f32.mrb[0].mxu0
        %v3529 = vpop.f32.mrb[0].mxu0
        %v3530 = vadd.f32 %v3481, %v3529
        %v3531 = vpop.f32.mrb[0].mxu0
        %3532 = vdwg.mxu0
        %v3533 = vadd.f32 %v3519, %v1302
        %v3534 = vadd.f32 %v3522, %v1303
        %v3535 = vadd.f32 %v3527, %v1304
        %v3536 = vadd.f32 %v3530, %v1305
        %v3537 = vld [vmem:[%s15] sm:$0x1]
        %v3538 = vld [vmem:[%s16] sm:$0x1]
        %v3539 = vsel %vm691, %v3533, 0.0
        %3540 = vadd.xlane.f32.xlu0 %v3539
        %v3541 = vpop.xlane.xlu0 %3540
        %v3542 = vsel %vm691, %v3534, 0.0
        %3543 = vadd.xlane.f32.xlu0 %v3542
        %v3544 = vpop.xlane.xlu0 %3543
        %v3545 = vsel %vm691, %v3535, 0.0
        %3546 = vadd.xlane.f32.xlu0 %v3545
        %v3547 = vpop.xlane.xlu0 %3546
        %v3548 = vsel %vm691, %v3536, 0.0
        %3549 = vadd.xlane.f32.xlu0 %v3548
        %v3550 = vpop.xlane.xlu0 %3549
        %v3551 = vmul.f32 %v3541, %v1245
        %v3552 = vmul.f32 %v3544, %v1245
        %v3553 = vmul.f32 %v3547, %v1245
        %v3554 = vmul.f32 %v3550, %v1245
        %v3555 = vsub.f32 %v3533, %v3551
        %v3556 = vsub.f32 %v3534, %v3552
        %v3557 = vsub.f32 %v3535, %v3553
        %v3558 = vsub.f32 %v3536, %v3554
        %v3559 = vmul.f32 %v3555, %v3555
        %v3560 = vmul.f32 %v3556, %v3556
        %v3561 = vmul.f32 %v3557, %v3557
        %v3562 = vmul.f32 %v3558, %v3558
        %v3563 = vsel %vm691, %v3559, 0.0
        %3564 = vadd.xlane.f32.xlu0 %v3563
        %v3565 = vpop.xlane.xlu0 %3564
        %v3566 = vsel %vm691, %v3560, 0.0
        %3567 = vadd.xlane.f32.xlu0 %v3566
        %v3568 = vpop.xlane.xlu0 %3567
        %v3569 = vsel %vm691, %v3561, 0.0
        %3570 = vadd.xlane.f32.xlu0 %v3569
        %v3571 = vpop.xlane.xlu0 %3570
        %v3572 = vsel %vm691, %v3562, 0.0
        %3573 = vadd.xlane.f32.xlu0 %v3572
        %v3574 = vpop.xlane.xlu0 %3573
        %v3575 = vmul.f32 %v3565, %v1245
        %v3576 = vmul.f32 %v3568, %v1245
        %v3577 = vmul.f32 %v3571, %v1245
        %v3578 = vmul.f32 %v3574, %v1245
        %v3579 = vadd.f32 %v3575, 1e-05
        %v3580 = vadd.f32 %v3576, 1e-05
        %v3581 = vadd.f32 %v3577, 1e-05
        %v3582 = vadd.f32 %v3578, 1e-05
        %v3583 = vrsqrt.pop %v3579
        %v3584 = vrsqrt.pop %v3580
        %v3585 = vrsqrt.pop %v3581
        %v3586 = vrsqrt.pop %v3582
        %v3587 = vmul.f32 %v3555, %v3583
        %v3588 = vmul.f32 %v3556, %v3584
        %v3589 = vmul.f32 %v3557, %v3585
        %v3590 = vmul.f32 %v3558, %v3586
        %v3592 = vlaneseq
        %v3593 = vshrl.u32 %v3592, 7
        %v3594 = vsub.s32 0, %v3593
        %v3595 = vrot.slane %v3537, %v3594
        %v3597 = vmul.f32 %v3587, %v3595
        %v3598 = vmul.f32 %v3588, %v3595
        %v3599 = vmul.f32 %v3589, %v3595
        %v3600 = vmul.f32 %v3590, %v3595
        %v3602 = vlaneseq
        %v3603 = vshrl.u32 %v3602, 7
        %v3604 = vsub.s32 0, %v3603
        %v3605 = vrot.slane %v3538, %v3604
        %v3607 = vadd.f32 %v3597, %v3605
        %v3608 = vadd.f32 %v3598, %v3605
        %v3609 = vadd.f32 %v3599, %v3605
        %v3610 = vadd.f32 %v3600, %v3605
        %v3611 = vpack.c.bf16 %v3608, %v3607
        %v3612 = vpack.c.bf16 %v3610, %v3609
        %v3615 = vunpack.c.l.b16 %v3611
        %v3616 = vunpack.c.h.b16 %v3611
        %v3617 = vunpack.c.l.b16 %v3612
        %v3618 = vunpack.c.h.b16 %v3612
        %v3619 = vpack.c.b16 %v3615, %v3615
        %v3620 = vpack.c.b16 %v3616, %v3616
        %v3621 = vpack.c.b16 %v3617, %v3617
        %v3622 = vpack.c.b16 %v3618, %v3618
        %vm3627 = vcmask 257024
        %3628 = vst.msk [vmem:[%s650] sm:$0xf] %vm3627, %v3619
        %3629 = vst.msk [vmem:[%s650 + $0x4] sm:$0xf] %vm3627, %v3620
        %3630 = vst.msk [vmem:[%s650 + $0x8] sm:$0xf] %vm3627, %v3621
        %3631 = vst.msk [vmem:[%s650 + $0xc] sm:$0xf] %vm3627, %v3622
        %s3632 = sand.u32 %s442, 1
        %s3633 = sand.u32 %s442, 1
        %s3634 = smul.addr %s3633, 16
        %s3635 = scalar_lea.vmem [#allocation3], %s3634
        // Predicated region
        $region138: #{vit_forward.5} parent=132 // pred_check
          %p3636 = pneg %p452
        $region139: #{vit_forward.5} parent=132 // pred_check_branch
          %3638 = sbr.rel (%p3636) target = $region141
        $region140: #{vit_forward.5} parent=132 // pred_region
          %s3639 = smul.u32 2, %s30
          %s3640 = smul.addr %s3639, 4
          %s3641 = scalar_lea.vmem %s19, %s3640
          // Predicated region
          $region142: #{vit_forward.5} parent=140 // pred_check
            _
          $region143: #{vit_forward.5} parent=140 // pred_check_branch
            %3643 = sbr.rel (0) target = $region145
          $region144: #{vit_forward.5} parent=140 // pred_region
            // Predicated region
            $region146: #{vit_forward.5} parent=144 // pred_check
              _
            $region147: #{vit_forward.5} parent=144 // pred_check_branch
              %3645 = sbr.rel target = $region149
            $region148: #{vit_forward.5} parent=144 // pred_region
              // Predicated region
              $region161: #{vit_forward.5} parent=148 // pred_check
                _
              $region162: #{vit_forward.5} parent=148 // pred_check_branch
                %3666 = sbr.rel (0) target = $region164
              $region163: #{vit_forward.5} parent=148 // pred_region
                loop: start=0, step=1, limit=1
                $region165: #{vit_forward.5} parent=163 // loop_pre_header
                  _
                $region166: #{vit_forward.5} parent=163 // loop_header
                  %s3668 = sphi 0, %s3672
                  %p3669 = scmp.ge.s32.totalorder %s3668, 1
                  %s3673 = sphi %s3635, %s3635
                  %s3674 = sphi %s3641, %s3641
                $region167: #{vit_forward.5} parent=163 // loop_header_branch
                  %3671 = sbr.rel (%p3669) target = $region171
                $region168: #{vit_forward.5} parent=163 // loop_body
                  _
                $region169: #{vit_forward.5} parent=163 // loop_footer
                  %s3672 = sadd.s32 1, %s3668
                $region170: #{vit_forward.5} parent=163 // loop_footer_branch
                  %3667 = sbr.rel target = $region166
                $region171: #{vit_forward.5} parent=163 // loop_exit
                  _
                loop: start=0, step=1, limit=1
                $region172: #{vit_forward.5} parent=163 // loop_pre_header
                  _
                $region173: #{vit_forward.5} parent=163 // loop_header
                  %s3677 = sphi 0, %s3681
                  %p3678 = scmp.ge.s32.totalorder %s3677, 1
                  %s3682 = sphi %s3635, %s3635
                  %s3683 = sphi %s3641, %s3641
                $region174: #{vit_forward.5} parent=163 // loop_header_branch
                  %3680 = sbr.rel (%p3678) target = $region178
                $region175: #{vit_forward.5} parent=163 // loop_body
                  %v3684 = vld [vmem:[%s3682] sm:$0xf]
                  %3685 = vst [vmem:[%s3683] sm:$0xf] %v3684
                  %v3686 = vld [vmem:[%s3682 + $0x4] sm:$0xf]
                  %3687 = vst [vmem:[%s3683 + $0x4] sm:$0xf] %v3686
                  %v3688 = vld [vmem:[%s3682 + $0x8] sm:$0xf]
                  %3689 = vst [vmem:[%s3683 + $0x10] sm:$0xf] %v3688
                  %v3690 = vld [vmem:[%s3682 + $0xc] sm:$0xf]
                  %3691 = vst [vmem:[%s3683 + $0x14] sm:$0xf] %v3690
                $region176: #{vit_forward.5} parent=163 // loop_footer
                  %s3681 = sadd.s32 1, %s3677
                $region177: #{vit_forward.5} parent=163 // loop_footer_branch
                  %3676 = sbr.rel target = $region173
                $region178: #{vit_forward.5} parent=163 // loop_exit
                  _
              $region164: #{vit_forward.5} parent=148 // pred_fallthru
                _
            $region149: #{vit_forward.5} parent=144 // pred_fallthru
              _
            // Predicated region
            $region150: #{vit_forward.5} parent=144 // pred_check
              _
            $region151: #{vit_forward.5} parent=144 // pred_check_branch
              %3647 = sbr.rel (0) target = $region153
            $region152: #{vit_forward.5} parent=144 // pred_region
              loop: start=0, step=1, limit=1
              $region154: #{vit_forward.5} parent=152 // loop_pre_header
                _
              $region155: #{vit_forward.5} parent=152 // loop_header
                %s3650 = sphi 0, %s3654
                %p3651 = scmp.ge.s32.totalorder %s3650, 1
                %s3655 = sphi %s3635, %s3635
                %s3656 = sphi %s3641, %s3641
              $region156: #{vit_forward.5} parent=152 // loop_header_branch
                %3653 = sbr.rel (%p3651) target = $region160
              $region157: #{vit_forward.5} parent=152 // loop_body
                %v3657 = vld [vmem:[%s3655] sm:$0xf]
                %3658 = vst [vmem:[%s3656] sm:$0xf] %v3657
                %v3659 = vld [vmem:[%s3655 + $0x4] sm:$0xf]
                %3660 = vst [vmem:[%s3656 + $0x4] sm:$0xf] %v3659
                %v3661 = vld [vmem:[%s3655 + $0x8] sm:$0xf]
                %3662 = vst [vmem:[%s3656 + $0x10] sm:$0xf] %v3661
                %v3663 = vld [vmem:[%s3655 + $0xc] sm:$0xf]
                %3664 = vst [vmem:[%s3656 + $0x14] sm:$0xf] %v3663
              $region158: #{vit_forward.5} parent=152 // loop_footer
                %s3654 = sadd.s32 1, %s3650
              $region159: #{vit_forward.5} parent=152 // loop_footer_branch
                %3649 = sbr.rel target = $region155
              $region160: #{vit_forward.5} parent=152 // loop_exit
                _
            $region153: #{vit_forward.5} parent=144 // pred_fallthru
              _
          $region145: #{vit_forward.5} parent=140 // pred_fallthru
            _
          %3692 = vnop
        $region141: #{vit_forward.5} parent=132 // pred_fallthru
          _
      $region133: #{vit_forward.5} parent=5 // pred_fallthru
        _
      %p3693 = scmp.le.s32.totalorder 2, %s25
      // Predicated region
      $region179: #{vit_forward.5} parent=5 // pred_check
        %p3694 = pneg %p3693
      $region180: #{vit_forward.5} parent=5 // pred_check_branch
        %3696 = sbr.rel (%p3694) target = $region182
      $region181: #{vit_forward.5} parent=5 // pred_region
        %s3697 = ssub.s32 %s25, 2
        // Predicated region
        $region183: #{vit_forward.5} parent=181 // pred_check
          %p3698 = pneg %p458
        $region184: #{vit_forward.5} parent=181 // pred_check_branch
          %3700 = sbr.rel (%p3698) target = $region186
        $region185: #{vit_forward.5} parent=181 // pred_region
          %s3701 = sand.u32 %s443, 1
          %s3702 = sand.u32 %s443, 1
          %s3703 = smul.addr %s3702, 16
          %s3704 = scalar_lea.vmem [#allocation3], %s3703
        $region186: #{vit_forward.5} parent=181 // pred_fallthru
          _
      $region182: #{vit_forward.5} parent=5 // pred_fallthru
        _
    $region6: #{vit_forward.5} parent=1 // loop_footer
      %s29 = sadd.s32 1, %s25
    $region7: #{vit_forward.5} parent=1 // loop_footer_branch
      %24 = sbr.rel target = $region3
    $region8: #{vit_forward.5} parent=1 // loop_exit
      _

</llo_original>
